<compile_context>
chip_gen: v6e
topology: v6e:2x2x1
jax: 0.10.0
libtpu: 0.0.40
codegen_flags: <defaults>
</compile_context>

<pallas_src>
import functools
import math

import numpy as np

import jax
import jax.numpy as jnp
from jax.experimental import pallas as pl
from jax.experimental.pallas import tpu as pltpu


def _full_block(shape):
    nd = len(shape)
    return pl.BlockSpec(shape, lambda i, _nd=nd: (0,) * _nd)


# --------------------------------------------------------------------------- #
# Fused kernel
# --------------------------------------------------------------------------- #
def _net_fused_kernel(x_ref, t1_ref, b1_ref, sel1_ref, t2_ref, b2_ref,
                      g1_ref, bf1_ref, wf2_ref, bf2_ref, o_ref, *, batch, c1, c2):
    # Load all (pre-folded) weights once.
    t1 = t1_ref[...]        # (288, 32*c1)      conv1 block-Toeplitz
    b1 = b1_ref[...]        # (1, 32*c1)
    sel1 = sel1_ref[...]    # (18, 31)          pool-1 even-row selection (+ h pad)
    t2 = t2_ref[...]        # (3*31*c1, 16*c2)  conv2 block-Toeplitz
    b2 = b2_ref[...]        # (1, 16*c2)
    g1 = g1_ref[...]        # (8*15*c2, 32)     fc1 (pool-2 + NCHW flatten folded in)
    bf1 = bf1_ref[...]      # (1, 32)
    wf2 = wf2_ref[...]      # (32, 2)
    bf2 = bf2_ref[...]      # (1, 2)

    p1 = 31 * c1            # pool-1 lane width  (pooled (w2, ci) at lane 2*c1*w2 + ci)
    p2 = 15 * c2            # pool-2 lane width  (pooled (w3, c)  at lane 2*c2*w3 + c)

    fc_rows = []
    for b in range(batch):                                    # B is small; unrolled
        xi = x_ref[b * 102:(b + 1) * 102, :]                  # (3*34, 32): rows=(ci, h_pad), lanes=w

        # ---- conv1 (3x3, SAME, 3->c1) as ONE Toeplitz matmul + bias + tanh ----
        slabs = [xi[ci * 34 + kh: ci * 34 + kh + 32, :]
                 for ci in range(3) for kh in range(3)]       # 9 x (32, 32), contiguous rows
        a1 = jnp.concatenate(slabs, axis=1)                   # (32, 288)
        y1 = jnp.tanh(jnp.dot(a1, t1, preferred_element_type=jnp.float32) + b1)   # (32, 32*c1)

        # ---- 2x2 max-pool #1: w-pairs via lane shift, h-pairs via row shift ----
        m1 = jnp.maximum(y1[:, :p1], y1[:, c1:])              # (32, p1)
        m2 = jnp.maximum(m1[:31, :], m1[1:, :])               # (31, p1); pooled rows at 2*h2
        # even-row downsample + SAME-conv h zero-padding as a 0/1 selection matmul
        e1 = jnp.dot(sel1, m2, preferred_element_type=jnp.float32)                # (18, p1)

        # ---- conv2 (3x3, SAME, c1->c2) as ONE Toeplitz matmul + bias + tanh ----
        a2 = jnp.concatenate([e1[kh:kh + 16, :] for kh in range(3)], axis=1)      # (16, 3*p1)
        y2 = jnp.tanh(jnp.dot(a2, t2, preferred_element_type=jnp.float32) + b2)   # (16, 16*c2)

        # ---- 2x2 max-pool #2 + flatten (rows -> lanes) for the fc stage ----
        m3 = jnp.maximum(y2[:, :p2], y2[:, c2:])              # (16, p2)
        m4 = jnp.maximum(m3[:15, :], m3[1:, :])               # (15, p2); pooled rows at 2*h3
        fc_rows.append(jnp.concatenate([m4[2 * h3:2 * h3 + 1, :] for h3 in range(8)],
                                       axis=1))               # (1, 8*p2)

    # ---- fc1 -> tanh -> fc2 for the whole batch (lane-dense (B, 8*p2)) ----
    fc_in = jnp.concatenate(fc_rows, axis=0)                  # (B, 960)
    h = jnp.tanh(jnp.dot(fc_in, g1, preferred_element_type=jnp.float32) + bf1)    # (B, 32)
    o_ref[...] = jnp.dot(h, wf2, preferred_element_type=jnp.float32) + bf2        # (B, 2)


# --------------------------------------------------------------------------- #
# One-time weight plumbing (done at init, NOT in the jitted forward)
# --------------------------------------------------------------------------- #
def _build_kernel_consts(raw, n_channels):
    c1, c2 = n_channels, n_channels // 2
    W, W2, W3 = 32, 16, 8
    p1, p2 = 31 * c1, 15 * c2

    w1 = np.asarray(raw["w_conv1"], np.float32)    # (3, 3, 3, c1)   HWIO
    w2 = np.asarray(raw["w_conv2"], np.float32)    # (3, 3, c1, c2)  HWIO
    wf1 = np.asarray(raw["w_fc1"], np.float32)     # (c2*8*8, 32), rows in torch NCHW-flatten order

    # conv1: a1[h, (ci*3+kh)*32 + w_in]  ->  y1[h, w_out*c1 + co]
    t1 = np.zeros((9 * W, W * c1), np.float32)
    for ci in range(3):
        for kh in range(3):
            for kw in range(3):
                for wo in range(W):
                    wi = wo + kw - 1
                    if 0 <= wi < W:
                        t1[(ci * 3 + kh) * W + wi, wo * c1:(wo + 1) * c1] = w1[kh, kw, ci, :]

    # pool-1 even-row selection with SAME-conv h padding built in: e1[r] = pooled row (r-1)
    sel1 = np.zeros((W2 + 2, 2 * W2 - 1), np.float32)
    for r in range(1, W2 + 1):
        sel1[r, 2 * (r - 1)] = 1.0

    # conv2: a2[h2, kh*p1 + 2*c1*w_in + ci]  ->  y2[h2, w_out*c2 + co]
    t2 = np.zeros((3 * p1, W2 * c2), np.float32)
    for kh in range(3):
        for kw in range(3):
            for wo in range(W2):
                wi = wo + kw - 1
                if 0 <= wi < W2:
                    t2[kh * p1 + 2 * c1 * wi: kh * p1 + 2 * c1 * wi + c1,
                       wo * c2:(wo + 1) * c2] = w2[kh, kw, :, :]

    # fc1: fc_in[b, h3*p2 + 2*c2*w3 + c] holds pooled P2[b, h3, w3, c]; other lanes weight 0.
    g1 = np.zeros((8 * p2, 32), np.float32)
    for h3 in range(8):
        for w3 in range(W3):
            for c in range(c2):
                g1[h3 * p2 + 2 * c2 * w3 + c, :] = wf1[c * 64 + h3 * 8 + w3, :]

    b1 = np.asarray(raw["b_conv1"], np.float32)
    b2 = np.asarray(raw["b_conv2"], np.float32)
    return dict(
        t1=jnp.asarray(t1),
        b1row=jnp.asarray(np.tile(b1, W)[None, :]),
        sel1=jnp.asarray(sel1),
        t2=jnp.asarray(t2),
        b2row=jnp.asarray(np.tile(b2, W2)[None, :]),
        g1=jnp.asarray(g1),
        bfc1row=jnp.asarray(np.asarray(raw["b_fc1"], np.float32)[None, :]),
        wfc2=raw["w_fc2"],
        bfc2row=jnp.asarray(np.asarray(raw["b_fc2"], np.float32)[None, :]),
    )


def init_params(n_channels=16, key=None):
    if key is None:
        key = jax.random.PRNGKey(0)
    c1, c2 = n_channels, n_channels // 2
    ks = jax.random.split(key, 8)

    def u(k, shape, fan_in):
        lim = 1.0 / math.sqrt(fan_in)
        return jax.random.uniform(k, shape, jnp.float32, -lim, lim)

    raw = dict(
        w_conv1=u(ks[0], (3, 3, 3, c1), 3 * 9),          # HWIO
        b_conv1=u(ks[1], (c1,), 3 * 9),
        w_conv2=u(ks[2], (3, 3, c1, c2), c1 * 9),
        b_conv2=u(ks[3], (c2,), c1 * 9),
        w_fc1=u(ks[4], (c2 * 8 * 8, 32), c2 * 8 * 8),    # (in, out), torch NCHW row order
        b_fc1=u(ks[5], (32,), c2 * 8 * 8),
        w_fc2=u(ks[6], (32, 2), 32),
        b_fc2=u(ks[7], (2,), 32),
    )
    raw.update(_build_kernel_consts(raw, n_channels))
    return raw


# --------------------------------------------------------------------------- #
# Forward (single Pallas call) and pure-JAX reference
# --------------------------------------------------------------------------- #
def net_forward(params, x_nchw, n_channels=16):
    c1, c2 = n_channels, n_channels // 2
    B = x_nchw.shape[0]
    # Only per-call glue: pad H by 1 each side and flatten (b, ci, h_pad) into rows.
    xp = jnp.pad(x_nchw, ((0, 0), (0, 0), (1, 1), (0, 0))).reshape(B * 3 * 34, 32)

    operands = (xp, params["t1"], params["b1row"], params["sel1"], params["t2"],
                params["b2row"], params["g1"], params["bfc1row"],
                params["wfc2"], params["bfc2row"])
    return pl.pallas_call(
        functools.partial(_net_fused_kernel, batch=B, c1=c1, c2=c2),
        out_shape=jax.ShapeDtypeStruct((B, 2), jnp.float32),
        grid=(1,),
        in_specs=[_full_block(op.shape) for op in operands],
        out_specs=_full_block((B, 2)),
        compiler_params=pltpu.CompilerParams(
            dimension_semantics=("arbitrary",),
            vmem_limit_bytes=32 * 1024 * 1024),
    )(*operands)


def net_forward_ref(params, x_nchw, n_channels=16):
    """Pure-JAX reference of the same forward pass (torch Net semantics)."""
    c2 = n_channels // 2
    x = jnp.transpose(x_nchw, (0, 2, 3, 1))

    def conv(xn, w, b):
        y = jax.lax.conv_general_dilated(
            xn, w, window_strides=(1, 1), padding="SAME",
            dimension_numbers=("NHWC", "HWIO", "NHWC"))
        return jnp.tanh(y + b)

    def pool(y):
        return jax.lax.reduce_window(y, -jnp.inf, jax.lax.max,
                                     (1, 2, 2, 1), (1, 2, 2, 1), "VALID")

    out = pool(conv(x, params["w_conv1"], params["b_conv1"]))
    out = pool(conv(out, params["w_conv2"], params["b_conv2"]))
    B = out.shape[0]
    flat = jnp.transpose(out, (0, 3, 1, 2)).reshape(B, c2 * 8 * 8)
    h = jnp.tanh(flat @ params["w_fc1"] + params["b_fc1"])
    return h @ params["w_fc2"] + params["b_fc2"]


if __name__ == "__main__":
    B = 2
    # Input implied by the module: NCHW, 3 channels, 32x32
    # (fc1 in_features = (n_channels//2) * 8 * 8 after two 2x2 pools).
    x = jax.random.normal(jax.random.PRNGKey(0), (B, 3, 32, 32), jnp.float32)
    params = init_params(16)

    fwd = jax.jit(net_forward)
    out = jax.block_until_ready(fwd(params, x))

    assert out.shape == (B, 2)
    assert bool(jnp.all(jnp.isfinite(out)))
    ref = net_forward_ref(params, x)
    assert bool(jnp.allclose(out, ref, rtol=1e-4, atol=1e-4)), "mismatch vs reference"
    print("KERNEL_OK")
</pallas_src>

<mosaic_0001>
module attributes {stable_mosaic.version = 11 : i64} {
  func.func @_net_fused_kernel(%arg0: i32, %arg1: memref<204x32xf32, #tpu.memory_space<vmem>>, %arg2: memref<288x512xf32, #tpu.memory_space<vmem>>, %arg3: memref<1x512xf32, #tpu.memory_space<vmem>>, %arg4: memref<18x31xf32, #tpu.memory_space<vmem>>, %arg5: memref<1488x128xf32, #tpu.memory_space<vmem>>, %arg6: memref<1x128xf32, #tpu.memory_space<vmem>>, %arg7: memref<960x32xf32, #tpu.memory_space<vmem>>, %arg8: memref<1x32xf32, #tpu.memory_space<vmem>>, %arg9: memref<32x2xf32, #tpu.memory_space<vmem>>, %arg10: memref<1x2xf32, #tpu.memory_space<vmem>>, %arg11: memref<2x2xf32, #tpu.memory_space<vmem>>) attributes {dimension_semantics = [#tpu.dimension_semantics<arbitrary>], iteration_bounds = array<i64: 1>, scalar_prefetch = 0 : i64, scratch_operands = 0 : i64, tpu.core_type = #tpu.core_type<tc>, window_params = [{pipeline_mode = #tpu.pipeline_mode<synchronous>, transform_indices = @transform_0, window_bounds = array<i64: 204, 32>}, {pipeline_mode = #tpu.pipeline_mode<synchronous>, transform_indices = @transform_1, window_bounds = array<i64: 288, 512>}, {pipeline_mode = #tpu.pipeline_mode<synchronous>, transform_indices = @transform_2, window_bounds = array<i64: 1, 512>}, {pipeline_mode = #tpu.pipeline_mode<synchronous>, transform_indices = @transform_3, window_bounds = array<i64: 18, 31>}, {pipeline_mode = #tpu.pipeline_mode<synchronous>, transform_indices = @transform_4, window_bounds = array<i64: 1488, 128>}, {pipeline_mode = #tpu.pipeline_mode<synchronous>, transform_indices = @transform_5, window_bounds = array<i64: 1, 128>}, {pipeline_mode = #tpu.pipeline_mode<synchronous>, transform_indices = @transform_6, window_bounds = array<i64: 960, 32>}, {pipeline_mode = #tpu.pipeline_mode<synchronous>, transform_indices = @transform_7, window_bounds = array<i64: 1, 32>}, {pipeline_mode = #tpu.pipeline_mode<synchronous>, transform_indices = @transform_8, window_bounds = array<i64: 32, 2>}, {pipeline_mode = #tpu.pipeline_mode<synchronous>, transform_indices = @transform_9, window_bounds = array<i64: 1, 2>}, {pipeline_mode = #tpu.pipeline_mode<synchronous>, transform_indices = @transform_10, window_bounds = array<i64: 2, 2>}]} {
    %c0 = arith.constant 0 : index
    %c0_0 = arith.constant 0 : index
    %0 = vector.load %arg2[%c0, %c0_0] : memref<288x512xf32, #tpu.memory_space<vmem>>, vector<288x512xf32>
    %c0_1 = arith.constant 0 : index
    %c0_2 = arith.constant 0 : index
    %1 = vector.load %arg3[%c0_1, %c0_2] : memref<1x512xf32, #tpu.memory_space<vmem>>, vector<1x512xf32>
    %c0_3 = arith.constant 0 : index
    %c0_4 = arith.constant 0 : index
    %2 = vector.load %arg4[%c0_3, %c0_4] : memref<18x31xf32, #tpu.memory_space<vmem>>, vector<18x31xf32>
    %c0_5 = arith.constant 0 : index
    %c0_6 = arith.constant 0 : index
    %3 = vector.load %arg5[%c0_5, %c0_6] : memref<1488x128xf32, #tpu.memory_space<vmem>>, vector<1488x128xf32>
    %c0_7 = arith.constant 0 : index
    %c0_8 = arith.constant 0 : index
    %4 = vector.load %arg6[%c0_7, %c0_8] : memref<1x128xf32, #tpu.memory_space<vmem>>, vector<1x128xf32>
    %c0_9 = arith.constant 0 : index
    %c0_10 = arith.constant 0 : index
    %5 = vector.load %arg7[%c0_9, %c0_10] : memref<960x32xf32, #tpu.memory_space<vmem>>, vector<960x32xf32>
    %c0_11 = arith.constant 0 : index
    %c0_12 = arith.constant 0 : index
    %6 = vector.load %arg8[%c0_11, %c0_12] : memref<1x32xf32, #tpu.memory_space<vmem>>, vector<1x32xf32>
    %c0_13 = arith.constant 0 : index
    %c0_14 = arith.constant 0 : index
    %7 = vector.load %arg9[%c0_13, %c0_14] : memref<32x2xf32, #tpu.memory_space<vmem>>, vector<32x2xf32>
    %c0_15 = arith.constant 0 : index
    %c0_16 = arith.constant 0 : index
    %8 = vector.load %arg10[%c0_15, %c0_16] : memref<1x2xf32, #tpu.memory_space<vmem>>, vector<1x2xf32>
    %c0_17 = arith.constant 0 : index
    %c0_18 = arith.constant 0 : index
    %9 = vector.load %arg1[%c0_17, %c0_18] : memref<204x32xf32, #tpu.memory_space<vmem>>, vector<102x32xf32>
    %10 = vector.extract_strided_slice %9 {offsets = [0, 0], sizes = [32, 32], strides = [1, 1]} : vector<102x32xf32> to vector<32x32xf32>
    %11 = vector.extract_strided_slice %9 {offsets = [1, 0], sizes = [32, 32], strides = [1, 1]} : vector<102x32xf32> to vector<32x32xf32>
    %12 = vector.extract_strided_slice %9 {offsets = [2, 0], sizes = [32, 32], strides = [1, 1]} : vector<102x32xf32> to vector<32x32xf32>
    %13 = vector.extract_strided_slice %9 {offsets = [34, 0], sizes = [32, 32], strides = [1, 1]} : vector<102x32xf32> to vector<32x32xf32>
    %14 = vector.extract_strided_slice %9 {offsets = [35, 0], sizes = [32, 32], strides = [1, 1]} : vector<102x32xf32> to vector<32x32xf32>
    %15 = vector.extract_strided_slice %9 {offsets = [36, 0], sizes = [32, 32], strides = [1, 1]} : vector<102x32xf32> to vector<32x32xf32>
    %16 = vector.extract_strided_slice %9 {offsets = [68, 0], sizes = [32, 32], strides = [1, 1]} : vector<102x32xf32> to vector<32x32xf32>
    %17 = vector.extract_strided_slice %9 {offsets = [69, 0], sizes = [32, 32], strides = [1, 1]} : vector<102x32xf32> to vector<32x32xf32>
    %18 = vector.extract_strided_slice %9 {offsets = [70, 0], sizes = [32, 32], strides = [1, 1]} : vector<102x32xf32> to vector<32x32xf32>
    %19 = tpu.concatenate %10, %11, %12, %13, %14, %15, %16, %17, %18 in 1 : vector<32x32xf32>, vector<32x32xf32>, vector<32x32xf32>, vector<32x32xf32>, vector<32x32xf32>, vector<32x32xf32>, vector<32x32xf32>, vector<32x32xf32>, vector<32x32xf32> -> vector<32x288xf32>
    %cst = arith.constant dense<0.000000e+00> : vector<32x512xf32>
    %20 = tpu.matmul %19, %0, %cst {dimension_numbers = #tpu.dot_dimension_numbers<[1], [0], [0], [1], [0, 0, 1, 1], [], []>} : vector<32x288xf32>, vector<288x512xf32>, vector<32x512xf32> -> vector<32x512xf32>
    %21 = vector.broadcast %1 : vector<1x512xf32> to vector<32x512xf32>
    %22 = arith.addf %20, %21 : vector<32x512xf32>
    %23 = math.tanh %22 : vector<32x512xf32>
    %24 = vector.extract_strided_slice %23 {offsets = [0, 0], sizes = [32, 496], strides = [1, 1]} : vector<32x512xf32> to vector<32x496xf32>
    %25 = vector.extract_strided_slice %23 {offsets = [0, 16], sizes = [32, 496], strides = [1, 1]} : vector<32x512xf32> to vector<32x496xf32>
    %26 = arith.maximumf %24, %25 : vector<32x496xf32>
    %27 = vector.extract_strided_slice %26 {offsets = [0, 0], sizes = [31, 496], strides = [1, 1]} : vector<32x496xf32> to vector<31x496xf32>
    %28 = vector.extract_strided_slice %26 {offsets = [1, 0], sizes = [31, 496], strides = [1, 1]} : vector<32x496xf32> to vector<31x496xf32>
    %29 = arith.maximumf %27, %28 : vector<31x496xf32>
    %cst_19 = arith.constant dense<0.000000e+00> : vector<18x496xf32>
    %30 = tpu.matmul %2, %29, %cst_19 {dimension_numbers = #tpu.dot_dimension_numbers<[1], [0], [0], [1], [0, 0, 1, 1], [], []>} : vector<18x31xf32>, vector<31x496xf32>, vector<18x496xf32> -> vector<18x496xf32>
    %31 = vector.extract_strided_slice %30 {offsets = [0, 0], sizes = [16, 496], strides = [1, 1]} : vector<18x496xf32> to vector<16x496xf32>
    %32 = vector.extract_strided_slice %30 {offsets = [1, 0], sizes = [16, 496], strides = [1, 1]} : vector<18x496xf32> to vector<16x496xf32>
    %33 = vector.extract_strided_slice %30 {offsets = [2, 0], sizes = [16, 496], strides = [1, 1]} : vector<18x496xf32> to vector<16x496xf32>
    %34 = tpu.concatenate %31, %32, %33 in 1 : vector<16x496xf32>, vector<16x496xf32>, vector<16x496xf32> -> vector<16x1488xf32>
    %cst_20 = arith.constant dense<0.000000e+00> : vector<16x128xf32>
    %35 = tpu.matmul %34, %3, %cst_20 {dimension_numbers = #tpu.dot_dimension_numbers<[1], [0], [0], [1], [0, 0, 1, 1], [], []>} : vector<16x1488xf32>, vector<1488x128xf32>, vector<16x128xf32> -> vector<16x128xf32>
    %36 = vector.broadcast %4 : vector<1x128xf32> to vector<16x128xf32>
    %37 = arith.addf %35, %36 : vector<16x128xf32>
    %38 = math.tanh %37 : vector<16x128xf32>
    %39 = vector.extract_strided_slice %38 {offsets = [0, 0], sizes = [16, 120], strides = [1, 1]} : vector<16x128xf32> to vector<16x120xf32>
    %40 = vector.extract_strided_slice %38 {offsets = [0, 8], sizes = [16, 120], strides = [1, 1]} : vector<16x128xf32> to vector<16x120xf32>
    %41 = arith.maximumf %39, %40 : vector<16x120xf32>
    %42 = vector.extract_strided_slice %41 {offsets = [0, 0], sizes = [15, 120], strides = [1, 1]} : vector<16x120xf32> to vector<15x120xf32>
    %43 = vector.extract_strided_slice %41 {offsets = [1, 0], sizes = [15, 120], strides = [1, 1]} : vector<16x120xf32> to vector<15x120xf32>
    %44 = arith.maximumf %42, %43 : vector<15x120xf32>
    %45 = vector.extract_strided_slice %44 {offsets = [0, 0], sizes = [1, 120], strides = [1, 1]} : vector<15x120xf32> to vector<1x120xf32>
    %46 = vector.extract_strided_slice %44 {offsets = [2, 0], sizes = [1, 120], strides = [1, 1]} : vector<15x120xf32> to vector<1x120xf32>
    %47 = vector.extract_strided_slice %44 {offsets = [4, 0], sizes = [1, 120], strides = [1, 1]} : vector<15x120xf32> to vector<1x120xf32>
    %48 = vector.extract_strided_slice %44 {offsets = [6, 0], sizes = [1, 120], strides = [1, 1]} : vector<15x120xf32> to vector<1x120xf32>
    %49 = vector.extract_strided_slice %44 {offsets = [8, 0], sizes = [1, 120], strides = [1, 1]} : vector<15x120xf32> to vector<1x120xf32>
    %50 = vector.extract_strided_slice %44 {offsets = [10, 0], sizes = [1, 120], strides = [1, 1]} : vector<15x120xf32> to vector<1x120xf32>
    %51 = vector.extract_strided_slice %44 {offsets = [12, 0], sizes = [1, 120], strides = [1, 1]} : vector<15x120xf32> to vector<1x120xf32>
    %52 = vector.extract_strided_slice %44 {offsets = [14, 0], sizes = [1, 120], strides = [1, 1]} : vector<15x120xf32> to vector<1x120xf32>
    %53 = tpu.concatenate %45, %46, %47, %48, %49, %50, %51, %52 in 1 : vector<1x120xf32>, vector<1x120xf32>, vector<1x120xf32>, vector<1x120xf32>, vector<1x120xf32>, vector<1x120xf32>, vector<1x120xf32>, vector<1x120xf32> -> vector<1x960xf32>
    %c102 = arith.constant 102 : index
    %c0_21 = arith.constant 0 : index
    %54 = vector.load %arg1[%c102, %c0_21] : memref<204x32xf32, #tpu.memory_space<vmem>>, vector<102x32xf32>
    %55 = vector.extract_strided_slice %54 {offsets = [0, 0], sizes = [32, 32], strides = [1, 1]} : vector<102x32xf32> to vector<32x32xf32>
    %56 = vector.extract_strided_slice %54 {offsets = [1, 0], sizes = [32, 32], strides = [1, 1]} : vector<102x32xf32> to vector<32x32xf32>
    %57 = vector.extract_strided_slice %54 {offsets = [2, 0], sizes = [32, 32], strides = [1, 1]} : vector<102x32xf32> to vector<32x32xf32>
    %58 = vector.extract_strided_slice %54 {offsets = [34, 0], sizes = [32, 32], strides = [1, 1]} : vector<102x32xf32> to vector<32x32xf32>
    %59 = vector.extract_strided_slice %54 {offsets = [35, 0], sizes = [32, 32], strides = [1, 1]} : vector<102x32xf32> to vector<32x32xf32>
    %60 = vector.extract_strided_slice %54 {offsets = [36, 0], sizes = [32, 32], strides = [1, 1]} : vector<102x32xf32> to vector<32x32xf32>
    %61 = vector.extract_strided_slice %54 {offsets = [68, 0], sizes = [32, 32], strides = [1, 1]} : vector<102x32xf32> to vector<32x32xf32>
    %62 = vector.extract_strided_slice %54 {offsets = [69, 0], sizes = [32, 32], strides = [1, 1]} : vector<102x32xf32> to vector<32x32xf32>
    %63 = vector.extract_strided_slice %54 {offsets = [70, 0], sizes = [32, 32], strides = [1, 1]} : vector<102x32xf32> to vector<32x32xf32>
    %64 = tpu.concatenate %55, %56, %57, %58, %59, %60, %61, %62, %63 in 1 : vector<32x32xf32>, vector<32x32xf32>, vector<32x32xf32>, vector<32x32xf32>, vector<32x32xf32>, vector<32x32xf32>, vector<32x32xf32>, vector<32x32xf32>, vector<32x32xf32> -> vector<32x288xf32>
    %cst_22 = arith.constant dense<0.000000e+00> : vector<32x512xf32>
    %65 = tpu.matmul %64, %0, %cst_22 {dimension_numbers = #tpu.dot_dimension_numbers<[1], [0], [0], [1], [0, 0, 1, 1], [], []>} : vector<32x288xf32>, vector<288x512xf32>, vector<32x512xf32> -> vector<32x512xf32>
    %66 = vector.broadcast %1 : vector<1x512xf32> to vector<32x512xf32>
    %67 = arith.addf %65, %66 : vector<32x512xf32>
    %68 = math.tanh %67 : vector<32x512xf32>
    %69 = vector.extract_strided_slice %68 {offsets = [0, 0], sizes = [32, 496], strides = [1, 1]} : vector<32x512xf32> to vector<32x496xf32>
    %70 = vector.extract_strided_slice %68 {offsets = [0, 16], sizes = [32, 496], strides = [1, 1]} : vector<32x512xf32> to vector<32x496xf32>
    %71 = arith.maximumf %69, %70 : vector<32x496xf32>
    %72 = vector.extract_strided_slice %71 {offsets = [0, 0], sizes = [31, 496], strides = [1, 1]} : vector<32x496xf32> to vector<31x496xf32>
    %73 = vector.extract_strided_slice %71 {offsets = [1, 0], sizes = [31, 496], strides = [1, 1]} : vector<32x496xf32> to vector<31x496xf32>
    %74 = arith.maximumf %72, %73 : vector<31x496xf32>
    %cst_23 = arith.constant dense<0.000000e+00> : vector<18x496xf32>
    %75 = tpu.matmul %2, %74, %cst_23 {dimension_numbers = #tpu.dot_dimension_numbers<[1], [0], [0], [1], [0, 0, 1, 1], [], []>} : vector<18x31xf32>, vector<31x496xf32>, vector<18x496xf32> -> vector<18x496xf32>
    %76 = vector.extract_strided_slice %75 {offsets = [0, 0], sizes = [16, 496], strides = [1, 1]} : vector<18x496xf32> to vector<16x496xf32>
    %77 = vector.extract_strided_slice %75 {offsets = [1, 0], sizes = [16, 496], strides = [1, 1]} : vector<18x496xf32> to vector<16x496xf32>
    %78 = vector.extract_strided_slice %75 {offsets = [2, 0], sizes = [16, 496], strides = [1, 1]} : vector<18x496xf32> to vector<16x496xf32>
    %79 = tpu.concatenate %76, %77, %78 in 1 : vector<16x496xf32>, vector<16x496xf32>, vector<16x496xf32> -> vector<16x1488xf32>
    %cst_24 = arith.constant dense<0.000000e+00> : vector<16x128xf32>
    %80 = tpu.matmul %79, %3, %cst_24 {dimension_numbers = #tpu.dot_dimension_numbers<[1], [0], [0], [1], [0, 0, 1, 1], [], []>} : vector<16x1488xf32>, vector<1488x128xf32>, vector<16x128xf32> -> vector<16x128xf32>
    %81 = vector.broadcast %4 : vector<1x128xf32> to vector<16x128xf32>
    %82 = arith.addf %80, %81 : vector<16x128xf32>
    %83 = math.tanh %82 : vector<16x128xf32>
    %84 = vector.extract_strided_slice %83 {offsets = [0, 0], sizes = [16, 120], strides = [1, 1]} : vector<16x128xf32> to vector<16x120xf32>
    %85 = vector.extract_strided_slice %83 {offsets = [0, 8], sizes = [16, 120], strides = [1, 1]} : vector<16x128xf32> to vector<16x120xf32>
    %86 = arith.maximumf %84, %85 : vector<16x120xf32>
    %87 = vector.extract_strided_slice %86 {offsets = [0, 0], sizes = [15, 120], strides = [1, 1]} : vector<16x120xf32> to vector<15x120xf32>
    %88 = vector.extract_strided_slice %86 {offsets = [1, 0], sizes = [15, 120], strides = [1, 1]} : vector<16x120xf32> to vector<15x120xf32>
    %89 = arith.maximumf %87, %88 : vector<15x120xf32>
    %90 = vector.extract_strided_slice %89 {offsets = [0, 0], sizes = [1, 120], strides = [1, 1]} : vector<15x120xf32> to vector<1x120xf32>
    %91 = vector.extract_strided_slice %89 {offsets = [2, 0], sizes = [1, 120], strides = [1, 1]} : vector<15x120xf32> to vector<1x120xf32>
    %92 = vector.extract_strided_slice %89 {offsets = [4, 0], sizes = [1, 120], strides = [1, 1]} : vector<15x120xf32> to vector<1x120xf32>
    %93 = vector.extract_strided_slice %89 {offsets = [6, 0], sizes = [1, 120], strides = [1, 1]} : vector<15x120xf32> to vector<1x120xf32>
    %94 = vector.extract_strided_slice %89 {offsets = [8, 0], sizes = [1, 120], strides = [1, 1]} : vector<15x120xf32> to vector<1x120xf32>
    %95 = vector.extract_strided_slice %89 {offsets = [10, 0], sizes = [1, 120], strides = [1, 1]} : vector<15x120xf32> to vector<1x120xf32>
    %96 = vector.extract_strided_slice %89 {offsets = [12, 0], sizes = [1, 120], strides = [1, 1]} : vector<15x120xf32> to vector<1x120xf32>
    %97 = vector.extract_strided_slice %89 {offsets = [14, 0], sizes = [1, 120], strides = [1, 1]} : vector<15x120xf32> to vector<1x120xf32>
    %98 = tpu.concatenate %90, %91, %92, %93, %94, %95, %96, %97 in 1 : vector<1x120xf32>, vector<1x120xf32>, vector<1x120xf32>, vector<1x120xf32>, vector<1x120xf32>, vector<1x120xf32>, vector<1x120xf32>, vector<1x120xf32> -> vector<1x960xf32>
    %99 = tpu.concatenate %53, %98 in 0 : vector<1x960xf32>, vector<1x960xf32> -> vector<2x960xf32>
    %cst_25 = arith.constant dense<0.000000e+00> : vector<2x32xf32>
    %100 = tpu.matmul %99, %5, %cst_25 {dimension_numbers = #tpu.dot_dimension_numbers<[1], [0], [0], [1], [0, 0, 1, 1], [], []>} : vector<2x960xf32>, vector<960x32xf32>, vector<2x32xf32> -> vector<2x32xf32>
    %101 = vector.broadcast %6 : vector<1x32xf32> to vector<2x32xf32>
    %102 = arith.addf %100, %101 : vector<2x32xf32>
    %103 = math.tanh %102 : vector<2x32xf32>
    %cst_26 = arith.constant dense<0.000000e+00> : vector<2x2xf32>
    %104 = tpu.matmul %103, %7, %cst_26 {dimension_numbers = #tpu.dot_dimension_numbers<[1], [0], [0], [1], [0, 0, 1, 1], [], []>} : vector<2x32xf32>, vector<32x2xf32>, vector<2x2xf32> -> vector<2x2xf32>
    %105 = vector.broadcast %8 : vector<1x2xf32> to vector<2x2xf32>
    %106 = arith.addf %104, %105 : vector<2x2xf32>
    %c0_27 = arith.constant 0 : index
    %c0_28 = arith.constant 0 : index
    %107 = vector.load %arg11[%c0_27, %c0_28] : memref<2x2xf32, #tpu.memory_space<vmem>>, vector<2x2xf32>
    tpu.vector_store %arg11[%c0_27, %c0_28], %106 {strides = array<i32>} : memref<2x2xf32, #tpu.memory_space<vmem>>, vector<2x2xf32>,
    return
  }
  func.func @transform_0(%arg0: i32) -> (i32, i32) {
    %c0_i32 = arith.constant 0 : i32
    %c0_i32_0 = arith.constant 0 : i32
    %c0_i32_1 = arith.constant 0 : i32
    return %c0_i32, %c0_i32_0 : i32, i32
  }
  func.func @transform_1(%arg0: i32) -> (i32, i32) {
    %c0_i32 = arith.constant 0 : i32
    %c0_i32_0 = arith.constant 0 : i32
    %c0_i32_1 = arith.constant 0 : i32
    return %c0_i32, %c0_i32_0 : i32, i32
  }
  func.func @transform_2(%arg0: i32) -> (i32, i32) {
    %c0_i32 = arith.constant 0 : i32
    %c0_i32_0 = arith.constant 0 : i32
    %c0_i32_1 = arith.constant 0 : i32
    return %c0_i32, %c0_i32_0 : i32, i32
  }
  func.func @transform_3(%arg0: i32) -> (i32, i32) {
    %c0_i32 = arith.constant 0 : i32
    %c0_i32_0 = arith.constant 0 : i32
    %c0_i32_1 = arith.constant 0 : i32
    return %c0_i32, %c0_i32_0 : i32, i32
  }
  func.func @transform_4(%arg0: i32) -> (i32, i32) {
    %c0_i32 = arith.constant 0 : i32
    %c0_i32_0 = arith.constant 0 : i32
    %c0_i32_1 = arith.constant 0 : i32
    return %c0_i32, %c0_i32_0 : i32, i32
  }
  func.func @transform_5(%arg0: i32) -> (i32, i32) {
    %c0_i32 = arith.constant 0 : i32
    %c0_i32_0 = arith.constant 0 : i32
    %c0_i32_1 = arith.constant 0 : i32
    return %c0_i32, %c0_i32_0 : i32, i32
  }
  func.func @transform_6(%arg0: i32) -> (i32, i32) {
    %c0_i32 = arith.constant 0 : i32
    %c0_i32_0 = arith.constant 0 : i32
    %c0_i32_1 = arith.constant 0 : i32
    return %c0_i32, %c0_i32_0 : i32, i32
  }
  func.func @transform_7(%arg0: i32) -> (i32, i32) {
    %c0_i32 = arith.constant 0 : i32
    %c0_i32_0 = arith.constant 0 : i32
    %c0_i32_1 = arith.constant 0 : i32
    return %c0_i32, %c0_i32_0 : i32, i32
  }
  func.func @transform_8(%arg0: i32) -> (i32, i32) {
    %c0_i32 = arith.constant 0 : i32
    %c0_i32_0 = arith.constant 0 : i32
    %c0_i32_1 = arith.constant 0 : i32
    return %c0_i32, %c0_i32_0 : i32, i32
  }
  func.func @transform_9(%arg0: i32) -> (i32, i32) {
    %c0_i32 = arith.constant 0 : i32
    %c0_i32_0 = arith.constant 0 : i32
    %c0_i32_1 = arith.constant 0 : i32
    return %c0_i32, %c0_i32_0 : i32, i32
  }
  func.func @transform_10(%arg0: i32) -> (i32, i32) {
    %c0_i32 = arith.constant 0 : i32
    %c0_i32_0 = arith.constant 0 : i32
    %c0_i32_1 = arith.constant 0 : i32
    return %c0_i32, %c0_i32_0 : i32, i32
  }
}

</mosaic_0001>

<llo_original>
// kernel: net_forward.1
$region0: #{net_forward.1}
  #allocation0 [shape = 'u32[]', space=smem, size = 0x4, offset = 0x4, fixed_abs, tag = 'smem constant byte address 0x4 - core index']
  #allocation1 [shape = 'u32[144,128]{1,0:T(1,128)}', space=vmem, size = 0x12000, scoped, tag = 'internal scratch']
  %s0 = inlined_call_operand.vmem [shape: f32[204,32], index: 0, kind: input, shape index: {}]
  %s1 = inlined_call_operand.hbm [shape: f32[288,512], index: 1, kind: input, shape index: {}]
  %s2 = inlined_call_operand.vmem [shape: f32[1,512], index: 2, kind: input, shape index: {}]
  %s3 = inlined_call_operand.vmem [shape: f32[18,31], index: 3, kind: input, shape index: {}]
  %s4 = inlined_call_operand.vmem [shape: f32[1488,128], index: 4, kind: input, shape index: {}]
  %s5 = inlined_call_operand.vmem [shape: f32[1,128], index: 5, kind: input, shape index: {}]
  %s6 = inlined_call_operand.vmem [shape: f32[960,32], index: 6, kind: input, shape index: {}]
  %s7 = inlined_call_operand.vmem [shape: f32[1,32], index: 7, kind: input, shape index: {}]
  %s8 = inlined_call_operand.vmem [shape: f32[32,2], index: 8, kind: input, shape index: {}]
  %s9 = inlined_call_operand.vmem [shape: f32[1,2], index: 9, kind: input, shape index: {}]
  %s10 = inlined_call_operand.hbm [shape: f32[2,2], index: 10, kind: output, shape index: {}]
  %s11 = sld [smem:[#allocation0]]
  $region54: #{net_forward.1} parent=0
    _
  %s13 = ssub.s32 1, %s11
  %s14 = scalar_select 0, %s13, %s11
  $region1: #{net_forward.1} parent=0
    #allocation2 [shape = 'u8[589824]{0}', space=vmem, size = 0x90000, scoped, tag = 'input window, operand 1, single buffered']
    #allocation3 [shape = 's32[1]{0}', space=sflag, size = 0x4, scoped, tag = 'scoped memory for net_forward.1']
    #allocation4 [shape = 's32[1]{0}', space=sflag, size = 0x4, scoped, tag = 'scoped memory for net_forward.1']
    #allocation5 [shape = 'u8[1024]{0}', space=vmem, size = 0x400, scoped, tag = 'output window, operand 0, single buffered']
    %15 = vsyncpa [#allocation3], 0
    %16 = vsyncpa [#allocation4], 0
    // Predicated region
    $region2: #{net_forward.1} parent=1 // pred_check
      _
    $region3: #{net_forward.1} parent=1 // pred_check_branch
      %18 = sbr.rel (0) target = $region5
    $region4: #{net_forward.1} parent=1 // pred_region
      _
    $region5: #{net_forward.1} parent=1 // pred_fallthru
      _
    // Predicated region
    $region6: #{net_forward.1} parent=1 // pred_check
      _
    $region7: #{net_forward.1} parent=1 // pred_check_branch
      %20 = sbr.rel (0) target = $region9
    $region8: #{net_forward.1} parent=1 // pred_region
      %s22 = ssub.s32 18432, 18432
      %23 = vsyncadd [#allocation3], %s22
      %s24 = sshll.u32 [#allocation2], 4
      %s25 = int_to_ptr.vmem [resolvable:$true] %s24
      %30 = dma.hbm_to_vmem [thread:$0]  %s1, 18432, %s25, [#allocation3], 512, 512, 32
    $region9: #{net_forward.1} parent=1 // pred_fallthru
      _
    // Predicated region
    $region10: #{net_forward.1} parent=1 // pred_check
      _
    $region11: #{net_forward.1} parent=1 // pred_check_branch
      %32 = sbr.rel (0) target = $region13
    $region12: #{net_forward.1} parent=1 // pred_region
      _
    $region13: #{net_forward.1} parent=1 // pred_fallthru
      _
    // Predicated region
    $region14: #{net_forward.1} parent=1 // pred_check
      _
    $region15: #{net_forward.1} parent=1 // pred_check_branch
      %34 = sbr.rel (0) target = $region17
    $region16: #{net_forward.1} parent=1 // pred_region
      _
    $region17: #{net_forward.1} parent=1 // pred_fallthru
      _
    // Predicated region
    $region18: #{net_forward.1} parent=1 // pred_check
      _
    $region19: #{net_forward.1} parent=1 // pred_check_branch
      %36 = sbr.rel (0) target = $region21
    $region20: #{net_forward.1} parent=1 // pred_region
      _
    $region21: #{net_forward.1} parent=1 // pred_fallthru
      _
    // Predicated region
    $region22: #{net_forward.1} parent=1 // pred_check
      _
    $region23: #{net_forward.1} parent=1 // pred_check_branch
      %38 = sbr.rel (0) target = $region25
    $region24: #{net_forward.1} parent=1 // pred_region
      _
    $region25: #{net_forward.1} parent=1 // pred_fallthru
      _
    // Predicated region
    $region26: #{net_forward.1} parent=1 // pred_check
      _
    $region27: #{net_forward.1} parent=1 // pred_check_branch
      %40 = sbr.rel (0) target = $region29
    $region28: #{net_forward.1} parent=1 // pred_region
      _
    $region29: #{net_forward.1} parent=1 // pred_fallthru
      _
    // Predicated region
    $region30: #{net_forward.1} parent=1 // pred_check
      _
    $region31: #{net_forward.1} parent=1 // pred_check_branch
      %42 = sbr.rel (0) target = $region33
    $region32: #{net_forward.1} parent=1 // pred_region
      _
    $region33: #{net_forward.1} parent=1 // pred_fallthru
      _
    // Predicated region
    $region34: #{net_forward.1} parent=1 // pred_check
      _
    $region35: #{net_forward.1} parent=1 // pred_check_branch
      %44 = sbr.rel (0) target = $region37
    $region36: #{net_forward.1} parent=1 // pred_region
      _
    $region37: #{net_forward.1} parent=1 // pred_fallthru
      _
    // Predicated region
    $region38: #{net_forward.1} parent=1 // pred_check
      _
    $region39: #{net_forward.1} parent=1 // pred_check_branch
      %46 = sbr.rel (0) target = $region41
    $region40: #{net_forward.1} parent=1 // pred_region
      _
    $region41: #{net_forward.1} parent=1 // pred_fallthru
      _
    // Predicated region
    $region42: #{net_forward.1} parent=1 // pred_check
      _
    $region43: #{net_forward.1} parent=1 // pred_check_branch
      %48 = sbr.rel (0) target = $region45
    $region44: #{net_forward.1} parent=1 // pred_region
      %49 = dma.done [#allocation3], 18432
    $region45: #{net_forward.1} parent=1 // pred_fallthru
      _
    %v50 = vld [vmem:[#allocation2] sm:$0xff]
    %v51 = vld [vmem:[#allocation2 + $0x8] sm:$0xff]
    %v52 = vld [vmem:[#allocation2 + $0x10] sm:$0xff]
    %v53 = vld [vmem:[#allocation2 + $0x18] sm:$0xff]
    %v54 = vld [vmem:[#allocation2 + $0x20] sm:$0xff]
    %v55 = vld [vmem:[#allocation2 + $0x28] sm:$0xff]
    %v56 = vld [vmem:[#allocation2 + $0x30] sm:$0xff]
    %v57 = vld [vmem:[#allocation2 + $0x38] sm:$0xff]
    %v58 = vld [vmem:[#allocation2 + $0x40] sm:$0xff]
    %v59 = vld [vmem:[#allocation2 + $0x48] sm:$0xff]
    %v60 = vld [vmem:[#allocation2 + $0x50] sm:$0xff]
    %v61 = vld [vmem:[#allocation2 + $0x58] sm:$0xff]
    %v62 = vld [vmem:[#allocation2 + $0x60] sm:$0xff]
    %v63 = vld [vmem:[#allocation2 + $0x68] sm:$0xff]
    %v64 = vld [vmem:[#allocation2 + $0x70] sm:$0xff]
    %v65 = vld [vmem:[#allocation2 + $0x78] sm:$0xff]
    %v66 = vld [vmem:[#allocation2 + $0x80] sm:$0xff]
    %v67 = vld [vmem:[#allocation2 + $0x88] sm:$0xff]
    %v68 = vld [vmem:[#allocation2 + $0x90] sm:$0xff]
    %v69 = vld [vmem:[#allocation2 + $0x98] sm:$0xff]
    %v70 = vld [vmem:[#allocation2 + $0xa0] sm:$0xff]
    %v71 = vld [vmem:[#allocation2 + $0xa8] sm:$0xff]
    %v72 = vld [vmem:[#allocation2 + $0xb0] sm:$0xff]
    %v73 = vld [vmem:[#allocation2 + $0xb8] sm:$0xff]
    %v74 = vld [vmem:[#allocation2 + $0xc0] sm:$0xff]
    %v75 = vld [vmem:[#allocation2 + $0xc8] sm:$0xff]
    %v76 = vld [vmem:[#allocation2 + $0xd0] sm:$0xff]
    %v77 = vld [vmem:[#allocation2 + $0xd8] sm:$0xff]
    %v78 = vld [vmem:[#allocation2 + $0xe0] sm:$0xff]
    %v79 = vld [vmem:[#allocation2 + $0xe8] sm:$0xff]
    %v80 = vld [vmem:[#allocation2 + $0xf0] sm:$0xff]
    %v81 = vld [vmem:[#allocation2 + $0xf8] sm:$0xff]
    %v82 = vld [vmem:[#allocation2 + $0x100] sm:$0xff]
    %v83 = vld [vmem:[#allocation2 + $0x108] sm:$0xff]
    %v84 = vld [vmem:[#allocation2 + $0x110] sm:$0xff]
    %v85 = vld [vmem:[#allocation2 + $0x118] sm:$0xff]
    %v86 = vld [vmem:[#allocation2 + $0x120] sm:$0xff]
    %v87 = vld [vmem:[#allocation2 + $0x128] sm:$0xff]
    %v88 = vld [vmem:[#allocation2 + $0x130] sm:$0xff]
    %v89 = vld [vmem:[#allocation2 + $0x138] sm:$0xff]
    %v90 = vld [vmem:[#allocation2 + $0x140] sm:$0xff]
    %v91 = vld [vmem:[#allocation2 + $0x148] sm:$0xff]
    %v92 = vld [vmem:[#allocation2 + $0x150] sm:$0xff]
    %v93 = vld [vmem:[#allocation2 + $0x158] sm:$0xff]
    %v94 = vld [vmem:[#allocation2 + $0x160] sm:$0xff]
    %v95 = vld [vmem:[#allocation2 + $0x168] sm:$0xff]
    %v96 = vld [vmem:[#allocation2 + $0x170] sm:$0xff]
    %v97 = vld [vmem:[#allocation2 + $0x178] sm:$0xff]
    %v98 = vld [vmem:[#allocation2 + $0x180] sm:$0xff]
    %v99 = vld [vmem:[#allocation2 + $0x188] sm:$0xff]
    %v100 = vld [vmem:[#allocation2 + $0x190] sm:$0xff]
    %v101 = vld [vmem:[#allocation2 + $0x198] sm:$0xff]
    %v102 = vld [vmem:[#allocation2 + $0x1a0] sm:$0xff]
    %v103 = vld [vmem:[#allocation2 + $0x1a8] sm:$0xff]
    %v104 = vld [vmem:[#allocation2 + $0x1b0] sm:$0xff]
    %v105 = vld [vmem:[#allocation2 + $0x1b8] sm:$0xff]
    %v106 = vld [vmem:[#allocation2 + $0x1c0] sm:$0xff]
    %v107 = vld [vmem:[#allocation2 + $0x1c8] sm:$0xff]
    %v108 = vld [vmem:[#allocation2 + $0x1d0] sm:$0xff]
    %v109 = vld [vmem:[#allocation2 + $0x1d8] sm:$0xff]
    %v110 = vld [vmem:[#allocation2 + $0x1e0] sm:$0xff]
    %v111 = vld [vmem:[#allocation2 + $0x1e8] sm:$0xff]
    %v112 = vld [vmem:[#allocation2 + $0x1f0] sm:$0xff]
    %v113 = vld [vmem:[#allocation2 + $0x1f8] sm:$0xff]
    %v114 = vld [vmem:[#allocation2 + $0x200] sm:$0xff]
    %v115 = vld [vmem:[#allocation2 + $0x208] sm:$0xff]
    %v116 = vld [vmem:[#allocation2 + $0x210] sm:$0xff]
    %v117 = vld [vmem:[#allocation2 + $0x218] sm:$0xff]
    %v118 = vld [vmem:[#allocation2 + $0x220] sm:$0xff]
    %v119 = vld [vmem:[#allocation2 + $0x228] sm:$0xff]
    %v120 = vld [vmem:[#allocation2 + $0x230] sm:$0xff]
    %v121 = vld [vmem:[#allocation2 + $0x238] sm:$0xff]
    %v122 = vld [vmem:[#allocation2 + $0x240] sm:$0xff]
    %v123 = vld [vmem:[#allocation2 + $0x248] sm:$0xff]
    %v124 = vld [vmem:[#allocation2 + $0x250] sm:$0xff]
    %v125 = vld [vmem:[#allocation2 + $0x258] sm:$0xff]
    %v126 = vld [vmem:[#allocation2 + $0x260] sm:$0xff]
    %v127 = vld [vmem:[#allocation2 + $0x268] sm:$0xff]
    %v128 = vld [vmem:[#allocation2 + $0x270] sm:$0xff]
    %v129 = vld [vmem:[#allocation2 + $0x278] sm:$0xff]
    %v130 = vld [vmem:[#allocation2 + $0x280] sm:$0xff]
    %v131 = vld [vmem:[#allocation2 + $0x288] sm:$0xff]
    %v132 = vld [vmem:[#allocation2 + $0x290] sm:$0xff]
    %v133 = vld [vmem:[#allocation2 + $0x298] sm:$0xff]
    %v134 = vld [vmem:[#allocation2 + $0x2a0] sm:$0xff]
    %v135 = vld [vmem:[#allocation2 + $0x2a8] sm:$0xff]
    %v136 = vld [vmem:[#allocation2 + $0x2b0] sm:$0xff]
    %v137 = vld [vmem:[#allocation2 + $0x2b8] sm:$0xff]
    %v138 = vld [vmem:[#allocation2 + $0x2c0] sm:$0xff]
    %v139 = vld [vmem:[#allocation2 + $0x2c8] sm:$0xff]
    %v140 = vld [vmem:[#allocation2 + $0x2d0] sm:$0xff]
    %v141 = vld [vmem:[#allocation2 + $0x2d8] sm:$0xff]
    %v142 = vld [vmem:[#allocation2 + $0x2e0] sm:$0xff]
    %v143 = vld [vmem:[#allocation2 + $0x2e8] sm:$0xff]
    %v144 = vld [vmem:[#allocation2 + $0x2f0] sm:$0xff]
    %v145 = vld [vmem:[#allocation2 + $0x2f8] sm:$0xff]
    %v146 = vld [vmem:[#allocation2 + $0x300] sm:$0xff]
    %v147 = vld [vmem:[#allocation2 + $0x308] sm:$0xff]
    %v148 = vld [vmem:[#allocation2 + $0x310] sm:$0xff]
    %v149 = vld [vmem:[#allocation2 + $0x318] sm:$0xff]
    %v150 = vld [vmem:[#allocation2 + $0x320] sm:$0xff]
    %v151 = vld [vmem:[#allocation2 + $0x328] sm:$0xff]
    %v152 = vld [vmem:[#allocation2 + $0x330] sm:$0xff]
    %v153 = vld [vmem:[#allocation2 + $0x338] sm:$0xff]
    %v154 = vld [vmem:[#allocation2 + $0x340] sm:$0xff]
    %v155 = vld [vmem:[#allocation2 + $0x348] sm:$0xff]
    %v156 = vld [vmem:[#allocation2 + $0x350] sm:$0xff]
    %v157 = vld [vmem:[#allocation2 + $0x358] sm:$0xff]
    %v158 = vld [vmem:[#allocation2 + $0x360] sm:$0xff]
    %v159 = vld [vmem:[#allocation2 + $0x368] sm:$0xff]
    %v160 = vld [vmem:[#allocation2 + $0x370] sm:$0xff]
    %v161 = vld [vmem:[#allocation2 + $0x378] sm:$0xff]
    %v162 = vld [vmem:[#allocation2 + $0x380] sm:$0xff]
    %v163 = vld [vmem:[#allocation2 + $0x388] sm:$0xff]
    %v164 = vld [vmem:[#allocation2 + $0x390] sm:$0xff]
    %v165 = vld [vmem:[#allocation2 + $0x398] sm:$0xff]
    %v166 = vld [vmem:[#allocation2 + $0x3a0] sm:$0xff]
    %v167 = vld [vmem:[#allocation2 + $0x3a8] sm:$0xff]
    %v168 = vld [vmem:[#allocation2 + $0x3b0] sm:$0xff]
    %v169 = vld [vmem:[#allocation2 + $0x3b8] sm:$0xff]
    %v170 = vld [vmem:[#allocation2 + $0x3c0] sm:$0xff]
    %v171 = vld [vmem:[#allocation2 + $0x3c8] sm:$0xff]
    %v172 = vld [vmem:[#allocation2 + $0x3d0] sm:$0xff]
    %v173 = vld [vmem:[#allocation2 + $0x3d8] sm:$0xff]
    %v174 = vld [vmem:[#allocation2 + $0x3e0] sm:$0xff]
    %v175 = vld [vmem:[#allocation2 + $0x3e8] sm:$0xff]
    %v176 = vld [vmem:[#allocation2 + $0x3f0] sm:$0xff]
    %v177 = vld [vmem:[#allocation2 + $0x3f8] sm:$0xff]
    %v178 = vld [vmem:[#allocation2 + $0x400] sm:$0xff]
    %v179 = vld [vmem:[#allocation2 + $0x408] sm:$0xff]
    %v180 = vld [vmem:[#allocation2 + $0x410] sm:$0xff]
    %v181 = vld [vmem:[#allocation2 + $0x418] sm:$0xff]
    %v182 = vld [vmem:[#allocation2 + $0x420] sm:$0xff]
    %v183 = vld [vmem:[#allocation2 + $0x428] sm:$0xff]
    %v184 = vld [vmem:[#allocation2 + $0x430] sm:$0xff]
    %v185 = vld [vmem:[#allocation2 + $0x438] sm:$0xff]
    %v186 = vld [vmem:[#allocation2 + $0x440] sm:$0xff]
    %v187 = vld [vmem:[#allocation2 + $0x448] sm:$0xff]
    %v188 = vld [vmem:[#allocation2 + $0x450] sm:$0xff]
    %v189 = vld [vmem:[#allocation2 + $0x458] sm:$0xff]
    %v190 = vld [vmem:[#allocation2 + $0x460] sm:$0xff]
    %v191 = vld [vmem:[#allocation2 + $0x468] sm:$0xff]
    %v192 = vld [vmem:[#allocation2 + $0x470] sm:$0xff]
    %v193 = vld [vmem:[#allocation2 + $0x478] sm:$0xff]
    %v194 = vld [vmem:[%s2] sm:$0xf]
    %v195 = vld [vmem:[%s3] sm:$0xff]
    %v196 = vld [vmem:[%s3 + $0x8] sm:$0xff]
    %v197 = vld [vmem:[%s3 + $0x10] sm:$0x3]
    %v198 = vld [vmem:[%s4] sm:$0xff]
    %v199 = vld [vmem:[%s4 + $0x8] sm:$0xff]
    %v200 = vld [vmem:[%s4 + $0x10] sm:$0xff]
    %v201 = vld [vmem:[%s4 + $0x18] sm:$0xff]
    %v202 = vld [vmem:[%s4 + $0x20] sm:$0xff]
    %v203 = vld [vmem:[%s4 + $0x28] sm:$0xff]
    %v204 = vld [vmem:[%s4 + $0x30] sm:$0xff]
    %v205 = vld [vmem:[%s4 + $0x38] sm:$0xff]
    %v206 = vld [vmem:[%s4 + $0x40] sm:$0xff]
    %v207 = vld [vmem:[%s4 + $0x48] sm:$0xff]
    %v208 = vld [vmem:[%s4 + $0x50] sm:$0xff]
    %v209 = vld [vmem:[%s4 + $0x58] sm:$0xff]
    %v210 = vld [vmem:[%s4 + $0x60] sm:$0xff]
    %v211 = vld [vmem:[%s4 + $0x68] sm:$0xff]
    %v212 = vld [vmem:[%s4 + $0x70] sm:$0xff]
    %v213 = vld [vmem:[%s4 + $0x78] sm:$0xff]
    %v214 = vld [vmem:[%s4 + $0x80] sm:$0xff]
    %v215 = vld [vmem:[%s4 + $0x88] sm:$0xff]
    %v216 = vld [vmem:[%s4 + $0x90] sm:$0xff]
    %v217 = vld [vmem:[%s4 + $0x98] sm:$0xff]
    %v218 = vld [vmem:[%s4 + $0xa0] sm:$0xff]
    %v219 = vld [vmem:[%s4 + $0xa8] sm:$0xff]
    %v220 = vld [vmem:[%s4 + $0xb0] sm:$0xff]
    %v221 = vld [vmem:[%s4 + $0xb8] sm:$0xff]
    %v222 = vld [vmem:[%s4 + $0xc0] sm:$0xff]
    %v223 = vld [vmem:[%s4 + $0xc8] sm:$0xff]
    %v224 = vld [vmem:[%s4 + $0xd0] sm:$0xff]
    %v225 = vld [vmem:[%s4 + $0xd8] sm:$0xff]
    %v226 = vld [vmem:[%s4 + $0xe0] sm:$0xff]
    %v227 = vld [vmem:[%s4 + $0xe8] sm:$0xff]
    %v228 = vld [vmem:[%s4 + $0xf0] sm:$0xff]
    %v229 = vld [vmem:[%s4 + $0xf8] sm:$0xff]
    %v230 = vld [vmem:[%s4 + $0x100] sm:$0xff]
    %v231 = vld [vmem:[%s4 + $0x108] sm:$0xff]
    %v232 = vld [vmem:[%s4 + $0x110] sm:$0xff]
    %v233 = vld [vmem:[%s4 + $0x118] sm:$0xff]
    %v234 = vld [vmem:[%s4 + $0x120] sm:$0xff]
    %v235 = vld [vmem:[%s4 + $0x128] sm:$0xff]
    %v236 = vld [vmem:[%s4 + $0x130] sm:$0xff]
    %v237 = vld [vmem:[%s4 + $0x138] sm:$0xff]
    %v238 = vld [vmem:[%s4 + $0x140] sm:$0xff]
    %v239 = vld [vmem:[%s4 + $0x148] sm:$0xff]
    %v240 = vld [vmem:[%s4 + $0x150] sm:$0xff]
    %v241 = vld [vmem:[%s4 + $0x158] sm:$0xff]
    %v242 = vld [vmem:[%s4 + $0x160] sm:$0xff]
    %v243 = vld [vmem:[%s4 + $0x168] sm:$0xff]
    %v244 = vld [vmem:[%s4 + $0x170] sm:$0xff]
    %v245 = vld [vmem:[%s4 + $0x178] sm:$0xff]
    %v246 = vld [vmem:[%s4 + $0x180] sm:$0xff]
    %v247 = vld [vmem:[%s4 + $0x188] sm:$0xff]
    %v248 = vld [vmem:[%s4 + $0x190] sm:$0xff]
    %v249 = vld [vmem:[%s4 + $0x198] sm:$0xff]
    %v250 = vld [vmem:[%s4 + $0x1a0] sm:$0xff]
    %v251 = vld [vmem:[%s4 + $0x1a8] sm:$0xff]
    %v252 = vld [vmem:[%s4 + $0x1b0] sm:$0xff]
    %v253 = vld [vmem:[%s4 + $0x1b8] sm:$0xff]
    %v254 = vld [vmem:[%s4 + $0x1c0] sm:$0xff]
    %v255 = vld [vmem:[%s4 + $0x1c8] sm:$0xff]
    %v256 = vld [vmem:[%s4 + $0x1d0] sm:$0xff]
    %v257 = vld [vmem:[%s4 + $0x1d8] sm:$0xff]
    %v258 = vld [vmem:[%s4 + $0x1e0] sm:$0xff]
    %v259 = vld [vmem:[%s4 + $0x1e8] sm:$0xff]
    %v260 = vld [vmem:[%s4 + $0x1f0] sm:$0xff]
    %v261 = vld [vmem:[%s4 + $0x1f8] sm:$0xff]
    %v262 = vld [vmem:[%s4 + $0x200] sm:$0xff]
    %v263 = vld [vmem:[%s4 + $0x208] sm:$0xff]
    %v264 = vld [vmem:[%s4 + $0x210] sm:$0xff]
    %v265 = vld [vmem:[%s4 + $0x218] sm:$0xff]
    %v266 = vld [vmem:[%s4 + $0x220] sm:$0xff]
    %v267 = vld [vmem:[%s4 + $0x228] sm:$0xff]
    %v268 = vld [vmem:[%s4 + $0x230] sm:$0xff]
    %v269 = vld [vmem:[%s4 + $0x238] sm:$0xff]
    %v270 = vld [vmem:[%s4 + $0x240] sm:$0xff]
    %v271 = vld [vmem:[%s4 + $0x248] sm:$0xff]
    %v272 = vld [vmem:[%s4 + $0x250] sm:$0xff]
    %v273 = vld [vmem:[%s4 + $0x258] sm:$0xff]
    %v274 = vld [vmem:[%s4 + $0x260] sm:$0xff]
    %v275 = vld [vmem:[%s4 + $0x268] sm:$0xff]
    %v276 = vld [vmem:[%s4 + $0x270] sm:$0xff]
    %v277 = vld [vmem:[%s4 + $0x278] sm:$0xff]
    %v278 = vld [vmem:[%s4 + $0x280] sm:$0xff]
    %v279 = vld [vmem:[%s4 + $0x288] sm:$0xff]
    %v280 = vld [vmem:[%s4 + $0x290] sm:$0xff]
    %v281 = vld [vmem:[%s4 + $0x298] sm:$0xff]
    %v282 = vld [vmem:[%s4 + $0x2a0] sm:$0xff]
    %v283 = vld [vmem:[%s4 + $0x2a8] sm:$0xff]
    %v284 = vld [vmem:[%s4 + $0x2b0] sm:$0xff]
    %v285 = vld [vmem:[%s4 + $0x2b8] sm:$0xff]
    %v286 = vld [vmem:[%s4 + $0x2c0] sm:$0xff]
    %v287 = vld [vmem:[%s4 + $0x2c8] sm:$0xff]
    %v288 = vld [vmem:[%s4 + $0x2d0] sm:$0xff]
    %v289 = vld [vmem:[%s4 + $0x2d8] sm:$0xff]
    %v290 = vld [vmem:[%s4 + $0x2e0] sm:$0xff]
    %v291 = vld [vmem:[%s4 + $0x2e8] sm:$0xff]
    %v292 = vld [vmem:[%s4 + $0x2f0] sm:$0xff]
    %v293 = vld [vmem:[%s4 + $0x2f8] sm:$0xff]
    %v294 = vld [vmem:[%s4 + $0x300] sm:$0xff]
    %v295 = vld [vmem:[%s4 + $0x308] sm:$0xff]
    %v296 = vld [vmem:[%s4 + $0x310] sm:$0xff]
    %v297 = vld [vmem:[%s4 + $0x318] sm:$0xff]
    %v298 = vld [vmem:[%s4 + $0x320] sm:$0xff]
    %v299 = vld [vmem:[%s4 + $0x328] sm:$0xff]
    %v300 = vld [vmem:[%s4 + $0x330] sm:$0xff]
    %v301 = vld [vmem:[%s4 + $0x338] sm:$0xff]
    %v302 = vld [vmem:[%s4 + $0x340] sm:$0xff]
    %v303 = vld [vmem:[%s4 + $0x348] sm:$0xff]
    %v304 = vld [vmem:[%s4 + $0x350] sm:$0xff]
    %v305 = vld [vmem:[%s4 + $0x358] sm:$0xff]
    %v306 = vld [vmem:[%s4 + $0x360] sm:$0xff]
    %v307 = vld [vmem:[%s4 + $0x368] sm:$0xff]
    %v308 = vld [vmem:[%s4 + $0x370] sm:$0xff]
    %v309 = vld [vmem:[%s4 + $0x378] sm:$0xff]
    %v310 = vld [vmem:[%s4 + $0x380] sm:$0xff]
    %v311 = vld [vmem:[%s4 + $0x388] sm:$0xff]
    %v312 = vld [vmem:[%s4 + $0x390] sm:$0xff]
    %v313 = vld [vmem:[%s4 + $0x398] sm:$0xff]
    %v314 = vld [vmem:[%s4 + $0x3a0] sm:$0xff]
    %v315 = vld [vmem:[%s4 + $0x3a8] sm:$0xff]
    %v316 = vld [vmem:[%s4 + $0x3b0] sm:$0xff]
    %v317 = vld [vmem:[%s4 + $0x3b8] sm:$0xff]
    %v318 = vld [vmem:[%s4 + $0x3c0] sm:$0xff]
    %v319 = vld [vmem:[%s4 + $0x3c8] sm:$0xff]
    %v320 = vld [vmem:[%s4 + $0x3d0] sm:$0xff]
    %v321 = vld [vmem:[%s4 + $0x3d8] sm:$0xff]
    %v322 = vld [vmem:[%s4 + $0x3e0] sm:$0xff]
    %v323 = vld [vmem:[%s4 + $0x3e8] sm:$0xff]
    %v324 = vld [vmem:[%s4 + $0x3f0] sm:$0xff]
    %v325 = vld [vmem:[%s4 + $0x3f8] sm:$0xff]
    %v326 = vld [vmem:[%s4 + $0x400] sm:$0xff]
    %v327 = vld [vmem:[%s4 + $0x408] sm:$0xff]
    %v328 = vld [vmem:[%s4 + $0x410] sm:$0xff]
    %v329 = vld [vmem:[%s4 + $0x418] sm:$0xff]
    %v330 = vld [vmem:[%s4 + $0x420] sm:$0xff]
    %v331 = vld [vmem:[%s4 + $0x428] sm:$0xff]
    %v332 = vld [vmem:[%s4 + $0x430] sm:$0xff]
    %v333 = vld [vmem:[%s4 + $0x438] sm:$0xff]
    %v334 = vld [vmem:[%s4 + $0x440] sm:$0xff]
    %v335 = vld [vmem:[%s4 + $0x448] sm:$0xff]
    %v336 = vld [vmem:[%s4 + $0x450] sm:$0xff]
    %v337 = vld [vmem:[%s4 + $0x458] sm:$0xff]
    %v338 = vld [vmem:[%s4 + $0x460] sm:$0xff]
    %v339 = vld [vmem:[%s4 + $0x468] sm:$0xff]
    %v340 = vld [vmem:[%s4 + $0x470] sm:$0xff]
    %v341 = vld [vmem:[%s4 + $0x478] sm:$0xff]
    %v342 = vld [vmem:[%s4 + $0x480] sm:$0xff]
    %v343 = vld [vmem:[%s4 + $0x488] sm:$0xff]
    %v344 = vld [vmem:[%s4 + $0x490] sm:$0xff]
    %v345 = vld [vmem:[%s4 + $0x498] sm:$0xff]
    %v346 = vld [vmem:[%s4 + $0x4a0] sm:$0xff]
    %v347 = vld [vmem:[%s4 + $0x4a8] sm:$0xff]
    %v348 = vld [vmem:[%s4 + $0x4b0] sm:$0xff]
    %v349 = vld [vmem:[%s4 + $0x4b8] sm:$0xff]
    %v350 = vld [vmem:[%s4 + $0x4c0] sm:$0xff]
    %v351 = vld [vmem:[%s4 + $0x4c8] sm:$0xff]
    %v352 = vld [vmem:[%s4 + $0x4d0] sm:$0xff]
    %v353 = vld [vmem:[%s4 + $0x4d8] sm:$0xff]
    %v354 = vld [vmem:[%s4 + $0x4e0] sm:$0xff]
    %v355 = vld [vmem:[%s4 + $0x4e8] sm:$0xff]
    %v356 = vld [vmem:[%s4 + $0x4f0] sm:$0xff]
    %v357 = vld [vmem:[%s4 + $0x4f8] sm:$0xff]
    %v358 = vld [vmem:[%s4 + $0x500] sm:$0xff]
    %v359 = vld [vmem:[%s4 + $0x508] sm:$0xff]
    %v360 = vld [vmem:[%s4 + $0x510] sm:$0xff]
    %v361 = vld [vmem:[%s4 + $0x518] sm:$0xff]
    %v362 = vld [vmem:[%s4 + $0x520] sm:$0xff]
    %v363 = vld [vmem:[%s4 + $0x528] sm:$0xff]
    %v364 = vld [vmem:[%s4 + $0x530] sm:$0xff]
    %v365 = vld [vmem:[%s4 + $0x538] sm:$0xff]
    %v366 = vld [vmem:[%s4 + $0x540] sm:$0xff]
    %v367 = vld [vmem:[%s4 + $0x548] sm:$0xff]
    %v368 = vld [vmem:[%s4 + $0x550] sm:$0xff]
    %v369 = vld [vmem:[%s4 + $0x558] sm:$0xff]
    %v370 = vld [vmem:[%s4 + $0x560] sm:$0xff]
    %v371 = vld [vmem:[%s4 + $0x568] sm:$0xff]
    %v372 = vld [vmem:[%s4 + $0x570] sm:$0xff]
    %v373 = vld [vmem:[%s4 + $0x578] sm:$0xff]
    %v374 = vld [vmem:[%s4 + $0x580] sm:$0xff]
    %v375 = vld [vmem:[%s4 + $0x588] sm:$0xff]
    %v376 = vld [vmem:[%s4 + $0x590] sm:$0xff]
    %v377 = vld [vmem:[%s4 + $0x598] sm:$0xff]
    %v378 = vld [vmem:[%s4 + $0x5a0] sm:$0xff]
    %v379 = vld [vmem:[%s4 + $0x5a8] sm:$0xff]
    %v380 = vld [vmem:[%s4 + $0x5b0] sm:$0xff]
    %v381 = vld [vmem:[%s4 + $0x5b8] sm:$0xff]
    %v382 = vld [vmem:[%s4 + $0x5c0] sm:$0xff]
    %v383 = vld [vmem:[%s4 + $0x5c8] sm:$0xff]
    %v384 = vld [vmem:[%s5] sm:$0x1]
    %v385 = vld [vmem:[%s6] sm:$0xff]
    %v386 = vld [vmem:[%s6 + $0x8] sm:$0xff]
    %v387 = vld [vmem:[%s6 + $0x10] sm:$0xff]
    %v388 = vld [vmem:[%s6 + $0x18] sm:$0xff]
    %v389 = vld [vmem:[%s6 + $0x20] sm:$0xff]
    %v390 = vld [vmem:[%s6 + $0x28] sm:$0xff]
    %v391 = vld [vmem:[%s6 + $0x30] sm:$0xff]
    %v392 = vld [vmem:[%s6 + $0x38] sm:$0xff]
    %v393 = vld [vmem:[%s6 + $0x40] sm:$0xff]
    %v394 = vld [vmem:[%s6 + $0x48] sm:$0xff]
    %v395 = vld [vmem:[%s6 + $0x50] sm:$0xff]
    %v396 = vld [vmem:[%s6 + $0x58] sm:$0xff]
    %v397 = vld [vmem:[%s6 + $0x60] sm:$0xff]
    %v398 = vld [vmem:[%s6 + $0x68] sm:$0xff]
    %v399 = vld [vmem:[%s6 + $0x70] sm:$0xff]
    %v400 = vld [vmem:[%s6 + $0x78] sm:$0xff]
    %v401 = vld [vmem:[%s6 + $0x80] sm:$0xff]
    %v402 = vld [vmem:[%s6 + $0x88] sm:$0xff]
    %v403 = vld [vmem:[%s6 + $0x90] sm:$0xff]
    %v404 = vld [vmem:[%s6 + $0x98] sm:$0xff]
    %v405 = vld [vmem:[%s6 + $0xa0] sm:$0xff]
    %v406 = vld [vmem:[%s6 + $0xa8] sm:$0xff]
    %v407 = vld [vmem:[%s6 + $0xb0] sm:$0xff]
    %v408 = vld [vmem:[%s6 + $0xb8] sm:$0xff]
    %v409 = vld [vmem:[%s6 + $0xc0] sm:$0xff]
    %v410 = vld [vmem:[%s6 + $0xc8] sm:$0xff]
    %v411 = vld [vmem:[%s6 + $0xd0] sm:$0xff]
    %v412 = vld [vmem:[%s6 + $0xd8] sm:$0xff]
    %v413 = vld [vmem:[%s6 + $0xe0] sm:$0xff]
    %v414 = vld [vmem:[%s6 + $0xe8] sm:$0xff]
    %v415 = vld [vmem:[%s6 + $0xf0] sm:$0xff]
    %v416 = vld [vmem:[%s6 + $0xf8] sm:$0xff]
    %v417 = vld [vmem:[%s6 + $0x100] sm:$0xff]
    %v418 = vld [vmem:[%s6 + $0x108] sm:$0xff]
    %v419 = vld [vmem:[%s6 + $0x110] sm:$0xff]
    %v420 = vld [vmem:[%s6 + $0x118] sm:$0xff]
    %v421 = vld [vmem:[%s6 + $0x120] sm:$0xff]
    %v422 = vld [vmem:[%s6 + $0x128] sm:$0xff]
    %v423 = vld [vmem:[%s6 + $0x130] sm:$0xff]
    %v424 = vld [vmem:[%s6 + $0x138] sm:$0xff]
    %v425 = vld [vmem:[%s6 + $0x140] sm:$0xff]
    %v426 = vld [vmem:[%s6 + $0x148] sm:$0xff]
    %v427 = vld [vmem:[%s6 + $0x150] sm:$0xff]
    %v428 = vld [vmem:[%s6 + $0x158] sm:$0xff]
    %v429 = vld [vmem:[%s6 + $0x160] sm:$0xff]
    %v430 = vld [vmem:[%s6 + $0x168] sm:$0xff]
    %v431 = vld [vmem:[%s6 + $0x170] sm:$0xff]
    %v432 = vld [vmem:[%s6 + $0x178] sm:$0xff]
    %v433 = vld [vmem:[%s6 + $0x180] sm:$0xff]
    %v434 = vld [vmem:[%s6 + $0x188] sm:$0xff]
    %v435 = vld [vmem:[%s6 + $0x190] sm:$0xff]
    %v436 = vld [vmem:[%s6 + $0x198] sm:$0xff]
    %v437 = vld [vmem:[%s6 + $0x1a0] sm:$0xff]
    %v438 = vld [vmem:[%s6 + $0x1a8] sm:$0xff]
    %v439 = vld [vmem:[%s6 + $0x1b0] sm:$0xff]
    %v440 = vld [vmem:[%s6 + $0x1b8] sm:$0xff]
    %v441 = vld [vmem:[%s6 + $0x1c0] sm:$0xff]
    %v442 = vld [vmem:[%s6 + $0x1c8] sm:$0xff]
    %v443 = vld [vmem:[%s6 + $0x1d0] sm:$0xff]
    %v444 = vld [vmem:[%s6 + $0x1d8] sm:$0xff]
    %v445 = vld [vmem:[%s6 + $0x1e0] sm:$0xff]
    %v446 = vld [vmem:[%s6 + $0x1e8] sm:$0xff]
    %v447 = vld [vmem:[%s6 + $0x1f0] sm:$0xff]
    %v448 = vld [vmem:[%s6 + $0x1f8] sm:$0xff]
    %v449 = vld [vmem:[%s6 + $0x200] sm:$0xff]
    %v450 = vld [vmem:[%s6 + $0x208] sm:$0xff]
    %v451 = vld [vmem:[%s6 + $0x210] sm:$0xff]
    %v452 = vld [vmem:[%s6 + $0x218] sm:$0xff]
    %v453 = vld [vmem:[%s6 + $0x220] sm:$0xff]
    %v454 = vld [vmem:[%s6 + $0x228] sm:$0xff]
    %v455 = vld [vmem:[%s6 + $0x230] sm:$0xff]
    %v456 = vld [vmem:[%s6 + $0x238] sm:$0xff]
    %v457 = vld [vmem:[%s6 + $0x240] sm:$0xff]
    %v458 = vld [vmem:[%s6 + $0x248] sm:$0xff]
    %v459 = vld [vmem:[%s6 + $0x250] sm:$0xff]
    %v460 = vld [vmem:[%s6 + $0x258] sm:$0xff]
    %v461 = vld [vmem:[%s6 + $0x260] sm:$0xff]
    %v462 = vld [vmem:[%s6 + $0x268] sm:$0xff]
    %v463 = vld [vmem:[%s6 + $0x270] sm:$0xff]
    %v464 = vld [vmem:[%s6 + $0x278] sm:$0xff]
    %v465 = vld [vmem:[%s6 + $0x280] sm:$0xff]
    %v466 = vld [vmem:[%s6 + $0x288] sm:$0xff]
    %v467 = vld [vmem:[%s6 + $0x290] sm:$0xff]
    %v468 = vld [vmem:[%s6 + $0x298] sm:$0xff]
    %v469 = vld [vmem:[%s6 + $0x2a0] sm:$0xff]
    %v470 = vld [vmem:[%s6 + $0x2a8] sm:$0xff]
    %v471 = vld [vmem:[%s6 + $0x2b0] sm:$0xff]
    %v472 = vld [vmem:[%s6 + $0x2b8] sm:$0xff]
    %v473 = vld [vmem:[%s6 + $0x2c0] sm:$0xff]
    %v474 = vld [vmem:[%s6 + $0x2c8] sm:$0xff]
    %v475 = vld [vmem:[%s6 + $0x2d0] sm:$0xff]
    %v476 = vld [vmem:[%s6 + $0x2d8] sm:$0xff]
    %v477 = vld [vmem:[%s6 + $0x2e0] sm:$0xff]
    %v478 = vld [vmem:[%s6 + $0x2e8] sm:$0xff]
    %v479 = vld [vmem:[%s6 + $0x2f0] sm:$0xff]
    %v480 = vld [vmem:[%s6 + $0x2f8] sm:$0xff]
    %v481 = vld [vmem:[%s6 + $0x300] sm:$0xff]
    %v482 = vld [vmem:[%s6 + $0x308] sm:$0xff]
    %v483 = vld [vmem:[%s6 + $0x310] sm:$0xff]
    %v484 = vld [vmem:[%s6 + $0x318] sm:$0xff]
    %v485 = vld [vmem:[%s6 + $0x320] sm:$0xff]
    %v486 = vld [vmem:[%s6 + $0x328] sm:$0xff]
    %v487 = vld [vmem:[%s6 + $0x330] sm:$0xff]
    %v488 = vld [vmem:[%s6 + $0x338] sm:$0xff]
    %v489 = vld [vmem:[%s6 + $0x340] sm:$0xff]
    %v490 = vld [vmem:[%s6 + $0x348] sm:$0xff]
    %v491 = vld [vmem:[%s6 + $0x350] sm:$0xff]
    %v492 = vld [vmem:[%s6 + $0x358] sm:$0xff]
    %v493 = vld [vmem:[%s6 + $0x360] sm:$0xff]
    %v494 = vld [vmem:[%s6 + $0x368] sm:$0xff]
    %v495 = vld [vmem:[%s6 + $0x370] sm:$0xff]
    %v496 = vld [vmem:[%s6 + $0x378] sm:$0xff]
    %v497 = vld [vmem:[%s6 + $0x380] sm:$0xff]
    %v498 = vld [vmem:[%s6 + $0x388] sm:$0xff]
    %v499 = vld [vmem:[%s6 + $0x390] sm:$0xff]
    %v500 = vld [vmem:[%s6 + $0x398] sm:$0xff]
    %v501 = vld [vmem:[%s6 + $0x3a0] sm:$0xff]
    %v502 = vld [vmem:[%s6 + $0x3a8] sm:$0xff]
    %v503 = vld [vmem:[%s6 + $0x3b0] sm:$0xff]
    %v504 = vld [vmem:[%s6 + $0x3b8] sm:$0xff]
    %v505 = vld [vmem:[%s7] sm:$0x1]
    %v506 = vld [vmem:[%s8] sm:$0xff]
    %v507 = vld [vmem:[%s8 + $0x8] sm:$0xff]
    %v508 = vld [vmem:[%s8 + $0x10] sm:$0xff]
    %v509 = vld [vmem:[%s8 + $0x18] sm:$0xff]
    %v510 = vld [vmem:[%s9] sm:$0x1]
    %v511 = vld [vmem:[%s0] sm:$0xff]
    %v512 = vld [vmem:[%s0 + $0x8] sm:$0xff]
    %v513 = vld [vmem:[%s0 + $0x10] sm:$0xff]
    %v514 = vld [vmem:[%s0 + $0x18] sm:$0xff]
    %v515 = vld [vmem:[%s0 + $0x20] sm:$0xff]
    %v516 = vld [vmem:[%s0 + $0x28] sm:$0xff]
    %v517 = vld [vmem:[%s0 + $0x30] sm:$0xff]
    %v518 = vld [vmem:[%s0 + $0x38] sm:$0xff]
    %v519 = vld [vmem:[%s0 + $0x40] sm:$0xff]
    %v520 = vld [vmem:[%s0 + $0x48] sm:$0xff]
    %v521 = vld [vmem:[%s0 + $0x50] sm:$0xff]
    %v522 = vld [vmem:[%s0 + $0x58] sm:$0xff]
    %v523 = vld [vmem:[%s0 + $0x60] sm:$0x3f]
    %vm529 = vcmask 1046528
    %v530 = vrot.slane %v511, 1
    %v531 = vrot.slane %v512, 1
    %v532 = vsel %vm529, %v530, %v531
    %v533 = vrot.slane %v513, 1
    %v534 = vsel %vm529, %v531, %v533
    %v535 = vrot.slane %v514, 1
    %v536 = vsel %vm529, %v533, %v535
    %v537 = vrot.slane %v515, 1
    %v538 = vsel %vm529, %v535, %v537
    %539 = vrot.lane.b32.xlu0 %v532, 32
    %v540 = vpop.permute.xlu0 %539
    %541 = vrot.lane.b32.xlu0 %v534, 32
    %v542 = vpop.permute.xlu0 %541
    %543 = vrot.lane.b32.xlu0 %v536, 32
    %v544 = vpop.permute.xlu0 %543
    %545 = vrot.lane.b32.xlu0 %v538, 32
    %v546 = vpop.permute.xlu0 %545
    %vm551 = vcmask 1045504
    %v552 = vrot.slane %v511, 2
    %v553 = vrot.slane %v512, 2
    %v554 = vsel %vm551, %v552, %v553
    %v555 = vrot.slane %v513, 2
    %v556 = vsel %vm551, %v553, %v555
    %v557 = vrot.slane %v514, 2
    %v558 = vsel %vm551, %v555, %v557
    %v559 = vrot.slane %v515, 2
    %v560 = vsel %vm551, %v557, %v559
    %561 = vrot.lane.b32.xlu0 %v554, 64
    %v562 = vpop.permute.xlu0 %561
    %563 = vrot.lane.b32.xlu0 %v556, 64
    %v564 = vpop.permute.xlu0 %563
    %565 = vrot.lane.b32.xlu0 %v558, 64
    %v566 = vpop.permute.xlu0 %565
    %567 = vrot.lane.b32.xlu0 %v560, 64
    %v568 = vpop.permute.xlu0 %567
    %v577 = vrot.slane %v516, 2
    %v578 = vsel %vm551, %v559, %v577
    %v579 = vrot.slane %v517, 2
    %v580 = vsel %vm551, %v577, %v579
    %v581 = vrot.slane %v518, 2
    %v582 = vsel %vm551, %v579, %v581
    %v583 = vrot.slane %v519, 2
    %v584 = vsel %vm551, %v581, %v583
    %585 = vrot.lane.b32.xlu0 %v578, 96
    %v586 = vpop.permute.xlu0 %585
    %587 = vrot.lane.b32.xlu0 %v580, 96
    %v588 = vpop.permute.xlu0 %587
    %589 = vrot.lane.b32.xlu0 %v582, 96
    %v590 = vpop.permute.xlu0 %589
    %591 = vrot.lane.b32.xlu0 %v584, 96
    %v592 = vpop.permute.xlu0 %591
    %vm597 = vcmask 1044480
    %v598 = vrot.slane %v515, 3
    %v599 = vrot.slane %v516, 3
    %v600 = vsel %vm597, %v598, %v599
    %v601 = vrot.slane %v517, 3
    %v602 = vsel %vm597, %v599, %v601
    %v603 = vrot.slane %v518, 3
    %v604 = vsel %vm597, %v601, %v603
    %v605 = vrot.slane %v519, 3
    %v606 = vsel %vm597, %v603, %v605
    %vm611 = vcmask 1043456
    %v612 = vrot.slane %v515, 4
    %v613 = vrot.slane %v516, 4
    %v614 = vsel %vm611, %v612, %v613
    %v615 = vrot.slane %v517, 4
    %v616 = vsel %vm611, %v613, %v615
    %v617 = vrot.slane %v518, 4
    %v618 = vsel %vm611, %v615, %v617
    %v619 = vrot.slane %v519, 4
    %v620 = vsel %vm611, %v617, %v619
    %621 = vrot.lane.b32.xlu0 %v614, 32
    %v622 = vpop.permute.xlu0 %621
    %623 = vrot.lane.b32.xlu0 %v616, 32
    %v624 = vpop.permute.xlu0 %623
    %625 = vrot.lane.b32.xlu0 %v618, 32
    %v626 = vpop.permute.xlu0 %625
    %627 = vrot.lane.b32.xlu0 %v620, 32
    %v628 = vpop.permute.xlu0 %627
    %v637 = vrot.slane %v520, 4
    %v638 = vsel %vm611, %v619, %v637
    %v639 = vrot.slane %v521, 4
    %v640 = vsel %vm611, %v637, %v639
    %v641 = vrot.slane %v522, 4
    %v642 = vsel %vm611, %v639, %v641
    %v643 = vrot.slane %v523, 4
    %v644 = vsel %vm611, %v641, %v643
    %645 = vrot.lane.b32.xlu0 %v638, 64
    %v646 = vpop.permute.xlu0 %645
    %647 = vrot.lane.b32.xlu0 %v640, 64
    %v648 = vpop.permute.xlu0 %647
    %649 = vrot.lane.b32.xlu0 %v642, 64
    %v650 = vpop.permute.xlu0 %649
    %651 = vrot.lane.b32.xlu0 %v644, 64
    %v652 = vpop.permute.xlu0 %651
    %vm657 = vcmask 1042432
    %v658 = vrot.slane %v519, 5
    %v659 = vrot.slane %v520, 5
    %v660 = vsel %vm657, %v658, %v659
    %v661 = vrot.slane %v521, 5
    %v662 = vsel %vm657, %v659, %v661
    %v663 = vrot.slane %v522, 5
    %v664 = vsel %vm657, %v661, %v663
    %v665 = vrot.slane %v523, 5
    %v666 = vsel %vm657, %v663, %v665
    %667 = vrot.lane.b32.xlu0 %v660, 96
    %v668 = vpop.permute.xlu0 %667
    %669 = vrot.lane.b32.xlu0 %v662, 96
    %v670 = vpop.permute.xlu0 %669
    %671 = vrot.lane.b32.xlu0 %v664, 96
    %v672 = vpop.permute.xlu0 %671
    %673 = vrot.lane.b32.xlu0 %v666, 96
    %v674 = vpop.permute.xlu0 %673
    %vm679 = vcmask 1041408
    %v680 = vrot.slane %v519, 6
    %v681 = vrot.slane %v520, 6
    %v682 = vsel %vm679, %v680, %v681
    %v683 = vrot.slane %v521, 6
    %v684 = vsel %vm679, %v681, %v683
    %v685 = vrot.slane %v522, 6
    %v686 = vsel %vm679, %v683, %v685
    %v687 = vrot.slane %v523, 6
    %v688 = vsel %vm679, %v685, %v687
    %vm689 = vcmask 261120
    %v690 = vsel %vm689, %v511, %v540
    %v691 = vsel %vm689, %v512, %v542
    %v692 = vsel %vm689, %v513, %v544
    %v693 = vsel %vm689, %v514, %v546
    %vm694 = vcmask 523264
    %v695 = vsel %vm694, %v690, %v562
    %v696 = vsel %vm694, %v691, %v564
    %v697 = vsel %vm694, %v692, %v566
    %v698 = vsel %vm694, %v693, %v568
    %vm699 = vcmask 785408
    %v700 = vsel %vm699, %v695, %v586
    %v701 = vsel %vm699, %v696, %v588
    %v702 = vsel %vm699, %v697, %v590
    %v703 = vsel %vm699, %v698, %v592
    %v704 = vsel %vm689, %v600, %v622
    %v705 = vsel %vm689, %v602, %v624
    %v706 = vsel %vm689, %v604, %v626
    %v707 = vsel %vm689, %v606, %v628
    %v708 = vsel %vm694, %v704, %v646
    %v709 = vsel %vm694, %v705, %v648
    %v710 = vsel %vm694, %v706, %v650
    %v711 = vsel %vm694, %v707, %v652
    %v712 = vsel %vm699, %v708, %v668
    %v713 = vsel %vm699, %v709, %v670
    %v714 = vsel %vm699, %v710, %v672
    %v715 = vsel %vm699, %v711, %v674
    %v717 = vlaneseq
    %v718 = vshrl.u32 %v717, 7
    %v719 = vsub.s32 0, %v718
    %v720 = vrot.slane %v194, %v719
    %v721 = vlaneseq
    %v722 = vshrl.u32 %v721, 7
    %v723 = vsub.s32 1, %v722
    %v724 = vrot.slane %v194, %v723
    %v725 = vlaneseq
    %v726 = vshrl.u32 %v725, 7
    %v727 = vsub.s32 2, %v726
    %v728 = vrot.slane %v194, %v727
    %v729 = vlaneseq
    %v730 = vshrl.u32 %v729, 7
    %v731 = vsub.s32 3, %v730
    %v732 = vrot.slane %v194, %v731
    %v737 = vsel %vm689, %v682, 0
    %v739 = vsel %vm689, %v684, 0
    %v741 = vsel %vm689, %v686, 0
    %v743 = vsel %vm689, %v688, 0
    %745 = vmatprep.subr.mxu0 %v111
    %746 = vmatpush1.msra.mxu0 %v110
    %747 = vmatprep.subr.mxu0 %v107
    %748 = vmatpush1.msra.mxu0 %v106
    %749 = vmatprep.subr.mxu0 %v103
    %750 = vmatpush1.msra.mxu0 %v102
    %751 = vmatprep.subr.mxu0 %v99
    %752 = vmatpush1.msra.mxu0 %v98
    %753 = vmatprep.subr.mxu0 %v95
    %754 = vmatpush1.msra.mxu0 %v94
    %755 = vmatprep.subr.mxu0 %v91
    %756 = vmatpush1.msra.mxu0 %v90
    %757 = vmatprep.subr.mxu0 %v87
    %758 = vmatpush1.msra.mxu0 %v86
    %759 = vmatprep.subr.mxu0 %v83
    %760 = vmatpush1.msra.mxu0 %v82
    %761 = vmatprep.subr.mxu0 %v79
    %762 = vmatpush1.msra.mxu0 %v78
    %763 = vmatprep.subr.mxu0 %v75
    %764 = vmatpush1.msra.mxu0 %v74
    %765 = vmatprep.subr.mxu0 %v71
    %766 = vmatpush1.msra.mxu0 %v70
    %767 = vmatprep.subr.mxu0 %v67
    %768 = vmatpush1.msra.mxu0 %v66
    %769 = vmatprep.subr.mxu0 %v63
    %770 = vmatpush1.msra.mxu0 %v62
    %771 = vmatprep.subr.mxu0 %v59
    %772 = vmatpush1.msra.mxu0 %v58
    %773 = vmatprep.subr.mxu0 %v55
    %774 = vmatpush1.msra.mxu0 %v54
    %775 = vmatprep.subr.mxu0 %v51
    %776 = vmatpush1.msra.mxu0 %v50
    %777 = vmatprep.subr.mxu0 %v175
    %778 = vmatpush2.msra.mxu0 %v174
    %779 = vmatprep.subr.mxu0 %v171
    %780 = vmatpush2.msra.mxu0 %v170
    %781 = vmatprep.subr.mxu0 %v167
    %782 = vmatpush2.msra.mxu0 %v166
    %783 = vmatprep.subr.mxu0 %v163
    %784 = vmatpush2.msra.mxu0 %v162
    %785 = vmatprep.subr.mxu0 %v159
    %786 = vmatpush2.msra.mxu0 %v158
    %787 = vmatprep.subr.mxu0 %v155
    %788 = vmatpush2.msra.mxu0 %v154
    %789 = vmatprep.subr.mxu0 %v151
    %790 = vmatpush2.msra.mxu0 %v150
    %791 = vmatprep.subr.mxu0 %v147
    %792 = vmatpush2.msra.mxu0 %v146
    %793 = vmatprep.subr.mxu0 %v143
    %794 = vmatpush2.msra.mxu0 %v142
    %795 = vmatprep.subr.mxu0 %v139
    %796 = vmatpush2.msra.mxu0 %v138
    %797 = vmatprep.subr.mxu0 %v135
    %798 = vmatpush2.msra.mxu0 %v134
    %799 = vmatprep.subr.mxu0 %v131
    %800 = vmatpush2.msra.mxu0 %v130
    %801 = vmatprep.subr.mxu0 %v127
    %802 = vmatpush2.msra.mxu0 %v126
    %803 = vmatprep.subr.mxu0 %v123
    %804 = vmatpush2.msra.mxu0 %v122
    %805 = vmatprep.subr.mxu0 %v119
    %806 = vmatpush2.msra.mxu0 %v118
    %807 = vmatprep.subr.mxu0 %v115
    %808 = vmatpush2.msra.mxu0 %v114
    %809 = vmatprep.mubr.f32.mxu0 %v712
    %810 = vmatmul.mubr.f32.gmra.mxu0 %v700
    %v811 = vpop.f32.mrf.mxu0
    %v812 = vadd.f32 %v720, %v811
    %v813 = vpop.f32.mrf.mxu0
    %v814 = vadd.f32 %v724, %v813
    %815 = vmatprep.mubr.f32.mxu0 %v713
    %816 = vmatmul.mubr.f32.gmra.mxu0 %v701
    %v817 = vpop.f32.mrf.mxu0
    %v818 = vadd.f32 %v720, %v817
    %v819 = vpop.f32.mrf.mxu0
    %v820 = vadd.f32 %v724, %v819
    %821 = vmatprep.mubr.f32.mxu0 %v714
    %822 = vmatmul.mubr.f32.gmra.mxu0 %v702
    %v823 = vpop.f32.mrf.mxu0
    %v824 = vadd.f32 %v720, %v823
    %v825 = vpop.f32.mrf.mxu0
    %v826 = vadd.f32 %v724, %v825
    %827 = vmatprep.mubr.f32.mxu0 %v715
    %828 = vmatmul.mubr.f32.gmra.mxu0 %v703
    %v829 = vpop.f32.mrf.mxu0
    %v830 = vadd.f32 %v720, %v829
    %v831 = vpop.f32.mrf.mxu0
    %v832 = vadd.f32 %v724, %v831
    %833 = vdwg.mxu0
    %834 = vmatprep.subr.mxu0 0.0
    %835 = vmatpush1.msra.mxu0 0.0
    %836 = vmatprep.subr.mxu0 0.0
    %837 = vmatpush1.msra.mxu0 0.0
    %838 = vmatprep.subr.mxu0 0.0
    %839 = vmatpush1.msra.mxu0 0.0
    %840 = vmatprep.subr.mxu0 0.0
    %841 = vmatpush1.msra.mxu0 0.0
    %842 = vmatprep.subr.mxu0 0.0
    %843 = vmatpush1.msra.mxu0 0.0
    %844 = vmatprep.subr.mxu0 0.0
    %845 = vmatpush1.msra.mxu0 0.0
    %846 = vmatprep.subr.mxu0 0.0
    %847 = vmatpush1.msra.mxu0 0.0
    %848 = vmatprep.subr.mxu0 0.0
    %849 = vmatpush1.msra.mxu0 0.0
    %850 = vmatprep.subr.mxu0 0.0
    %851 = vmatpush1.msra.mxu0 0.0
    %852 = vmatprep.subr.mxu0 0.0
    %853 = vmatpush1.msra.mxu0 0.0
    %854 = vmatprep.subr.mxu0 0.0
    %855 = vmatpush1.msra.mxu0 0.0
    %856 = vmatprep.subr.mxu0 0.0
    %857 = vmatpush1.msra.mxu0 0.0
    %858 = vmatprep.subr.mxu0 %v191
    %859 = vmatpush1.msra.mxu0 %v190
    %860 = vmatprep.subr.mxu0 %v187
    %861 = vmatpush1.msra.mxu0 %v186
    %862 = vmatprep.subr.mxu0 %v183
    %863 = vmatpush1.msra.mxu0 %v182
    %864 = vmatprep.subr.mxu0 %v179
    %865 = vmatpush1.msra.mxu0 %v178
    %866 = vmatprep.subr.mxu0 0.0
    %867 = vmatpush2.msra.mxu0 0.0
    %868 = vmatprep.subr.mxu0 0.0
    %869 = vmatpush2.msra.mxu0 0.0
    %870 = vmatprep.subr.mxu0 0.0
    %871 = vmatpush2.msra.mxu0 0.0
    %872 = vmatprep.subr.mxu0 0.0
    %873 = vmatpush2.msra.mxu0 0.0
    %874 = vmatprep.subr.mxu0 0.0
    %875 = vmatpush2.msra.mxu0 0.0
    %876 = vmatprep.subr.mxu0 0.0
    %877 = vmatpush2.msra.mxu0 0.0
    %878 = vmatprep.subr.mxu0 0.0
    %879 = vmatpush2.msra.mxu0 0.0
    %880 = vmatprep.subr.mxu0 0.0
    %881 = vmatpush2.msra.mxu0 0.0
    %882 = vmatprep.subr.mxu0 0.0
    %883 = vmatpush2.msra.mxu0 0.0
    %884 = vmatprep.subr.mxu0 0.0
    %885 = vmatpush2.msra.mxu0 0.0
    %886 = vmatprep.subr.mxu0 0.0
    %887 = vmatpush2.msra.mxu0 0.0
    %888 = vmatprep.subr.mxu0 0.0
    %889 = vmatpush2.msra.mxu0 0.0
    %890 = vmatprep.subr.mxu0 0.0
    %891 = vmatpush2.msra.mxu0 0.0
    %892 = vmatprep.subr.mxu0 0.0
    %893 = vmatpush2.msra.mxu0 0.0
    %894 = vmatprep.subr.mxu0 0.0
    %895 = vmatpush2.msra.mxu0 0.0
    %896 = vmatprep.subr.mxu0 0.0
    %897 = vmatpush2.msra.mxu0 0.0
    %898 = vmatprep.mubr.f32.mxu0 0.0
    %899 = vmatmul.mubr.f32.gmra.mxu0 %v737
    %v900 = vpop.f32.mrf.mxu0
    %v901 = vadd.f32 %v812, %v900
    %v902 = vpop.f32.mrf.mxu0
    %v903 = vadd.f32 %v814, %v902
    %904 = vmatprep.mubr.f32.mxu0 0.0
    %905 = vmatmul.mubr.f32.gmra.mxu0 %v739
    %v906 = vpop.f32.mrf.mxu0
    %v907 = vadd.f32 %v818, %v906
    %v908 = vpop.f32.mrf.mxu0
    %v909 = vadd.f32 %v820, %v908
    %910 = vmatprep.mubr.f32.mxu0 0.0
    %911 = vmatmul.mubr.f32.gmra.mxu0 %v741
    %v912 = vpop.f32.mrf.mxu0
    %v913 = vadd.f32 %v824, %v912
    %v914 = vpop.f32.mrf.mxu0
    %v915 = vadd.f32 %v826, %v914
    %916 = vmatprep.mubr.f32.mxu0 0.0
    %917 = vmatmul.mubr.f32.gmra.mxu0 %v743
    %v918 = vpop.f32.mrf.mxu0
    %v919 = vadd.f32 %v830, %v918
    %v920 = vpop.f32.mrf.mxu0
    %v921 = vadd.f32 %v832, %v920
    %922 = vdwg.mxu0
    %923 = vmatprep.subr.mxu0 %v113
    %924 = vmatpush1.msra.mxu0 %v112
    %925 = vmatprep.subr.mxu0 %v109
    %926 = vmatpush1.msra.mxu0 %v108
    %927 = vmatprep.subr.mxu0 %v105
    %928 = vmatpush1.msra.mxu0 %v104
    %929 = vmatprep.subr.mxu0 %v101
    %930 = vmatpush1.msra.mxu0 %v100
    %931 = vmatprep.subr.mxu0 %v97
    %932 = vmatpush1.msra.mxu0 %v96
    %933 = vmatprep.subr.mxu0 %v93
    %934 = vmatpush1.msra.mxu0 %v92
    %935 = vmatprep.subr.mxu0 %v89
    %936 = vmatpush1.msra.mxu0 %v88
    %937 = vmatprep.subr.mxu0 %v85
    %938 = vmatpush1.msra.mxu0 %v84
    %939 = vmatprep.subr.mxu0 %v81
    %940 = vmatpush1.msra.mxu0 %v80
    %941 = vmatprep.subr.mxu0 %v77
    %942 = vmatpush1.msra.mxu0 %v76
    %943 = vmatprep.subr.mxu0 %v73
    %944 = vmatpush1.msra.mxu0 %v72
    %945 = vmatprep.subr.mxu0 %v69
    %946 = vmatpush1.msra.mxu0 %v68
    %947 = vmatprep.subr.mxu0 %v65
    %948 = vmatpush1.msra.mxu0 %v64
    %949 = vmatprep.subr.mxu0 %v61
    %950 = vmatpush1.msra.mxu0 %v60
    %951 = vmatprep.subr.mxu0 %v57
    %952 = vmatpush1.msra.mxu0 %v56
    %953 = vmatprep.subr.mxu0 %v53
    %954 = vmatpush1.msra.mxu0 %v52
    %955 = vmatprep.subr.mxu0 %v177
    %956 = vmatpush2.msra.mxu0 %v176
    %957 = vmatprep.subr.mxu0 %v173
    %958 = vmatpush2.msra.mxu0 %v172
    %959 = vmatprep.subr.mxu0 %v169
    %960 = vmatpush2.msra.mxu0 %v168
    %961 = vmatprep.subr.mxu0 %v165
    %962 = vmatpush2.msra.mxu0 %v164
    %963 = vmatprep.subr.mxu0 %v161
    %964 = vmatpush2.msra.mxu0 %v160
    %965 = vmatprep.subr.mxu0 %v157
    %966 = vmatpush2.msra.mxu0 %v156
    %967 = vmatprep.subr.mxu0 %v153
    %968 = vmatpush2.msra.mxu0 %v152
    %969 = vmatprep.subr.mxu0 %v149
    %970 = vmatpush2.msra.mxu0 %v148
    %971 = vmatprep.subr.mxu0 %v145
    %972 = vmatpush2.msra.mxu0 %v144
    %973 = vmatprep.subr.mxu0 %v141
    %974 = vmatpush2.msra.mxu0 %v140
    %975 = vmatprep.subr.mxu0 %v137
    %976 = vmatpush2.msra.mxu0 %v136
    %977 = vmatprep.subr.mxu0 %v133
    %978 = vmatpush2.msra.mxu0 %v132
    %979 = vmatprep.subr.mxu0 %v129
    %980 = vmatpush2.msra.mxu0 %v128
    %981 = vmatprep.subr.mxu0 %v125
    %982 = vmatpush2.msra.mxu0 %v124
    %983 = vmatprep.subr.mxu0 %v121
    %984 = vmatpush2.msra.mxu0 %v120
    %985 = vmatprep.subr.mxu0 %v117
    %986 = vmatpush2.msra.mxu0 %v116
    %987 = vmatprep.mubr.f32.mxu0 %v712
    %988 = vmatmul.mubr.f32.gmra.mxu0 %v700
    %v989 = vpop.f32.mrf.mxu0
    %v990 = vadd.f32 %v728, %v989
    %v991 = vpop.f32.mrf.mxu0
    %v992 = vadd.f32 %v732, %v991
    %993 = vmatprep.mubr.f32.mxu0 %v713
    %994 = vmatmul.mubr.f32.gmra.mxu0 %v701
    %v995 = vpop.f32.mrf.mxu0
    %v996 = vadd.f32 %v728, %v995
    %v997 = vpop.f32.mrf.mxu0
    %v998 = vadd.f32 %v732, %v997
    %999 = vmatprep.mubr.f32.mxu0 %v714
    %1000 = vmatmul.mubr.f32.gmra.mxu0 %v702
    %v1001 = vpop.f32.mrf.mxu0
    %v1002 = vadd.f32 %v728, %v1001
    %v1003 = vpop.f32.mrf.mxu0
    %v1004 = vadd.f32 %v732, %v1003
    %1005 = vmatprep.mubr.f32.mxu0 %v715
    %1006 = vmatmul.mubr.f32.gmra.mxu0 %v703
    %v1007 = vpop.f32.mrf.mxu0
    %v1008 = vadd.f32 %v728, %v1007
    %v1009 = vpop.f32.mrf.mxu0
    %v1010 = vadd.f32 %v732, %v1009
    %1011 = vdwg.mxu0
    %1012 = vmatprep.subr.mxu0 0.0
    %1013 = vmatpush1.msra.mxu0 0.0
    %1014 = vmatprep.subr.mxu0 0.0
    %1015 = vmatpush1.msra.mxu0 0.0
    %1016 = vmatprep.subr.mxu0 0.0
    %1017 = vmatpush1.msra.mxu0 0.0
    %1018 = vmatprep.subr.mxu0 0.0
    %1019 = vmatpush1.msra.mxu0 0.0
    %1020 = vmatprep.subr.mxu0 0.0
    %1021 = vmatpush1.msra.mxu0 0.0
    %1022 = vmatprep.subr.mxu0 0.0
    %1023 = vmatpush1.msra.mxu0 0.0
    %1024 = vmatprep.subr.mxu0 0.0
    %1025 = vmatpush1.msra.mxu0 0.0
    %1026 = vmatprep.subr.mxu0 0.0
    %1027 = vmatpush1.msra.mxu0 0.0
    %1028 = vmatprep.subr.mxu0 0.0
    %1029 = vmatpush1.msra.mxu0 0.0
    %1030 = vmatprep.subr.mxu0 0.0
    %1031 = vmatpush1.msra.mxu0 0.0
    %1032 = vmatprep.subr.mxu0 0.0
    %1033 = vmatpush1.msra.mxu0 0.0
    %1034 = vmatprep.subr.mxu0 0.0
    %1035 = vmatpush1.msra.mxu0 0.0
    %1036 = vmatprep.subr.mxu0 %v193
    %1037 = vmatpush1.msra.mxu0 %v192
    %1038 = vmatprep.subr.mxu0 %v189
    %1039 = vmatpush1.msra.mxu0 %v188
    %1040 = vmatprep.subr.mxu0 %v185
    %1041 = vmatpush1.msra.mxu0 %v184
    %1042 = vmatprep.subr.mxu0 %v181
    %1043 = vmatpush1.msra.mxu0 %v180
    %1044 = vmatprep.subr.mxu0 0.0
    %1045 = vmatpush2.msra.mxu0 0.0
    %1046 = vmatprep.subr.mxu0 0.0
    %1047 = vmatpush2.msra.mxu0 0.0
    %1048 = vmatprep.subr.mxu0 0.0
    %1049 = vmatpush2.msra.mxu0 0.0
    %1050 = vmatprep.subr.mxu0 0.0
    %1051 = vmatpush2.msra.mxu0 0.0
    %1052 = vmatprep.subr.mxu0 0.0
    %1053 = vmatpush2.msra.mxu0 0.0
    %1054 = vmatprep.subr.mxu0 0.0
    %1055 = vmatpush2.msra.mxu0 0.0
    %1056 = vmatprep.subr.mxu0 0.0
    %1057 = vmatpush2.msra.mxu0 0.0
    %1058 = vmatprep.subr.mxu0 0.0
    %1059 = vmatpush2.msra.mxu0 0.0
    %1060 = vmatprep.subr.mxu0 0.0
    %1061 = vmatpush2.msra.mxu0 0.0
    %1062 = vmatprep.subr.mxu0 0.0
    %1063 = vmatpush2.msra.mxu0 0.0
    %1064 = vmatprep.subr.mxu0 0.0
    %1065 = vmatpush2.msra.mxu0 0.0
    %1066 = vmatprep.subr.mxu0 0.0
    %1067 = vmatpush2.msra.mxu0 0.0
    %1068 = vmatprep.subr.mxu0 0.0
    %1069 = vmatpush2.msra.mxu0 0.0
    %1070 = vmatprep.subr.mxu0 0.0
    %1071 = vmatpush2.msra.mxu0 0.0
    %1072 = vmatprep.subr.mxu0 0.0
    %1073 = vmatpush2.msra.mxu0 0.0
    %1074 = vmatprep.subr.mxu0 0.0
    %1075 = vmatpush2.msra.mxu0 0.0
    %1076 = vmatprep.mubr.f32.mxu0 0.0
    %1077 = vmatmul.mubr.f32.gmra.mxu0 %v737
    %v1078 = vpop.f32.mrf.mxu0
    %v1079 = vadd.f32 %v990, %v1078
    %v1080 = vpop.f32.mrf.mxu0
    %v1081 = vadd.f32 %v992, %v1080
    %1082 = vmatprep.mubr.f32.mxu0 0.0
    %1083 = vmatmul.mubr.f32.gmra.mxu0 %v739
    %v1084 = vpop.f32.mrf.mxu0
    %v1085 = vadd.f32 %v996, %v1084
    %v1086 = vpop.f32.mrf.mxu0
    %v1087 = vadd.f32 %v998, %v1086
    %1088 = vmatprep.mubr.f32.mxu0 0.0
    %1089 = vmatmul.mubr.f32.gmra.mxu0 %v741
    %v1090 = vpop.f32.mrf.mxu0
    %v1091 = vadd.f32 %v1002, %v1090
    %v1092 = vpop.f32.mrf.mxu0
    %v1093 = vadd.f32 %v1004, %v1092
    %1094 = vmatprep.mubr.f32.mxu0 0.0
    %1095 = vmatmul.mubr.f32.gmra.mxu0 %v743
    %v1096 = vpop.f32.mrf.mxu0
    %v1097 = vadd.f32 %v1008, %v1096
    %v1098 = vpop.f32.mrf.mxu0
    %v1099 = vadd.f32 %v1010, %v1098
    %1100 = vdwg.mxu0
    %v1101 = vtanh.pop %v901
    %v1102 = vtanh.pop %v903
    %v1103 = vtanh.pop %v1079
    %v1104 = vtanh.pop %v1081
    %v1105 = vtanh.pop %v907
    %v1106 = vtanh.pop %v909
    %v1107 = vtanh.pop %v1085
    %v1108 = vtanh.pop %v1087
    %v1109 = vtanh.pop %v913
    %v1110 = vtanh.pop %v915
    %v1111 = vtanh.pop %v1091
    %v1112 = vtanh.pop %v1093
    %v1113 = vtanh.pop %v919
    %v1114 = vtanh.pop %v921
    %v1115 = vtanh.pop %v1097
    %v1116 = vtanh.pop %v1099
    %1133 = vrot.lane.b32.xlu0 %v1101, 112
    %v1134 = vpop.permute.xlu0 %1133
    %1135 = vrot.lane.b32.xlu0 %v1102, 112
    %v1136 = vpop.permute.xlu0 %1135
    %1137 = vrot.lane.b32.xlu0 %v1103, 112
    %v1138 = vpop.permute.xlu0 %1137
    %1139 = vrot.lane.b32.xlu0 %v1104, 112
    %v1140 = vpop.permute.xlu0 %1139
    %1141 = vrot.lane.b32.xlu0 %v1105, 112
    %v1142 = vpop.permute.xlu0 %1141
    %1143 = vrot.lane.b32.xlu0 %v1106, 112
    %v1144 = vpop.permute.xlu0 %1143
    %1145 = vrot.lane.b32.xlu0 %v1107, 112
    %v1146 = vpop.permute.xlu0 %1145
    %1147 = vrot.lane.b32.xlu0 %v1108, 112
    %v1148 = vpop.permute.xlu0 %1147
    %1149 = vrot.lane.b32.xlu0 %v1109, 112
    %v1150 = vpop.permute.xlu0 %1149
    %1151 = vrot.lane.b32.xlu0 %v1110, 112
    %v1152 = vpop.permute.xlu0 %1151
    %1153 = vrot.lane.b32.xlu0 %v1111, 112
    %v1154 = vpop.permute.xlu0 %1153
    %1155 = vrot.lane.b32.xlu0 %v1112, 112
    %v1156 = vpop.permute.xlu0 %1155
    %1157 = vrot.lane.b32.xlu0 %v1113, 112
    %v1158 = vpop.permute.xlu0 %1157
    %1159 = vrot.lane.b32.xlu0 %v1114, 112
    %v1160 = vpop.permute.xlu0 %1159
    %1161 = vrot.lane.b32.xlu0 %v1115, 112
    %v1162 = vpop.permute.xlu0 %1161
    %1163 = vrot.lane.b32.xlu0 %v1116, 112
    %v1164 = vpop.permute.xlu0 %1163
    %vm1165 = vcmask 916480
    %v1166 = vsel %vm1165, %v1134, %v1136
    %v1167 = vsel %vm1165, %v1136, %v1138
    %v1168 = vsel %vm1165, %v1138, %v1140
    %v1169 = vsel %vm1165, %v1142, %v1144
    %v1170 = vsel %vm1165, %v1144, %v1146
    %v1171 = vsel %vm1165, %v1146, %v1148
    %v1172 = vsel %vm1165, %v1150, %v1152
    %v1173 = vsel %vm1165, %v1152, %v1154
    %v1174 = vsel %vm1165, %v1154, %v1156
    %v1175 = vsel %vm1165, %v1158, %v1160
    %v1176 = vsel %vm1165, %v1160, %v1162
    %v1177 = vsel %vm1165, %v1162, %v1164
    %v1194 = vmax.f32 %v1101, %v1166
    %v1195 = vmax.f32 %v1102, %v1167
    %v1196 = vmax.f32 %v1103, %v1168
    %v1197 = vmax.f32 %v1104, %v1140
    %v1198 = vmax.f32 %v1105, %v1169
    %v1199 = vmax.f32 %v1106, %v1170
    %v1200 = vmax.f32 %v1107, %v1171
    %v1201 = vmax.f32 %v1108, %v1148
    %v1202 = vmax.f32 %v1109, %v1172
    %v1203 = vmax.f32 %v1110, %v1173
    %v1204 = vmax.f32 %v1111, %v1174
    %v1205 = vmax.f32 %v1112, %v1156
    %v1206 = vmax.f32 %v1113, %v1175
    %v1207 = vmax.f32 %v1114, %v1176
    %v1208 = vmax.f32 %v1115, %v1177
    %v1209 = vmax.f32 %v1116, %v1164
    %v1226 = vrot.slane %v1194, 1
    %v1227 = vrot.slane %v1198, 1
    %v1228 = vsel %vm529, %v1226, %v1227
    %v1229 = vrot.slane %v1195, 1
    %v1230 = vrot.slane %v1199, 1
    %v1231 = vsel %vm529, %v1229, %v1230
    %v1232 = vrot.slane %v1196, 1
    %v1233 = vrot.slane %v1200, 1
    %v1234 = vsel %vm529, %v1232, %v1233
    %v1235 = vrot.slane %v1197, 1
    %v1236 = vrot.slane %v1201, 1
    %v1237 = vsel %vm529, %v1235, %v1236
    %v1238 = vrot.slane %v1202, 1
    %v1239 = vsel %vm529, %v1227, %v1238
    %v1240 = vrot.slane %v1203, 1
    %v1241 = vsel %vm529, %v1230, %v1240
    %v1242 = vrot.slane %v1204, 1
    %v1243 = vsel %vm529, %v1233, %v1242
    %v1244 = vrot.slane %v1205, 1
    %v1245 = vsel %vm529, %v1236, %v1244
    %v1246 = vrot.slane %v1206, 1
    %v1247 = vsel %vm529, %v1238, %v1246
    %v1248 = vrot.slane %v1207, 1
    %v1249 = vsel %vm529, %v1240, %v1248
    %v1250 = vrot.slane %v1208, 1
    %v1251 = vsel %vm529, %v1242, %v1250
    %v1252 = vrot.slane %v1209, 1
    %v1253 = vsel %vm529, %v1244, %v1252
    %v1270 = vmax.f32 %v1194, %v1228
    %v1271 = vmax.f32 %v1195, %v1231
    %v1272 = vmax.f32 %v1196, %v1234
    %v1273 = vmax.f32 %v1197, %v1237
    %v1274 = vmax.f32 %v1198, %v1239
    %v1275 = vmax.f32 %v1199, %v1241
    %v1276 = vmax.f32 %v1200, %v1243
    %v1277 = vmax.f32 %v1201, %v1245
    %v1278 = vmax.f32 %v1202, %v1247
    %v1279 = vmax.f32 %v1203, %v1249
    %v1280 = vmax.f32 %v1204, %v1251
    %v1281 = vmax.f32 %v1205, %v1253
    %v1282 = vmax.f32 %v1206, %v1246
    %v1283 = vmax.f32 %v1207, %v1248
    %v1284 = vmax.f32 %v1208, %v1250
    %v1285 = vmax.f32 %v1209, %v1252
    %vm1286 = vcmask 252928
    %v1288 = vsel %vm1286, %v195, 0
    %v1291 = vsel %vm1286, %v196, 0
    %v1294 = vsel %vm1286, %v197, 0
    %v1297 = vsel %vm529, %v1282, 0
    %v1300 = vsel %vm529, %v1283, 0
    %v1303 = vsel %vm529, %v1284, 0
    %v1306 = vsel %vm529, %v1285, 0
    %1308 = vmatprep.subr.mxu0 0.0
    %1309 = vmatpush1.msra.mxu0 0.0
    %1310 = vmatprep.subr.mxu0 0.0
    %1311 = vmatpush1.msra.mxu0 0.0
    %1312 = vmatprep.subr.mxu0 0.0
    %1313 = vmatpush1.msra.mxu0 0.0
    %1314 = vmatprep.subr.mxu0 0.0
    %1315 = vmatpush1.msra.mxu0 0.0
    %1316 = vmatprep.subr.mxu0 0.0
    %1317 = vmatpush1.msra.mxu0 0.0
    %1318 = vmatprep.subr.mxu0 0.0
    %1319 = vmatpush1.msra.mxu0 0.0
    %1320 = vmatprep.subr.mxu0 0.0
    %1321 = vmatpush1.msra.mxu0 0.0
    %1322 = vmatprep.subr.mxu0 0.0
    %1323 = vmatpush1.msra.mxu0 0.0
    %1324 = vmatprep.subr.mxu0 0.0
    %1325 = vmatpush1.msra.mxu0 0.0
    %1326 = vmatprep.subr.mxu0 0.0
    %1327 = vmatpush1.msra.mxu0 0.0
    %1328 = vmatprep.subr.mxu0 0.0
    %1329 = vmatpush1.msra.mxu0 0.0
    %1330 = vmatprep.subr.mxu0 0.0
    %1331 = vmatpush1.msra.mxu0 0.0
    %1332 = vmatprep.subr.mxu0 %v1300
    %1333 = vmatpush1.msra.mxu0 %v1297
    %1334 = vmatprep.subr.mxu0 %v1279
    %1335 = vmatpush1.msra.mxu0 %v1278
    %1336 = vmatprep.subr.mxu0 %v1275
    %1337 = vmatpush1.msra.mxu0 %v1274
    %1338 = vmatprep.subr.mxu0 %v1271
    %1339 = vmatpush1.msra.mxu0 %v1270
    %1340 = vmatprep.subr.mxu0 0.0
    %1341 = vmatpush2.msra.mxu0 0.0
    %1342 = vmatprep.subr.mxu0 0.0
    %1343 = vmatpush2.msra.mxu0 0.0
    %1344 = vmatprep.subr.mxu0 0.0
    %1345 = vmatpush2.msra.mxu0 0.0
    %1346 = vmatprep.subr.mxu0 0.0
    %1347 = vmatpush2.msra.mxu0 0.0
    %1348 = vmatprep.subr.mxu0 0.0
    %1349 = vmatpush2.msra.mxu0 0.0
    %1350 = vmatprep.subr.mxu0 0.0
    %1351 = vmatpush2.msra.mxu0 0.0
    %1352 = vmatprep.subr.mxu0 0.0
    %1353 = vmatpush2.msra.mxu0 0.0
    %1354 = vmatprep.subr.mxu0 0.0
    %1355 = vmatpush2.msra.mxu0 0.0
    %1356 = vmatprep.subr.mxu0 0.0
    %1357 = vmatpush2.msra.mxu0 0.0
    %1358 = vmatprep.subr.mxu0 0.0
    %1359 = vmatpush2.msra.mxu0 0.0
    %1360 = vmatprep.subr.mxu0 0.0
    %1361 = vmatpush2.msra.mxu0 0.0
    %1362 = vmatprep.subr.mxu0 0.0
    %1363 = vmatpush2.msra.mxu0 0.0
    %1364 = vmatprep.subr.mxu0 0.0
    %1365 = vmatpush2.msra.mxu0 0.0
    %1366 = vmatprep.subr.mxu0 0.0
    %1367 = vmatpush2.msra.mxu0 0.0
    %1368 = vmatprep.subr.mxu0 0.0
    %1369 = vmatpush2.msra.mxu0 0.0
    %1370 = vmatprep.subr.mxu0 0.0
    %1371 = vmatpush2.msra.mxu0 0.0
    %1372 = vmatprep.mubr.f32.mxu0 0.0
    %1373 = vmatmul.mubr.f32.gmra.mxu0 %v1288
    %v1374 = vpop.f32.mrf.mxu0
    %v1375 = vadd.f32 0.0, %v1374
    %v1376 = vpop.f32.mrf.mxu0
    %v1377 = vadd.f32 0.0, %v1376
    %1378 = vmatprep.mubr.f32.mxu0 0.0
    %1379 = vmatmul.mubr.f32.gmra.mxu0 %v1291
    %v1380 = vpop.f32.mrf.mxu0
    %v1381 = vadd.f32 0.0, %v1380
    %v1382 = vpop.f32.mrf.mxu0
    %v1383 = vadd.f32 0.0, %v1382
    %1384 = vmatprep.mubr.f32.mxu0 0.0
    %1385 = vmatmul.mubr.f32.gmra.mxu0 %v1294
    %v1386 = vpop.f32.mrf.mxu0
    %v1387 = vadd.f32 0.0, %v1386
    %v1388 = vpop.f32.mrf.mxu0
    %v1389 = vadd.f32 0.0, %v1388
    %1390 = vdwg.mxu0
    %1391 = vmatprep.subr.mxu0 0.0
    %1392 = vmatpush1.msra.mxu0 0.0
    %1393 = vmatprep.subr.mxu0 0.0
    %1394 = vmatpush1.msra.mxu0 0.0
    %1395 = vmatprep.subr.mxu0 0.0
    %1396 = vmatpush1.msra.mxu0 0.0
    %1397 = vmatprep.subr.mxu0 0.0
    %1398 = vmatpush1.msra.mxu0 0.0
    %1399 = vmatprep.subr.mxu0 0.0
    %1400 = vmatpush1.msra.mxu0 0.0
    %1401 = vmatprep.subr.mxu0 0.0
    %1402 = vmatpush1.msra.mxu0 0.0
    %1403 = vmatprep.subr.mxu0 0.0
    %1404 = vmatpush1.msra.mxu0 0.0
    %1405 = vmatprep.subr.mxu0 0.0
    %1406 = vmatpush1.msra.mxu0 0.0
    %1407 = vmatprep.subr.mxu0 0.0
    %1408 = vmatpush1.msra.mxu0 0.0
    %1409 = vmatprep.subr.mxu0 0.0
    %1410 = vmatpush1.msra.mxu0 0.0
    %1411 = vmatprep.subr.mxu0 0.0
    %1412 = vmatpush1.msra.mxu0 0.0
    %1413 = vmatprep.subr.mxu0 0.0
    %1414 = vmatpush1.msra.mxu0 0.0
    %1415 = vmatprep.subr.mxu0 %v1306
    %1416 = vmatpush1.msra.mxu0 %v1303
    %1417 = vmatprep.subr.mxu0 %v1281
    %1418 = vmatpush1.msra.mxu0 %v1280
    %1419 = vmatprep.subr.mxu0 %v1277
    %1420 = vmatpush1.msra.mxu0 %v1276
    %1421 = vmatprep.subr.mxu0 %v1273
    %1422 = vmatpush1.msra.mxu0 %v1272
    %1423 = vmatprep.subr.mxu0 0.0
    %1424 = vmatpush2.msra.mxu0 0.0
    %1425 = vmatprep.subr.mxu0 0.0
    %1426 = vmatpush2.msra.mxu0 0.0
    %1427 = vmatprep.subr.mxu0 0.0
    %1428 = vmatpush2.msra.mxu0 0.0
    %1429 = vmatprep.subr.mxu0 0.0
    %1430 = vmatpush2.msra.mxu0 0.0
    %1431 = vmatprep.subr.mxu0 0.0
    %1432 = vmatpush2.msra.mxu0 0.0
    %1433 = vmatprep.subr.mxu0 0.0
    %1434 = vmatpush2.msra.mxu0 0.0
    %1435 = vmatprep.subr.mxu0 0.0
    %1436 = vmatpush2.msra.mxu0 0.0
    %1437 = vmatprep.subr.mxu0 0.0
    %1438 = vmatpush2.msra.mxu0 0.0
    %1439 = vmatprep.subr.mxu0 0.0
    %1440 = vmatpush2.msra.mxu0 0.0
    %1441 = vmatprep.subr.mxu0 0.0
    %1442 = vmatpush2.msra.mxu0 0.0
    %1443 = vmatprep.subr.mxu0 0.0
    %1444 = vmatpush2.msra.mxu0 0.0
    %1445 = vmatprep.subr.mxu0 0.0
    %1446 = vmatpush2.msra.mxu0 0.0
    %1447 = vmatprep.subr.mxu0 0.0
    %1448 = vmatpush2.msra.mxu0 0.0
    %1449 = vmatprep.subr.mxu0 0.0
    %1450 = vmatpush2.msra.mxu0 0.0
    %1451 = vmatprep.subr.mxu0 0.0
    %1452 = vmatpush2.msra.mxu0 0.0
    %1453 = vmatprep.subr.mxu0 0.0
    %1454 = vmatpush2.msra.mxu0 0.0
    %1455 = vmatprep.mubr.f32.mxu0 0.0
    %1456 = vmatmul.mubr.f32.gmra.mxu0 %v1288
    %v1457 = vpop.f32.mrf.mxu0
    %v1458 = vadd.f32 0.0, %v1457
    %v1459 = vpop.f32.mrf.mxu0
    %v1460 = vadd.f32 0.0, %v1459
    %1461 = vmatprep.mubr.f32.mxu0 0.0
    %1462 = vmatmul.mubr.f32.gmra.mxu0 %v1291
    %v1463 = vpop.f32.mrf.mxu0
    %v1464 = vadd.f32 0.0, %v1463
    %v1465 = vpop.f32.mrf.mxu0
    %v1466 = vadd.f32 0.0, %v1465
    %1467 = vmatprep.mubr.f32.mxu0 0.0
    %1468 = vmatmul.mubr.f32.gmra.mxu0 %v1294
    %v1469 = vpop.f32.mrf.mxu0
    %v1470 = vadd.f32 0.0, %v1469
    %v1471 = vpop.f32.mrf.mxu0
    %v1472 = vadd.f32 0.0, %v1471
    %1473 = vdwg.mxu0
    %v1486 = vrot.slane %v1375, 1
    %v1487 = vrot.slane %v1381, 1
    %v1488 = vsel %vm529, %v1486, %v1487
    %v1489 = vrot.slane %v1377, 1
    %v1490 = vrot.slane %v1383, 1
    %v1491 = vsel %vm529, %v1489, %v1490
    %v1492 = vrot.slane %v1458, 1
    %v1493 = vrot.slane %v1464, 1
    %v1494 = vsel %vm529, %v1492, %v1493
    %v1495 = vrot.slane %v1460, 1
    %v1496 = vrot.slane %v1466, 1
    %v1497 = vsel %vm529, %v1495, %v1496
    %v1498 = vrot.slane %v1387, 1
    %v1499 = vsel %vm529, %v1487, %v1498
    %v1500 = vrot.slane %v1389, 1
    %v1501 = vsel %vm529, %v1490, %v1500
    %v1502 = vrot.slane %v1470, 1
    %v1503 = vsel %vm529, %v1493, %v1502
    %v1504 = vrot.slane %v1472, 1
    %v1505 = vsel %vm529, %v1496, %v1504
    %1506 = vrot.lane.b32.xlu0 %v1488, 112
    %v1507 = vpop.permute.xlu0 %1506
    %1508 = vrot.lane.b32.xlu0 %v1491, 112
    %v1509 = vpop.permute.xlu0 %1508
    %1510 = vrot.lane.b32.xlu0 %v1494, 112
    %v1511 = vpop.permute.xlu0 %1510
    %1512 = vrot.lane.b32.xlu0 %v1497, 112
    %v1513 = vpop.permute.xlu0 %1512
    %1514 = vrot.lane.b32.xlu0 %v1499, 112
    %v1515 = vpop.permute.xlu0 %1514
    %1516 = vrot.lane.b32.xlu0 %v1501, 112
    %v1517 = vpop.permute.xlu0 %1516
    %1518 = vrot.lane.b32.xlu0 %v1503, 112
    %v1519 = vpop.permute.xlu0 %1518
    %1520 = vrot.lane.b32.xlu0 %v1505, 112
    %v1521 = vpop.permute.xlu0 %1520
    %v1522 = vsel %vm1165, %v1507, %v1509
    %v1523 = vsel %vm1165, %v1509, %v1511
    %v1524 = vsel %vm1165, %v1511, %v1513
    %v1525 = vsel %vm1165, %v1515, %v1517
    %v1526 = vsel %vm1165, %v1517, %v1519
    %v1527 = vsel %vm1165, %v1519, %v1521
    %v1538 = vrot.slane %v1375, 2
    %v1539 = vrot.slane %v1381, 2
    %v1540 = vsel %vm551, %v1538, %v1539
    %v1541 = vrot.slane %v1377, 2
    %v1542 = vrot.slane %v1383, 2
    %v1543 = vsel %vm551, %v1541, %v1542
    %v1544 = vrot.slane %v1458, 2
    %v1545 = vrot.slane %v1464, 2
    %v1546 = vsel %vm551, %v1544, %v1545
    %v1547 = vrot.slane %v1460, 2
    %v1548 = vrot.slane %v1466, 2
    %v1549 = vsel %vm551, %v1547, %v1548
    %v1550 = vrot.slane %v1387, 2
    %v1551 = vsel %vm551, %v1539, %v1550
    %v1552 = vrot.slane %v1389, 2
    %v1553 = vsel %vm551, %v1542, %v1552
    %v1554 = vrot.slane %v1470, 2
    %v1555 = vsel %vm551, %v1545, %v1554
    %v1556 = vrot.slane %v1472, 2
    %v1557 = vsel %vm551, %v1548, %v1556
    %1558 = vrot.lane.b32.xlu0 %v1540, 96
    %v1559 = vpop.permute.xlu0 %1558
    %1560 = vrot.lane.b32.xlu0 %v1543, 96
    %v1561 = vpop.permute.xlu0 %1560
    %1562 = vrot.lane.b32.xlu0 %v1546, 96
    %v1563 = vpop.permute.xlu0 %1562
    %1564 = vrot.lane.b32.xlu0 %v1549, 96
    %v1565 = vpop.permute.xlu0 %1564
    %1566 = vrot.lane.b32.xlu0 %v1551, 96
    %v1567 = vpop.permute.xlu0 %1566
    %1568 = vrot.lane.b32.xlu0 %v1553, 96
    %v1569 = vpop.permute.xlu0 %1568
    %1570 = vrot.lane.b32.xlu0 %v1555, 96
    %v1571 = vpop.permute.xlu0 %1570
    %1572 = vrot.lane.b32.xlu0 %v1557, 96
    %v1573 = vpop.permute.xlu0 %1572
    %v1574 = vsel %vm699, %v1559, %v1561
    %v1575 = vsel %vm699, %v1561, %v1563
    %v1576 = vsel %vm699, %v1563, %v1565
    %v1577 = vsel %vm699, %v1567, %v1569
    %v1578 = vsel %vm699, %v1569, %v1571
    %v1579 = vsel %vm699, %v1571, %v1573
    %v1588 = vsel %vm1165, %v1460, %v1507
    %v1589 = vsel %vm1165, %v1466, %v1515
    %v1590 = vsel %vm699, %v1513, %v1559
    %v1591 = vsel %vm699, %v1521, %v1567
    %v1593 = vlaneseq
    %v1594 = vshrl.u32 %v1593, 7
    %v1595 = vsub.s32 0, %v1594
    %v1596 = vrot.slane %v384, %v1595
    %vm1598 = vcmask 654336
    %v1599 = vsel %vm1598, %v1565, 0
    %v1601 = vsel %vm1598, %v1573, 0
    %1603 = vmatprep.subr.mxu0 0.0
    %1604 = vmatpush1.msra.mxu0 %v213
    %1605 = vmatprep.subr.mxu0 0.0
    %1606 = vmatpush1.msra.mxu0 %v212
    %1607 = vmatprep.subr.mxu0 0.0
    %1608 = vmatpush1.msra.mxu0 %v211
    %1609 = vmatprep.subr.mxu0 0.0
    %1610 = vmatpush1.msra.mxu0 %v210
    %1611 = vmatprep.subr.mxu0 0.0
    %1612 = vmatpush1.msra.mxu0 %v209
    %1613 = vmatprep.subr.mxu0 0.0
    %1614 = vmatpush1.msra.mxu0 %v208
    %1615 = vmatprep.subr.mxu0 0.0
    %1616 = vmatpush1.msra.mxu0 %v207
    %1617 = vmatprep.subr.mxu0 0.0
    %1618 = vmatpush1.msra.mxu0 %v206
    %1619 = vmatprep.subr.mxu0 0.0
    %1620 = vmatpush1.msra.mxu0 %v205
    %1621 = vmatprep.subr.mxu0 0.0
    %1622 = vmatpush1.msra.mxu0 %v204
    %1623 = vmatprep.subr.mxu0 0.0
    %1624 = vmatpush1.msra.mxu0 %v203
    %1625 = vmatprep.subr.mxu0 0.0
    %1626 = vmatpush1.msra.mxu0 %v202
    %1627 = vmatprep.subr.mxu0 0.0
    %1628 = vmatpush1.msra.mxu0 %v201
    %1629 = vmatprep.subr.mxu0 0.0
    %1630 = vmatpush1.msra.mxu0 %v200
    %1631 = vmatprep.subr.mxu0 0.0
    %1632 = vmatpush1.msra.mxu0 %v199
    %1633 = vmatprep.subr.mxu0 0.0
    %1634 = vmatpush1.msra.mxu0 %v198
    %1635 = vmatprep.subr.mxu0 0.0
    %1636 = vmatpush2.msra.mxu0 %v229
    %1637 = vmatprep.subr.mxu0 0.0
    %1638 = vmatpush2.msra.mxu0 %v228
    %1639 = vmatprep.subr.mxu0 0.0
    %1640 = vmatpush2.msra.mxu0 %v227
    %1641 = vmatprep.subr.mxu0 0.0
    %1642 = vmatpush2.msra.mxu0 %v226
    %1643 = vmatprep.subr.mxu0 0.0
    %1644 = vmatpush2.msra.mxu0 %v225
    %1645 = vmatprep.subr.mxu0 0.0
    %1646 = vmatpush2.msra.mxu0 %v224
    %1647 = vmatprep.subr.mxu0 0.0
    %1648 = vmatpush2.msra.mxu0 %v223
    %1649 = vmatprep.subr.mxu0 0.0
    %1650 = vmatpush2.msra.mxu0 %v222
    %1651 = vmatprep.subr.mxu0 0.0
    %1652 = vmatpush2.msra.mxu0 %v221
    %1653 = vmatprep.subr.mxu0 0.0
    %1654 = vmatpush2.msra.mxu0 %v220
    %1655 = vmatprep.subr.mxu0 0.0
    %1656 = vmatpush2.msra.mxu0 %v219
    %1657 = vmatprep.subr.mxu0 0.0
    %1658 = vmatpush2.msra.mxu0 %v218
    %1659 = vmatprep.subr.mxu0 0.0
    %1660 = vmatpush2.msra.mxu0 %v217
    %1661 = vmatprep.subr.mxu0 0.0
    %1662 = vmatpush2.msra.mxu0 %v216
    %1663 = vmatprep.subr.mxu0 0.0
    %1664 = vmatpush2.msra.mxu0 %v215
    %1665 = vmatprep.subr.mxu0 0.0
    %1666 = vmatpush2.msra.mxu0 %v214
    %1667 = vmatprep.mubr.f32.mxu0 %v1377
    %1668 = vmatmul.mubr.f32.gmra.mxu0 %v1375
    %v1669 = vpop.f32.mrf.mxu0
    %v1670 = vadd.f32 %v1596, %v1669
    %v1671 = vpop.f32.mrf.mxu0
    %1672 = vmatprep.mubr.f32.mxu0 %v1383
    %1673 = vmatmul.mubr.f32.gmra.mxu0 %v1381
    %v1674 = vpop.f32.mrf.mxu0
    %v1675 = vadd.f32 %v1596, %v1674
    %v1676 = vpop.f32.mrf.mxu0
    %1677 = vdwg.mxu0
    %1678 = vmatprep.subr.mxu0 0.0
    %1679 = vmatpush1.msra.mxu0 %v245
    %1680 = vmatprep.subr.mxu0 0.0
    %1681 = vmatpush1.msra.mxu0 %v244
    %1682 = vmatprep.subr.mxu0 0.0
    %1683 = vmatpush1.msra.mxu0 %v243
    %1684 = vmatprep.subr.mxu0 0.0
    %1685 = vmatpush1.msra.mxu0 %v242
    %1686 = vmatprep.subr.mxu0 0.0
    %1687 = vmatpush1.msra.mxu0 %v241
    %1688 = vmatprep.subr.mxu0 0.0
    %1689 = vmatpush1.msra.mxu0 %v240
    %1690 = vmatprep.subr.mxu0 0.0
    %1691 = vmatpush1.msra.mxu0 %v239
    %1692 = vmatprep.subr.mxu0 0.0
    %1693 = vmatpush1.msra.mxu0 %v238
    %1694 = vmatprep.subr.mxu0 0.0
    %1695 = vmatpush1.msra.mxu0 %v237
    %1696 = vmatprep.subr.mxu0 0.0
    %1697 = vmatpush1.msra.mxu0 %v236
    %1698 = vmatprep.subr.mxu0 0.0
    %1699 = vmatpush1.msra.mxu0 %v235
    %1700 = vmatprep.subr.mxu0 0.0
    %1701 = vmatpush1.msra.mxu0 %v234
    %1702 = vmatprep.subr.mxu0 0.0
    %1703 = vmatpush1.msra.mxu0 %v233
    %1704 = vmatprep.subr.mxu0 0.0
    %1705 = vmatpush1.msra.mxu0 %v232
    %1706 = vmatprep.subr.mxu0 0.0
    %1707 = vmatpush1.msra.mxu0 %v231
    %1708 = vmatprep.subr.mxu0 0.0
    %1709 = vmatpush1.msra.mxu0 %v230
    %1710 = vmatprep.subr.mxu0 0.0
    %1711 = vmatpush2.msra.mxu0 %v261
    %1712 = vmatprep.subr.mxu0 0.0
    %1713 = vmatpush2.msra.mxu0 %v260
    %1714 = vmatprep.subr.mxu0 0.0
    %1715 = vmatpush2.msra.mxu0 %v259
    %1716 = vmatprep.subr.mxu0 0.0
    %1717 = vmatpush2.msra.mxu0 %v258
    %1718 = vmatprep.subr.mxu0 0.0
    %1719 = vmatpush2.msra.mxu0 %v257
    %1720 = vmatprep.subr.mxu0 0.0
    %1721 = vmatpush2.msra.mxu0 %v256
    %1722 = vmatprep.subr.mxu0 0.0
    %1723 = vmatpush2.msra.mxu0 %v255
    %1724 = vmatprep.subr.mxu0 0.0
    %1725 = vmatpush2.msra.mxu0 %v254
    %1726 = vmatprep.subr.mxu0 0.0
    %1727 = vmatpush2.msra.mxu0 %v253
    %1728 = vmatprep.subr.mxu0 0.0
    %1729 = vmatpush2.msra.mxu0 %v252
    %1730 = vmatprep.subr.mxu0 0.0
    %1731 = vmatpush2.msra.mxu0 %v251
    %1732 = vmatprep.subr.mxu0 0.0
    %1733 = vmatpush2.msra.mxu0 %v250
    %1734 = vmatprep.subr.mxu0 0.0
    %1735 = vmatpush2.msra.mxu0 %v249
    %1736 = vmatprep.subr.mxu0 0.0
    %1737 = vmatpush2.msra.mxu0 %v248
    %1738 = vmatprep.subr.mxu0 0.0
    %1739 = vmatpush2.msra.mxu0 %v247
    %1740 = vmatprep.subr.mxu0 0.0
    %1741 = vmatpush2.msra.mxu0 %v246
    %1742 = vmatprep.mubr.f32.mxu0 %v1588
    %1743 = vmatmul.mubr.f32.gmra.mxu0 %v1458
    %v1744 = vpop.f32.mrf.mxu0
    %v1745 = vadd.f32 %v1670, %v1744
    %v1746 = vpop.f32.mrf.mxu0
    %1747 = vmatprep.mubr.f32.mxu0 %v1589
    %1748 = vmatmul.mubr.f32.gmra.mxu0 %v1464
    %v1749 = vpop.f32.mrf.mxu0
    %v1750 = vadd.f32 %v1675, %v1749
    %v1751 = vpop.f32.mrf.mxu0
    %1752 = vdwg.mxu0
    %1753 = vmatprep.subr.mxu0 0.0
    %1754 = vmatpush1.msra.mxu0 %v277
    %1755 = vmatprep.subr.mxu0 0.0
    %1756 = vmatpush1.msra.mxu0 %v276
    %1757 = vmatprep.subr.mxu0 0.0
    %1758 = vmatpush1.msra.mxu0 %v275
    %1759 = vmatprep.subr.mxu0 0.0
    %1760 = vmatpush1.msra.mxu0 %v274
    %1761 = vmatprep.subr.mxu0 0.0
    %1762 = vmatpush1.msra.mxu0 %v273
    %1763 = vmatprep.subr.mxu0 0.0
    %1764 = vmatpush1.msra.mxu0 %v272
    %1765 = vmatprep.subr.mxu0 0.0
    %1766 = vmatpush1.msra.mxu0 %v271
    %1767 = vmatprep.subr.mxu0 0.0
    %1768 = vmatpush1.msra.mxu0 %v270
    %1769 = vmatprep.subr.mxu0 0.0
    %1770 = vmatpush1.msra.mxu0 %v269
    %1771 = vmatprep.subr.mxu0 0.0
    %1772 = vmatpush1.msra.mxu0 %v268
    %1773 = vmatprep.subr.mxu0 0.0
    %1774 = vmatpush1.msra.mxu0 %v267
    %1775 = vmatprep.subr.mxu0 0.0
    %1776 = vmatpush1.msra.mxu0 %v266
    %1777 = vmatprep.subr.mxu0 0.0
    %1778 = vmatpush1.msra.mxu0 %v265
    %1779 = vmatprep.subr.mxu0 0.0
    %1780 = vmatpush1.msra.mxu0 %v264
    %1781 = vmatprep.subr.mxu0 0.0
    %1782 = vmatpush1.msra.mxu0 %v263
    %1783 = vmatprep.subr.mxu0 0.0
    %1784 = vmatpush1.msra.mxu0 %v262
    %1785 = vmatprep.subr.mxu0 0.0
    %1786 = vmatpush2.msra.mxu0 %v293
    %1787 = vmatprep.subr.mxu0 0.0
    %1788 = vmatpush2.msra.mxu0 %v292
    %1789 = vmatprep.subr.mxu0 0.0
    %1790 = vmatpush2.msra.mxu0 %v291
    %1791 = vmatprep.subr.mxu0 0.0
    %1792 = vmatpush2.msra.mxu0 %v290
    %1793 = vmatprep.subr.mxu0 0.0
    %1794 = vmatpush2.msra.mxu0 %v289
    %1795 = vmatprep.subr.mxu0 0.0
    %1796 = vmatpush2.msra.mxu0 %v288
    %1797 = vmatprep.subr.mxu0 0.0
    %1798 = vmatpush2.msra.mxu0 %v287
    %1799 = vmatprep.subr.mxu0 0.0
    %1800 = vmatpush2.msra.mxu0 %v286
    %1801 = vmatprep.subr.mxu0 0.0
    %1802 = vmatpush2.msra.mxu0 %v285
    %1803 = vmatprep.subr.mxu0 0.0
    %1804 = vmatpush2.msra.mxu0 %v284
    %1805 = vmatprep.subr.mxu0 0.0
    %1806 = vmatpush2.msra.mxu0 %v283
    %1807 = vmatprep.subr.mxu0 0.0
    %1808 = vmatpush2.msra.mxu0 %v282
    %1809 = vmatprep.subr.mxu0 0.0
    %1810 = vmatpush2.msra.mxu0 %v281
    %1811 = vmatprep.subr.mxu0 0.0
    %1812 = vmatpush2.msra.mxu0 %v280
    %1813 = vmatprep.subr.mxu0 0.0
    %1814 = vmatpush2.msra.mxu0 %v279
    %1815 = vmatprep.subr.mxu0 0.0
    %1816 = vmatpush2.msra.mxu0 %v278
    %1817 = vmatprep.mubr.f32.mxu0 %v1523
    %1818 = vmatmul.mubr.f32.gmra.mxu0 %v1522
    %v1819 = vpop.f32.mrf.mxu0
    %v1820 = vadd.f32 %v1745, %v1819
    %v1821 = vpop.f32.mrf.mxu0
    %1822 = vmatprep.mubr.f32.mxu0 %v1526
    %1823 = vmatmul.mubr.f32.gmra.mxu0 %v1525
    %v1824 = vpop.f32.mrf.mxu0
    %v1825 = vadd.f32 %v1750, %v1824
    %v1826 = vpop.f32.mrf.mxu0
    %1827 = vdwg.mxu0
    %1828 = vmatprep.subr.mxu0 0.0
    %1829 = vmatpush1.msra.mxu0 %v309
    %1830 = vmatprep.subr.mxu0 0.0
    %1831 = vmatpush1.msra.mxu0 %v308
    %1832 = vmatprep.subr.mxu0 0.0
    %1833 = vmatpush1.msra.mxu0 %v307
    %1834 = vmatprep.subr.mxu0 0.0
    %1835 = vmatpush1.msra.mxu0 %v306
    %1836 = vmatprep.subr.mxu0 0.0
    %1837 = vmatpush1.msra.mxu0 %v305
    %1838 = vmatprep.subr.mxu0 0.0
    %1839 = vmatpush1.msra.mxu0 %v304
    %1840 = vmatprep.subr.mxu0 0.0
    %1841 = vmatpush1.msra.mxu0 %v303
    %1842 = vmatprep.subr.mxu0 0.0
    %1843 = vmatpush1.msra.mxu0 %v302
    %1844 = vmatprep.subr.mxu0 0.0
    %1845 = vmatpush1.msra.mxu0 %v301
    %1846 = vmatprep.subr.mxu0 0.0
    %1847 = vmatpush1.msra.mxu0 %v300
    %1848 = vmatprep.subr.mxu0 0.0
    %1849 = vmatpush1.msra.mxu0 %v299
    %1850 = vmatprep.subr.mxu0 0.0
    %1851 = vmatpush1.msra.mxu0 %v298
    %1852 = vmatprep.subr.mxu0 0.0
    %1853 = vmatpush1.msra.mxu0 %v297
    %1854 = vmatprep.subr.mxu0 0.0
    %1855 = vmatpush1.msra.mxu0 %v296
    %1856 = vmatprep.subr.mxu0 0.0
    %1857 = vmatpush1.msra.mxu0 %v295
    %1858 = vmatprep.subr.mxu0 0.0
    %1859 = vmatpush1.msra.mxu0 %v294
    %1860 = vmatprep.subr.mxu0 0.0
    %1861 = vmatpush2.msra.mxu0 %v325
    %1862 = vmatprep.subr.mxu0 0.0
    %1863 = vmatpush2.msra.mxu0 %v324
    %1864 = vmatprep.subr.mxu0 0.0
    %1865 = vmatpush2.msra.mxu0 %v323
    %1866 = vmatprep.subr.mxu0 0.0
    %1867 = vmatpush2.msra.mxu0 %v322
    %1868 = vmatprep.subr.mxu0 0.0
    %1869 = vmatpush2.msra.mxu0 %v321
    %1870 = vmatprep.subr.mxu0 0.0
    %1871 = vmatpush2.msra.mxu0 %v320
    %1872 = vmatprep.subr.mxu0 0.0
    %1873 = vmatpush2.msra.mxu0 %v319
    %1874 = vmatprep.subr.mxu0 0.0
    %1875 = vmatpush2.msra.mxu0 %v318
    %1876 = vmatprep.subr.mxu0 0.0
    %1877 = vmatpush2.msra.mxu0 %v317
    %1878 = vmatprep.subr.mxu0 0.0
    %1879 = vmatpush2.msra.mxu0 %v316
    %1880 = vmatprep.subr.mxu0 0.0
    %1881 = vmatpush2.msra.mxu0 %v315
    %1882 = vmatprep.subr.mxu0 0.0
    %1883 = vmatpush2.msra.mxu0 %v314
    %1884 = vmatprep.subr.mxu0 0.0
    %1885 = vmatpush2.msra.mxu0 %v313
    %1886 = vmatprep.subr.mxu0 0.0
    %1887 = vmatpush2.msra.mxu0 %v312
    %1888 = vmatprep.subr.mxu0 0.0
    %1889 = vmatpush2.msra.mxu0 %v311
    %1890 = vmatprep.subr.mxu0 0.0
    %1891 = vmatpush2.msra.mxu0 %v310
    %1892 = vmatprep.mubr.f32.mxu0 %v1590
    %1893 = vmatmul.mubr.f32.gmra.mxu0 %v1524
    %v1894 = vpop.f32.mrf.mxu0
    %v1895 = vadd.f32 %v1820, %v1894
    %v1896 = vpop.f32.mrf.mxu0
    %1897 = vmatprep.mubr.f32.mxu0 %v1591
    %1898 = vmatmul.mubr.f32.gmra.mxu0 %v1527
    %v1899 = vpop.f32.mrf.mxu0
    %v1900 = vadd.f32 %v1825, %v1899
    %v1901 = vpop.f32.mrf.mxu0
    %1902 = vdwg.mxu0
    %1903 = vmatprep.subr.mxu0 0.0
    %1904 = vmatpush1.msra.mxu0 %v341
    %1905 = vmatprep.subr.mxu0 0.0
    %1906 = vmatpush1.msra.mxu0 %v340
    %1907 = vmatprep.subr.mxu0 0.0
    %1908 = vmatpush1.msra.mxu0 %v339
    %1909 = vmatprep.subr.mxu0 0.0
    %1910 = vmatpush1.msra.mxu0 %v338
    %1911 = vmatprep.subr.mxu0 0.0
    %1912 = vmatpush1.msra.mxu0 %v337
    %1913 = vmatprep.subr.mxu0 0.0
    %1914 = vmatpush1.msra.mxu0 %v336
    %1915 = vmatprep.subr.mxu0 0.0
    %1916 = vmatpush1.msra.mxu0 %v335
    %1917 = vmatprep.subr.mxu0 0.0
    %1918 = vmatpush1.msra.mxu0 %v334
    %1919 = vmatprep.subr.mxu0 0.0
    %1920 = vmatpush1.msra.mxu0 %v333
    %1921 = vmatprep.subr.mxu0 0.0
    %1922 = vmatpush1.msra.mxu0 %v332
    %1923 = vmatprep.subr.mxu0 0.0
    %1924 = vmatpush1.msra.mxu0 %v331
    %1925 = vmatprep.subr.mxu0 0.0
    %1926 = vmatpush1.msra.mxu0 %v330
    %1927 = vmatprep.subr.mxu0 0.0
    %1928 = vmatpush1.msra.mxu0 %v329
    %1929 = vmatprep.subr.mxu0 0.0
    %1930 = vmatpush1.msra.mxu0 %v328
    %1931 = vmatprep.subr.mxu0 0.0
    %1932 = vmatpush1.msra.mxu0 %v327
    %1933 = vmatprep.subr.mxu0 0.0
    %1934 = vmatpush1.msra.mxu0 %v326
    %1935 = vmatprep.subr.mxu0 0.0
    %1936 = vmatpush2.msra.mxu0 %v357
    %1937 = vmatprep.subr.mxu0 0.0
    %1938 = vmatpush2.msra.mxu0 %v356
    %1939 = vmatprep.subr.mxu0 0.0
    %1940 = vmatpush2.msra.mxu0 %v355
    %1941 = vmatprep.subr.mxu0 0.0
    %1942 = vmatpush2.msra.mxu0 %v354
    %1943 = vmatprep.subr.mxu0 0.0
    %1944 = vmatpush2.msra.mxu0 %v353
    %1945 = vmatprep.subr.mxu0 0.0
    %1946 = vmatpush2.msra.mxu0 %v352
    %1947 = vmatprep.subr.mxu0 0.0
    %1948 = vmatpush2.msra.mxu0 %v351
    %1949 = vmatprep.subr.mxu0 0.0
    %1950 = vmatpush2.msra.mxu0 %v350
    %1951 = vmatprep.subr.mxu0 0.0
    %1952 = vmatpush2.msra.mxu0 %v349
    %1953 = vmatprep.subr.mxu0 0.0
    %1954 = vmatpush2.msra.mxu0 %v348
    %1955 = vmatprep.subr.mxu0 0.0
    %1956 = vmatpush2.msra.mxu0 %v347
    %1957 = vmatprep.subr.mxu0 0.0
    %1958 = vmatpush2.msra.mxu0 %v346
    %1959 = vmatprep.subr.mxu0 0.0
    %1960 = vmatpush2.msra.mxu0 %v345
    %1961 = vmatprep.subr.mxu0 0.0
    %1962 = vmatpush2.msra.mxu0 %v344
    %1963 = vmatprep.subr.mxu0 0.0
    %1964 = vmatpush2.msra.mxu0 %v343
    %1965 = vmatprep.subr.mxu0 0.0
    %1966 = vmatpush2.msra.mxu0 %v342
    %1967 = vmatprep.mubr.f32.mxu0 %v1575
    %1968 = vmatmul.mubr.f32.gmra.mxu0 %v1574
    %v1969 = vpop.f32.mrf.mxu0
    %v1970 = vadd.f32 %v1895, %v1969
    %v1971 = vpop.f32.mrf.mxu0
    %1972 = vmatprep.mubr.f32.mxu0 %v1578
    %1973 = vmatmul.mubr.f32.gmra.mxu0 %v1577
    %v1974 = vpop.f32.mrf.mxu0
    %v1975 = vadd.f32 %v1900, %v1974
    %v1976 = vpop.f32.mrf.mxu0
    %1977 = vdwg.mxu0
    %1978 = vmatprep.subr.mxu0 0.0
    %1979 = vmatpush1.msra.mxu0 %v373
    %1980 = vmatprep.subr.mxu0 0.0
    %1981 = vmatpush1.msra.mxu0 %v372
    %1982 = vmatprep.subr.mxu0 0.0
    %1983 = vmatpush1.msra.mxu0 %v371
    %1984 = vmatprep.subr.mxu0 0.0
    %1985 = vmatpush1.msra.mxu0 %v370
    %1986 = vmatprep.subr.mxu0 0.0
    %1987 = vmatpush1.msra.mxu0 %v369
    %1988 = vmatprep.subr.mxu0 0.0
    %1989 = vmatpush1.msra.mxu0 %v368
    %1990 = vmatprep.subr.mxu0 0.0
    %1991 = vmatpush1.msra.mxu0 %v367
    %1992 = vmatprep.subr.mxu0 0.0
    %1993 = vmatpush1.msra.mxu0 %v366
    %1994 = vmatprep.subr.mxu0 0.0
    %1995 = vmatpush1.msra.mxu0 %v365
    %1996 = vmatprep.subr.mxu0 0.0
    %1997 = vmatpush1.msra.mxu0 %v364
    %1998 = vmatprep.subr.mxu0 0.0
    %1999 = vmatpush1.msra.mxu0 %v363
    %2000 = vmatprep.subr.mxu0 0.0
    %2001 = vmatpush1.msra.mxu0 %v362
    %2002 = vmatprep.subr.mxu0 0.0
    %2003 = vmatpush1.msra.mxu0 %v361
    %2004 = vmatprep.subr.mxu0 0.0
    %2005 = vmatpush1.msra.mxu0 %v360
    %2006 = vmatprep.subr.mxu0 0.0
    %2007 = vmatpush1.msra.mxu0 %v359
    %2008 = vmatprep.subr.mxu0 0.0
    %2009 = vmatpush1.msra.mxu0 %v358
    %2010 = vmatprep.subr.mxu0 0.0
    %2011 = vmatpush2.msra.mxu0 0.0
    %2012 = vmatprep.subr.mxu0 0.0
    %2013 = vmatpush2.msra.mxu0 0.0
    %2014 = vmatprep.subr.mxu0 0.0
    %2015 = vmatpush2.msra.mxu0 0.0
    %2016 = vmatprep.subr.mxu0 0.0
    %2017 = vmatpush2.msra.mxu0 0.0
    %2018 = vmatprep.subr.mxu0 0.0
    %2019 = vmatpush2.msra.mxu0 0.0
    %2020 = vmatprep.subr.mxu0 0.0
    %2021 = vmatpush2.msra.mxu0 0.0
    %2022 = vmatprep.subr.mxu0 0.0
    %2023 = vmatpush2.msra.mxu0 %v383
    %2024 = vmatprep.subr.mxu0 0.0
    %2025 = vmatpush2.msra.mxu0 %v382
    %2026 = vmatprep.subr.mxu0 0.0
    %2027 = vmatpush2.msra.mxu0 %v381
    %2028 = vmatprep.subr.mxu0 0.0
    %2029 = vmatpush2.msra.mxu0 %v380
    %2030 = vmatprep.subr.mxu0 0.0
    %2031 = vmatpush2.msra.mxu0 %v379
    %2032 = vmatprep.subr.mxu0 0.0
    %2033 = vmatpush2.msra.mxu0 %v378
    %2034 = vmatprep.subr.mxu0 0.0
    %2035 = vmatpush2.msra.mxu0 %v377
    %2036 = vmatprep.subr.mxu0 0.0
    %2037 = vmatpush2.msra.mxu0 %v376
    %2038 = vmatprep.subr.mxu0 0.0
    %2039 = vmatpush2.msra.mxu0 %v375
    %2040 = vmatprep.subr.mxu0 0.0
    %2041 = vmatpush2.msra.mxu0 %v374
    %2042 = vmatprep.mubr.f32.mxu0 %v1599
    %2043 = vmatmul.mubr.f32.gmra.mxu0 %v1576
    %v2044 = vpop.f32.mrf.mxu0
    %v2045 = vadd.f32 %v1970, %v2044
    %v2046 = vpop.f32.mrf.mxu0
    %2047 = vmatprep.mubr.f32.mxu0 %v1601
    %2048 = vmatmul.mubr.f32.gmra.mxu0 %v1579
    %v2049 = vpop.f32.mrf.mxu0
    %v2050 = vadd.f32 %v1975, %v2049
    %v2051 = vpop.f32.mrf.mxu0
    %2052 = vdwg.mxu0
    %v2053 = vtanh.pop %v2045
    %v2054 = vtanh.pop %v2050
    %2057 = vrot.lane.b32.xlu0 %v2053, 120
    %v2058 = vpop.permute.xlu0 %2057
    %2059 = vrot.lane.b32.xlu0 %v2054, 120
    %v2060 = vpop.permute.xlu0 %2059
    %v2063 = vmax.f32 %v2053, %v2058
    %v2064 = vmax.f32 %v2054, %v2060
    %v2067 = vrot.slane %v2063, 1
    %v2068 = vrot.slane %v2064, 1
    %v2069 = vsel %vm529, %v2067, %v2068
    %v2072 = vmax.f32 %v2063, %v2069
    %v2073 = vmax.f32 %v2064, %v2068
    %v2075 = vrot.slane %v2072, 2
    %2076 = vrot.lane.b32.xlu0 %v2075, 120
    %v2077 = vpop.permute.xlu0 %2076
    %v2079 = vrot.slane %v2072, 4
    %2080 = vrot.lane.b32.xlu0 %v2079, 112
    %v2081 = vpop.permute.xlu0 %2080
    %v2083 = vrot.slane %v2072, 6
    %2084 = vrot.lane.b32.xlu0 %v2083, 104
    %v2085 = vpop.permute.xlu0 %2084
    %2088 = vrot.lane.b32.xlu0 %v2073, 96
    %v2089 = vpop.permute.xlu0 %2088
    %v2091 = vrot.slane %v2073, 2
    %2092 = vrot.lane.b32.xlu0 %v2091, 88
    %v2093 = vpop.permute.xlu0 %2092
    %v2095 = vrot.slane %v2073, 4
    %2096 = vrot.lane.b32.xlu0 %v2095, 80
    %v2097 = vpop.permute.xlu0 %2096
    %v2099 = vrot.slane %v2073, 6
    %2100 = vrot.lane.b32.xlu0 %v2099, 72
    %v2101 = vpop.permute.xlu0 %2100
    %vm2103 = vcmask 982016
    %v2104 = vsel %vm2103, %v2072, %v2077
    %v2105 = vsel %vm1165, %v2077, %v2081
    %vm2106 = vcmask 850944
    %v2107 = vsel %vm2106, %v2081, %v2085
    %v2108 = vsel %vm699, %v2085, %v2089
    %vm2109 = vcmask 719872
    %v2110 = vsel %vm2109, %v2089, %v2093
    %v2111 = vsel %vm1598, %v2093, %v2097
    %vm2112 = vcmask 588800
    %v2113 = vsel %vm2112, %v2097, %v2101
    %v2114 = vld [vmem:[%s0 + $0x66] sm:$0xff]
    %v2115 = vld [vmem:[%s0 + $0x6e] sm:$0xff]
    %v2116 = vld [vmem:[%s0 + $0x76] sm:$0xff]
    %v2117 = vld [vmem:[%s0 + $0x7e] sm:$0xff]
    %v2118 = vld [vmem:[%s0 + $0x86] sm:$0xff]
    %v2119 = vld [vmem:[%s0 + $0x8e] sm:$0xff]
    %v2120 = vld [vmem:[%s0 + $0x96] sm:$0xff]
    %v2121 = vld [vmem:[%s0 + $0x9e] sm:$0xff]
    %v2122 = vld [vmem:[%s0 + $0xa6] sm:$0xff]
    %v2123 = vld [vmem:[%s0 + $0xae] sm:$0xff]
    %v2124 = vld [vmem:[%s0 + $0xb6] sm:$0xff]
    %v2125 = vld [vmem:[%s0 + $0xbe] sm:$0xff]
    %v2126 = vld [vmem:[%s0 + $0xc6] sm:$0x3f]
    %v2132 = vrot.slane %v2114, 1
    %v2133 = vrot.slane %v2115, 1
    %v2134 = vsel %vm529, %v2132, %v2133
    %v2135 = vrot.slane %v2116, 1
    %v2136 = vsel %vm529, %v2133, %v2135
    %v2137 = vrot.slane %v2117, 1
    %v2138 = vsel %vm529, %v2135, %v2137
    %v2139 = vrot.slane %v2118, 1
    %v2140 = vsel %vm529, %v2137, %v2139
    %2141 = vrot.lane.b32.xlu0 %v2134, 32
    %v2142 = vpop.permute.xlu0 %2141
    %2143 = vrot.lane.b32.xlu0 %v2136, 32
    %v2144 = vpop.permute.xlu0 %2143
    %2145 = vrot.lane.b32.xlu0 %v2138, 32
    %v2146 = vpop.permute.xlu0 %2145
    %2147 = vrot.lane.b32.xlu0 %v2140, 32
    %v2148 = vpop.permute.xlu0 %2147
    %v2153 = vrot.slane %v2114, 2
    %v2154 = vrot.slane %v2115, 2
    %v2155 = vsel %vm551, %v2153, %v2154
    %v2156 = vrot.slane %v2116, 2
    %v2157 = vsel %vm551, %v2154, %v2156
    %v2158 = vrot.slane %v2117, 2
    %v2159 = vsel %vm551, %v2156, %v2158
    %v2160 = vrot.slane %v2118, 2
    %v2161 = vsel %vm551, %v2158, %v2160
    %2162 = vrot.lane.b32.xlu0 %v2155, 64
    %v2163 = vpop.permute.xlu0 %2162
    %2164 = vrot.lane.b32.xlu0 %v2157, 64
    %v2165 = vpop.permute.xlu0 %2164
    %2166 = vrot.lane.b32.xlu0 %v2159, 64
    %v2167 = vpop.permute.xlu0 %2166
    %2168 = vrot.lane.b32.xlu0 %v2161, 64
    %v2169 = vpop.permute.xlu0 %2168
    %v2178 = vrot.slane %v2119, 2
    %v2179 = vsel %vm551, %v2160, %v2178
    %v2180 = vrot.slane %v2120, 2
    %v2181 = vsel %vm551, %v2178, %v2180
    %v2182 = vrot.slane %v2121, 2
    %v2183 = vsel %vm551, %v2180, %v2182
    %v2184 = vrot.slane %v2122, 2
    %v2185 = vsel %vm551, %v2182, %v2184
    %2186 = vrot.lane.b32.xlu0 %v2179, 96
    %v2187 = vpop.permute.xlu0 %2186
    %2188 = vrot.lane.b32.xlu0 %v2181, 96
    %v2189 = vpop.permute.xlu0 %2188
    %2190 = vrot.lane.b32.xlu0 %v2183, 96
    %v2191 = vpop.permute.xlu0 %2190
    %2192 = vrot.lane.b32.xlu0 %v2185, 96
    %v2193 = vpop.permute.xlu0 %2192
    %v2198 = vrot.slane %v2118, 3
    %v2199 = vrot.slane %v2119, 3
    %v2200 = vsel %vm597, %v2198, %v2199
    %v2201 = vrot.slane %v2120, 3
    %v2202 = vsel %vm597, %v2199, %v2201
    %v2203 = vrot.slane %v2121, 3
    %v2204 = vsel %vm597, %v2201, %v2203
    %v2205 = vrot.slane %v2122, 3
    %v2206 = vsel %vm597, %v2203, %v2205
    %v2211 = vrot.slane %v2118, 4
    %v2212 = vrot.slane %v2119, 4
    %v2213 = vsel %vm611, %v2211, %v2212
    %v2214 = vrot.slane %v2120, 4
    %v2215 = vsel %vm611, %v2212, %v2214
    %v2216 = vrot.slane %v2121, 4
    %v2217 = vsel %vm611, %v2214, %v2216
    %v2218 = vrot.slane %v2122, 4
    %v2219 = vsel %vm611, %v2216, %v2218
    %2220 = vrot.lane.b32.xlu0 %v2213, 32
    %v2221 = vpop.permute.xlu0 %2220
    %2222 = vrot.lane.b32.xlu0 %v2215, 32
    %v2223 = vpop.permute.xlu0 %2222
    %2224 = vrot.lane.b32.xlu0 %v2217, 32
    %v2225 = vpop.permute.xlu0 %2224
    %2226 = vrot.lane.b32.xlu0 %v2219, 32
    %v2227 = vpop.permute.xlu0 %2226
    %v2236 = vrot.slane %v2123, 4
    %v2237 = vsel %vm611, %v2218, %v2236
    %v2238 = vrot.slane %v2124, 4
    %v2239 = vsel %vm611, %v2236, %v2238
    %v2240 = vrot.slane %v2125, 4
    %v2241 = vsel %vm611, %v2238, %v2240
    %v2242 = vrot.slane %v2126, 4
    %v2243 = vsel %vm611, %v2240, %v2242
    %2244 = vrot.lane.b32.xlu0 %v2237, 64
    %v2245 = vpop.permute.xlu0 %2244
    %2246 = vrot.lane.b32.xlu0 %v2239, 64
    %v2247 = vpop.permute.xlu0 %2246
    %2248 = vrot.lane.b32.xlu0 %v2241, 64
    %v2249 = vpop.permute.xlu0 %2248
    %2250 = vrot.lane.b32.xlu0 %v2243, 64
    %v2251 = vpop.permute.xlu0 %2250
    %v2256 = vrot.slane %v2122, 5
    %v2257 = vrot.slane %v2123, 5
    %v2258 = vsel %vm657, %v2256, %v2257
    %v2259 = vrot.slane %v2124, 5
    %v2260 = vsel %vm657, %v2257, %v2259
    %v2261 = vrot.slane %v2125, 5
    %v2262 = vsel %vm657, %v2259, %v2261
    %v2263 = vrot.slane %v2126, 5
    %v2264 = vsel %vm657, %v2261, %v2263
    %2265 = vrot.lane.b32.xlu0 %v2258, 96
    %v2266 = vpop.permute.xlu0 %2265
    %2267 = vrot.lane.b32.xlu0 %v2260, 96
    %v2268 = vpop.permute.xlu0 %2267
    %2269 = vrot.lane.b32.xlu0 %v2262, 96
    %v2270 = vpop.permute.xlu0 %2269
    %2271 = vrot.lane.b32.xlu0 %v2264, 96
    %v2272 = vpop.permute.xlu0 %2271
    %v2277 = vrot.slane %v2122, 6
    %v2278 = vrot.slane %v2123, 6
    %v2279 = vsel %vm679, %v2277, %v2278
    %v2280 = vrot.slane %v2124, 6
    %v2281 = vsel %vm679, %v2278, %v2280
    %v2282 = vrot.slane %v2125, 6
    %v2283 = vsel %vm679, %v2280, %v2282
    %v2284 = vrot.slane %v2126, 6
    %v2285 = vsel %vm679, %v2282, %v2284
    %v2286 = vsel %vm689, %v2114, %v2142
    %v2287 = vsel %vm689, %v2115, %v2144
    %v2288 = vsel %vm689, %v2116, %v2146
    %v2289 = vsel %vm689, %v2117, %v2148
    %v2290 = vsel %vm694, %v2286, %v2163
    %v2291 = vsel %vm694, %v2287, %v2165
    %v2292 = vsel %vm694, %v2288, %v2167
    %v2293 = vsel %vm694, %v2289, %v2169
    %v2294 = vsel %vm699, %v2290, %v2187
    %v2295 = vsel %vm699, %v2291, %v2189
    %v2296 = vsel %vm699, %v2292, %v2191
    %v2297 = vsel %vm699, %v2293, %v2193
    %v2298 = vsel %vm689, %v2200, %v2221
    %v2299 = vsel %vm689, %v2202, %v2223
    %v2300 = vsel %vm689, %v2204, %v2225
    %v2301 = vsel %vm689, %v2206, %v2227
    %v2302 = vsel %vm694, %v2298, %v2245
    %v2303 = vsel %vm694, %v2299, %v2247
    %v2304 = vsel %vm694, %v2300, %v2249
    %v2305 = vsel %vm694, %v2301, %v2251
    %v2306 = vsel %vm699, %v2302, %v2266
    %v2307 = vsel %vm699, %v2303, %v2268
    %v2308 = vsel %vm699, %v2304, %v2270
    %v2309 = vsel %vm699, %v2305, %v2272
    %v2310 = vsel %vm689, %v2279, 0
    %v2312 = vsel %vm689, %v2281, 0
    %v2314 = vsel %vm689, %v2283, 0
    %v2316 = vsel %vm689, %v2285, 0
    %2318 = vmatprep.subr.mxu0 %v111
    %2319 = vmatpush1.msra.mxu0 %v110
    %2320 = vmatprep.subr.mxu0 %v107
    %2321 = vmatpush1.msra.mxu0 %v106
    %2322 = vmatprep.subr.mxu0 %v103
    %2323 = vmatpush1.msra.mxu0 %v102
    %2324 = vmatprep.subr.mxu0 %v99
    %2325 = vmatpush1.msra.mxu0 %v98
    %2326 = vmatprep.subr.mxu0 %v95
    %2327 = vmatpush1.msra.mxu0 %v94
    %2328 = vmatprep.subr.mxu0 %v91
    %2329 = vmatpush1.msra.mxu0 %v90
    %2330 = vmatprep.subr.mxu0 %v87
    %2331 = vmatpush1.msra.mxu0 %v86
    %2332 = vmatprep.subr.mxu0 %v83
    %2333 = vmatpush1.msra.mxu0 %v82
    %2334 = vmatprep.subr.mxu0 %v79
    %2335 = vmatpush1.msra.mxu0 %v78
    %2336 = vmatprep.subr.mxu0 %v75
    %2337 = vmatpush1.msra.mxu0 %v74
    %2338 = vmatprep.subr.mxu0 %v71
    %2339 = vmatpush1.msra.mxu0 %v70
    %2340 = vmatprep.subr.mxu0 %v67
    %2341 = vmatpush1.msra.mxu0 %v66
    %2342 = vmatprep.subr.mxu0 %v63
    %2343 = vmatpush1.msra.mxu0 %v62
    %2344 = vmatprep.subr.mxu0 %v59
    %2345 = vmatpush1.msra.mxu0 %v58
    %2346 = vmatprep.subr.mxu0 %v55
    %2347 = vmatpush1.msra.mxu0 %v54
    %2348 = vmatprep.subr.mxu0 %v51
    %2349 = vmatpush1.msra.mxu0 %v50
    %2350 = vmatprep.subr.mxu0 %v175
    %2351 = vmatpush2.msra.mxu0 %v174
    %2352 = vmatprep.subr.mxu0 %v171
    %2353 = vmatpush2.msra.mxu0 %v170
    %2354 = vmatprep.subr.mxu0 %v167
    %2355 = vmatpush2.msra.mxu0 %v166
    %2356 = vmatprep.subr.mxu0 %v163
    %2357 = vmatpush2.msra.mxu0 %v162
    %2358 = vmatprep.subr.mxu0 %v159
    %2359 = vmatpush2.msra.mxu0 %v158
    %2360 = vmatprep.subr.mxu0 %v155
    %2361 = vmatpush2.msra.mxu0 %v154
    %2362 = vmatprep.subr.mxu0 %v151
    %2363 = vmatpush2.msra.mxu0 %v150
    %2364 = vmatprep.subr.mxu0 %v147
    %2365 = vmatpush2.msra.mxu0 %v146
    %2366 = vmatprep.subr.mxu0 %v143
    %2367 = vmatpush2.msra.mxu0 %v142
    %2368 = vmatprep.subr.mxu0 %v139
    %2369 = vmatpush2.msra.mxu0 %v138
    %2370 = vmatprep.subr.mxu0 %v135
    %2371 = vmatpush2.msra.mxu0 %v134
    %2372 = vmatprep.subr.mxu0 %v131
    %2373 = vmatpush2.msra.mxu0 %v130
    %2374 = vmatprep.subr.mxu0 %v127
    %2375 = vmatpush2.msra.mxu0 %v126
    %2376 = vmatprep.subr.mxu0 %v123
    %2377 = vmatpush2.msra.mxu0 %v122
    %2378 = vmatprep.subr.mxu0 %v119
    %2379 = vmatpush2.msra.mxu0 %v118
    %2380 = vmatprep.subr.mxu0 %v115
    %2381 = vmatpush2.msra.mxu0 %v114
    %2382 = vmatprep.mubr.f32.mxu0 %v2306
    %2383 = vmatmul.mubr.f32.gmra.mxu0 %v2294
    %v2384 = vpop.f32.mrf.mxu0
    %v2385 = vadd.f32 %v720, %v2384
    %v2386 = vpop.f32.mrf.mxu0
    %v2387 = vadd.f32 %v724, %v2386
    %2388 = vmatprep.mubr.f32.mxu0 %v2307
    %2389 = vmatmul.mubr.f32.gmra.mxu0 %v2295
    %v2390 = vpop.f32.mrf.mxu0
    %v2391 = vadd.f32 %v720, %v2390
    %v2392 = vpop.f32.mrf.mxu0
    %v2393 = vadd.f32 %v724, %v2392
    %2394 = vmatprep.mubr.f32.mxu0 %v2308
    %2395 = vmatmul.mubr.f32.gmra.mxu0 %v2296
    %v2396 = vpop.f32.mrf.mxu0
    %v2397 = vadd.f32 %v720, %v2396
    %v2398 = vpop.f32.mrf.mxu0
    %v2399 = vadd.f32 %v724, %v2398
    %2400 = vmatprep.mubr.f32.mxu0 %v2309
    %2401 = vmatmul.mubr.f32.gmra.mxu0 %v2297
    %v2402 = vpop.f32.mrf.mxu0
    %v2403 = vadd.f32 %v720, %v2402
    %v2404 = vpop.f32.mrf.mxu0
    %v2405 = vadd.f32 %v724, %v2404
    %2406 = vdwg.mxu0
    %2407 = vmatprep.subr.mxu0 0.0
    %2408 = vmatpush1.msra.mxu0 0.0
    %2409 = vmatprep.subr.mxu0 0.0
    %2410 = vmatpush1.msra.mxu0 0.0
    %2411 = vmatprep.subr.mxu0 0.0
    %2412 = vmatpush1.msra.mxu0 0.0
    %2413 = vmatprep.subr.mxu0 0.0
    %2414 = vmatpush1.msra.mxu0 0.0
    %2415 = vmatprep.subr.mxu0 0.0
    %2416 = vmatpush1.msra.mxu0 0.0
    %2417 = vmatprep.subr.mxu0 0.0
    %2418 = vmatpush1.msra.mxu0 0.0
    %2419 = vmatprep.subr.mxu0 0.0
    %2420 = vmatpush1.msra.mxu0 0.0
    %2421 = vmatprep.subr.mxu0 0.0
    %2422 = vmatpush1.msra.mxu0 0.0
    %2423 = vmatprep.subr.mxu0 0.0
    %2424 = vmatpush1.msra.mxu0 0.0
    %2425 = vmatprep.subr.mxu0 0.0
    %2426 = vmatpush1.msra.mxu0 0.0
    %2427 = vmatprep.subr.mxu0 0.0
    %2428 = vmatpush1.msra.mxu0 0.0
    %2429 = vmatprep.subr.mxu0 0.0
    %2430 = vmatpush1.msra.mxu0 0.0
    %2431 = vmatprep.subr.mxu0 %v191
    %2432 = vmatpush1.msra.mxu0 %v190
    %2433 = vmatprep.subr.mxu0 %v187
    %2434 = vmatpush1.msra.mxu0 %v186
    %2435 = vmatprep.subr.mxu0 %v183
    %2436 = vmatpush1.msra.mxu0 %v182
    %2437 = vmatprep.subr.mxu0 %v179
    %2438 = vmatpush1.msra.mxu0 %v178
    %2439 = vmatprep.subr.mxu0 0.0
    %2440 = vmatpush2.msra.mxu0 0.0
    %2441 = vmatprep.subr.mxu0 0.0
    %2442 = vmatpush2.msra.mxu0 0.0
    %2443 = vmatprep.subr.mxu0 0.0
    %2444 = vmatpush2.msra.mxu0 0.0
    %2445 = vmatprep.subr.mxu0 0.0
    %2446 = vmatpush2.msra.mxu0 0.0
    %2447 = vmatprep.subr.mxu0 0.0
    %2448 = vmatpush2.msra.mxu0 0.0
    %2449 = vmatprep.subr.mxu0 0.0
    %2450 = vmatpush2.msra.mxu0 0.0
    %2451 = vmatprep.subr.mxu0 0.0
    %2452 = vmatpush2.msra.mxu0 0.0
    %2453 = vmatprep.subr.mxu0 0.0
    %2454 = vmatpush2.msra.mxu0 0.0
    %2455 = vmatprep.subr.mxu0 0.0
    %2456 = vmatpush2.msra.mxu0 0.0
    %2457 = vmatprep.subr.mxu0 0.0
    %2458 = vmatpush2.msra.mxu0 0.0
    %2459 = vmatprep.subr.mxu0 0.0
    %2460 = vmatpush2.msra.mxu0 0.0
    %2461 = vmatprep.subr.mxu0 0.0
    %2462 = vmatpush2.msra.mxu0 0.0
    %2463 = vmatprep.subr.mxu0 0.0
    %2464 = vmatpush2.msra.mxu0 0.0
    %2465 = vmatprep.subr.mxu0 0.0
    %2466 = vmatpush2.msra.mxu0 0.0
    %2467 = vmatprep.subr.mxu0 0.0
    %2468 = vmatpush2.msra.mxu0 0.0
    %2469 = vmatprep.subr.mxu0 0.0
    %2470 = vmatpush2.msra.mxu0 0.0
    %2471 = vmatprep.mubr.f32.mxu0 0.0
    %2472 = vmatmul.mubr.f32.gmra.mxu0 %v2310
    %v2473 = vpop.f32.mrf.mxu0
    %v2474 = vadd.f32 %v2385, %v2473
    %v2475 = vpop.f32.mrf.mxu0
    %v2476 = vadd.f32 %v2387, %v2475
    %2477 = vmatprep.mubr.f32.mxu0 0.0
    %2478 = vmatmul.mubr.f32.gmra.mxu0 %v2312
    %v2479 = vpop.f32.mrf.mxu0
    %v2480 = vadd.f32 %v2391, %v2479
    %v2481 = vpop.f32.mrf.mxu0
    %v2482 = vadd.f32 %v2393, %v2481
    %2483 = vmatprep.mubr.f32.mxu0 0.0
    %2484 = vmatmul.mubr.f32.gmra.mxu0 %v2314
    %v2485 = vpop.f32.mrf.mxu0
    %v2486 = vadd.f32 %v2397, %v2485
    %v2487 = vpop.f32.mrf.mxu0
    %v2488 = vadd.f32 %v2399, %v2487
    %2489 = vmatprep.mubr.f32.mxu0 0.0
    %2490 = vmatmul.mubr.f32.gmra.mxu0 %v2316
    %v2491 = vpop.f32.mrf.mxu0
    %v2492 = vadd.f32 %v2403, %v2491
    %v2493 = vpop.f32.mrf.mxu0
    %v2494 = vadd.f32 %v2405, %v2493
    %2495 = vdwg.mxu0
    %2496 = vmatprep.subr.mxu0 %v113
    %2497 = vmatpush1.msra.mxu0 %v112
    %2498 = vmatprep.subr.mxu0 %v109
    %2499 = vmatpush1.msra.mxu0 %v108
    %2500 = vmatprep.subr.mxu0 %v105
    %2501 = vmatpush1.msra.mxu0 %v104
    %2502 = vmatprep.subr.mxu0 %v101
    %2503 = vmatpush1.msra.mxu0 %v100
    %2504 = vmatprep.subr.mxu0 %v97
    %2505 = vmatpush1.msra.mxu0 %v96
    %2506 = vmatprep.subr.mxu0 %v93
    %2507 = vmatpush1.msra.mxu0 %v92
    %2508 = vmatprep.subr.mxu0 %v89
    %2509 = vmatpush1.msra.mxu0 %v88
    %2510 = vmatprep.subr.mxu0 %v85
    %2511 = vmatpush1.msra.mxu0 %v84
    %2512 = vmatprep.subr.mxu0 %v81
    %2513 = vmatpush1.msra.mxu0 %v80
    %2514 = vmatprep.subr.mxu0 %v77
    %2515 = vmatpush1.msra.mxu0 %v76
    %2516 = vmatprep.subr.mxu0 %v73
    %2517 = vmatpush1.msra.mxu0 %v72
    %2518 = vmatprep.subr.mxu0 %v69
    %2519 = vmatpush1.msra.mxu0 %v68
    %2520 = vmatprep.subr.mxu0 %v65
    %2521 = vmatpush1.msra.mxu0 %v64
    %2522 = vmatprep.subr.mxu0 %v61
    %2523 = vmatpush1.msra.mxu0 %v60
    %2524 = vmatprep.subr.mxu0 %v57
    %2525 = vmatpush1.msra.mxu0 %v56
    %2526 = vmatprep.subr.mxu0 %v53
    %2527 = vmatpush1.msra.mxu0 %v52
    %2528 = vmatprep.subr.mxu0 %v177
    %2529 = vmatpush2.msra.mxu0 %v176
    %2530 = vmatprep.subr.mxu0 %v173
    %2531 = vmatpush2.msra.mxu0 %v172
    %2532 = vmatprep.subr.mxu0 %v169
    %2533 = vmatpush2.msra.mxu0 %v168
    %2534 = vmatprep.subr.mxu0 %v165
    %2535 = vmatpush2.msra.mxu0 %v164
    %2536 = vmatprep.subr.mxu0 %v161
    %2537 = vmatpush2.msra.mxu0 %v160
    %2538 = vmatprep.subr.mxu0 %v157
    %2539 = vmatpush2.msra.mxu0 %v156
    %2540 = vmatprep.subr.mxu0 %v153
    %2541 = vmatpush2.msra.mxu0 %v152
    %2542 = vmatprep.subr.mxu0 %v149
    %2543 = vmatpush2.msra.mxu0 %v148
    %2544 = vmatprep.subr.mxu0 %v145
    %2545 = vmatpush2.msra.mxu0 %v144
    %2546 = vmatprep.subr.mxu0 %v141
    %2547 = vmatpush2.msra.mxu0 %v140
    %2548 = vmatprep.subr.mxu0 %v137
    %2549 = vmatpush2.msra.mxu0 %v136
    %2550 = vmatprep.subr.mxu0 %v133
    %2551 = vmatpush2.msra.mxu0 %v132
    %2552 = vmatprep.subr.mxu0 %v129
    %2553 = vmatpush2.msra.mxu0 %v128
    %2554 = vmatprep.subr.mxu0 %v125
    %2555 = vmatpush2.msra.mxu0 %v124
    %2556 = vmatprep.subr.mxu0 %v121
    %2557 = vmatpush2.msra.mxu0 %v120
    %2558 = vmatprep.subr.mxu0 %v117
    %2559 = vmatpush2.msra.mxu0 %v116
    %2560 = vmatprep.mubr.f32.mxu0 %v2306
    %2561 = vmatmul.mubr.f32.gmra.mxu0 %v2294
    %v2562 = vpop.f32.mrf.mxu0
    %v2563 = vadd.f32 %v728, %v2562
    %v2564 = vpop.f32.mrf.mxu0
    %v2565 = vadd.f32 %v732, %v2564
    %2566 = vmatprep.mubr.f32.mxu0 %v2307
    %2567 = vmatmul.mubr.f32.gmra.mxu0 %v2295
    %v2568 = vpop.f32.mrf.mxu0
    %v2569 = vadd.f32 %v728, %v2568
    %v2570 = vpop.f32.mrf.mxu0
    %v2571 = vadd.f32 %v732, %v2570
    %2572 = vmatprep.mubr.f32.mxu0 %v2308
    %2573 = vmatmul.mubr.f32.gmra.mxu0 %v2296
    %v2574 = vpop.f32.mrf.mxu0
    %v2575 = vadd.f32 %v728, %v2574
    %v2576 = vpop.f32.mrf.mxu0
    %v2577 = vadd.f32 %v732, %v2576
    %2578 = vmatprep.mubr.f32.mxu0 %v2309
    %2579 = vmatmul.mubr.f32.gmra.mxu0 %v2297
    %v2580 = vpop.f32.mrf.mxu0
    %v2581 = vadd.f32 %v728, %v2580
    %v2582 = vpop.f32.mrf.mxu0
    %v2583 = vadd.f32 %v732, %v2582
    %2584 = vdwg.mxu0
    %2585 = vmatprep.subr.mxu0 0.0
    %2586 = vmatpush1.msra.mxu0 0.0
    %2587 = vmatprep.subr.mxu0 0.0
    %2588 = vmatpush1.msra.mxu0 0.0
    %2589 = vmatprep.subr.mxu0 0.0
    %2590 = vmatpush1.msra.mxu0 0.0
    %2591 = vmatprep.subr.mxu0 0.0
    %2592 = vmatpush1.msra.mxu0 0.0
    %2593 = vmatprep.subr.mxu0 0.0
    %2594 = vmatpush1.msra.mxu0 0.0
    %2595 = vmatprep.subr.mxu0 0.0
    %2596 = vmatpush1.msra.mxu0 0.0
    %2597 = vmatprep.subr.mxu0 0.0
    %2598 = vmatpush1.msra.mxu0 0.0
    %2599 = vmatprep.subr.mxu0 0.0
    %2600 = vmatpush1.msra.mxu0 0.0
    %2601 = vmatprep.subr.mxu0 0.0
    %2602 = vmatpush1.msra.mxu0 0.0
    %2603 = vmatprep.subr.mxu0 0.0
    %2604 = vmatpush1.msra.mxu0 0.0
    %2605 = vmatprep.subr.mxu0 0.0
    %2606 = vmatpush1.msra.mxu0 0.0
    %2607 = vmatprep.subr.mxu0 0.0
    %2608 = vmatpush1.msra.mxu0 0.0
    %2609 = vmatprep.subr.mxu0 %v193
    %2610 = vmatpush1.msra.mxu0 %v192
    %2611 = vmatprep.subr.mxu0 %v189
    %2612 = vmatpush1.msra.mxu0 %v188
    %2613 = vmatprep.subr.mxu0 %v185
    %2614 = vmatpush1.msra.mxu0 %v184
    %2615 = vmatprep.subr.mxu0 %v181
    %2616 = vmatpush1.msra.mxu0 %v180
    %2617 = vmatprep.subr.mxu0 0.0
    %2618 = vmatpush2.msra.mxu0 0.0
    %2619 = vmatprep.subr.mxu0 0.0
    %2620 = vmatpush2.msra.mxu0 0.0
    %2621 = vmatprep.subr.mxu0 0.0
    %2622 = vmatpush2.msra.mxu0 0.0
    %2623 = vmatprep.subr.mxu0 0.0
    %2624 = vmatpush2.msra.mxu0 0.0
    %2625 = vmatprep.subr.mxu0 0.0
    %2626 = vmatpush2.msra.mxu0 0.0
    %2627 = vmatprep.subr.mxu0 0.0
    %2628 = vmatpush2.msra.mxu0 0.0
    %2629 = vmatprep.subr.mxu0 0.0
    %2630 = vmatpush2.msra.mxu0 0.0
    %2631 = vmatprep.subr.mxu0 0.0
    %2632 = vmatpush2.msra.mxu0 0.0
    %2633 = vmatprep.subr.mxu0 0.0
    %2634 = vmatpush2.msra.mxu0 0.0
    %2635 = vmatprep.subr.mxu0 0.0
    %2636 = vmatpush2.msra.mxu0 0.0
    %2637 = vmatprep.subr.mxu0 0.0
    %2638 = vmatpush2.msra.mxu0 0.0
    %2639 = vmatprep.subr.mxu0 0.0
    %2640 = vmatpush2.msra.mxu0 0.0
    %2641 = vmatprep.subr.mxu0 0.0
    %2642 = vmatpush2.msra.mxu0 0.0
    %2643 = vmatprep.subr.mxu0 0.0
    %2644 = vmatpush2.msra.mxu0 0.0
    %2645 = vmatprep.subr.mxu0 0.0
    %2646 = vmatpush2.msra.mxu0 0.0
    %2647 = vmatprep.subr.mxu0 0.0
    %2648 = vmatpush2.msra.mxu0 0.0
    %2649 = vmatprep.mubr.f32.mxu0 0.0
    %2650 = vmatmul.mubr.f32.gmra.mxu0 %v2310
    %v2651 = vpop.f32.mrf.mxu0
    %v2652 = vadd.f32 %v2563, %v2651
    %v2653 = vpop.f32.mrf.mxu0
    %v2654 = vadd.f32 %v2565, %v2653
    %2655 = vmatprep.mubr.f32.mxu0 0.0
    %2656 = vmatmul.mubr.f32.gmra.mxu0 %v2312
    %v2657 = vpop.f32.mrf.mxu0
    %v2658 = vadd.f32 %v2569, %v2657
    %v2659 = vpop.f32.mrf.mxu0
    %v2660 = vadd.f32 %v2571, %v2659
    %2661 = vmatprep.mubr.f32.mxu0 0.0
    %2662 = vmatmul.mubr.f32.gmra.mxu0 %v2314
    %v2663 = vpop.f32.mrf.mxu0
    %v2664 = vadd.f32 %v2575, %v2663
    %v2665 = vpop.f32.mrf.mxu0
    %v2666 = vadd.f32 %v2577, %v2665
    %2667 = vmatprep.mubr.f32.mxu0 0.0
    %2668 = vmatmul.mubr.f32.gmra.mxu0 %v2316
    %v2669 = vpop.f32.mrf.mxu0
    %v2670 = vadd.f32 %v2581, %v2669
    %v2671 = vpop.f32.mrf.mxu0
    %v2672 = vadd.f32 %v2583, %v2671
    %2673 = vdwg.mxu0
    %v2674 = vtanh.pop %v2474
    %v2675 = vtanh.pop %v2476
    %v2676 = vtanh.pop %v2652
    %v2677 = vtanh.pop %v2654
    %v2678 = vtanh.pop %v2480
    %v2679 = vtanh.pop %v2482
    %v2680 = vtanh.pop %v2658
    %v2681 = vtanh.pop %v2660
    %v2682 = vtanh.pop %v2486
    %v2683 = vtanh.pop %v2488
    %v2684 = vtanh.pop %v2664
    %v2685 = vtanh.pop %v2666
    %v2686 = vtanh.pop %v2492
    %v2687 = vtanh.pop %v2494
    %v2688 = vtanh.pop %v2670
    %v2689 = vtanh.pop %v2672
    %2706 = vrot.lane.b32.xlu0 %v2674, 112
    %v2707 = vpop.permute.xlu0 %2706
    %2708 = vrot.lane.b32.xlu0 %v2675, 112
    %v2709 = vpop.permute.xlu0 %2708
    %2710 = vrot.lane.b32.xlu0 %v2676, 112
    %v2711 = vpop.permute.xlu0 %2710
    %2712 = vrot.lane.b32.xlu0 %v2677, 112
    %v2713 = vpop.permute.xlu0 %2712
    %2714 = vrot.lane.b32.xlu0 %v2678, 112
    %v2715 = vpop.permute.xlu0 %2714
    %2716 = vrot.lane.b32.xlu0 %v2679, 112
    %v2717 = vpop.permute.xlu0 %2716
    %2718 = vrot.lane.b32.xlu0 %v2680, 112
    %v2719 = vpop.permute.xlu0 %2718
    %2720 = vrot.lane.b32.xlu0 %v2681, 112
    %v2721 = vpop.permute.xlu0 %2720
    %2722 = vrot.lane.b32.xlu0 %v2682, 112
    %v2723 = vpop.permute.xlu0 %2722
    %2724 = vrot.lane.b32.xlu0 %v2683, 112
    %v2725 = vpop.permute.xlu0 %2724
    %2726 = vrot.lane.b32.xlu0 %v2684, 112
    %v2727 = vpop.permute.xlu0 %2726
    %2728 = vrot.lane.b32.xlu0 %v2685, 112
    %v2729 = vpop.permute.xlu0 %2728
    %2730 = vrot.lane.b32.xlu0 %v2686, 112
    %v2731 = vpop.permute.xlu0 %2730
    %2732 = vrot.lane.b32.xlu0 %v2687, 112
    %v2733 = vpop.permute.xlu0 %2732
    %2734 = vrot.lane.b32.xlu0 %v2688, 112
    %v2735 = vpop.permute.xlu0 %2734
    %2736 = vrot.lane.b32.xlu0 %v2689, 112
    %v2737 = vpop.permute.xlu0 %2736
    %v2738 = vsel %vm1165, %v2707, %v2709
    %v2739 = vsel %vm1165, %v2709, %v2711
    %v2740 = vsel %vm1165, %v2711, %v2713
    %v2741 = vsel %vm1165, %v2715, %v2717
    %v2742 = vsel %vm1165, %v2717, %v2719
    %v2743 = vsel %vm1165, %v2719, %v2721
    %v2744 = vsel %vm1165, %v2723, %v2725
    %v2745 = vsel %vm1165, %v2725, %v2727
    %v2746 = vsel %vm1165, %v2727, %v2729
    %v2747 = vsel %vm1165, %v2731, %v2733
    %v2748 = vsel %vm1165, %v2733, %v2735
    %v2749 = vsel %vm1165, %v2735, %v2737
    %v2766 = vmax.f32 %v2674, %v2738
    %v2767 = vmax.f32 %v2675, %v2739
    %v2768 = vmax.f32 %v2676, %v2740
    %v2769 = vmax.f32 %v2677, %v2713
    %v2770 = vmax.f32 %v2678, %v2741
    %v2771 = vmax.f32 %v2679, %v2742
    %v2772 = vmax.f32 %v2680, %v2743
    %v2773 = vmax.f32 %v2681, %v2721
    %v2774 = vmax.f32 %v2682, %v2744
    %v2775 = vmax.f32 %v2683, %v2745
    %v2776 = vmax.f32 %v2684, %v2746
    %v2777 = vmax.f32 %v2685, %v2729
    %v2778 = vmax.f32 %v2686, %v2747
    %v2779 = vmax.f32 %v2687, %v2748
    %v2780 = vmax.f32 %v2688, %v2749
    %v2781 = vmax.f32 %v2689, %v2737
    %v2798 = vrot.slane %v2766, 1
    %v2799 = vrot.slane %v2770, 1
    %v2800 = vsel %vm529, %v2798, %v2799
    %v2801 = vrot.slane %v2767, 1
    %v2802 = vrot.slane %v2771, 1
    %v2803 = vsel %vm529, %v2801, %v2802
    %v2804 = vrot.slane %v2768, 1
    %v2805 = vrot.slane %v2772, 1
    %v2806 = vsel %vm529, %v2804, %v2805
    %v2807 = vrot.slane %v2769, 1
    %v2808 = vrot.slane %v2773, 1
    %v2809 = vsel %vm529, %v2807, %v2808
    %v2810 = vrot.slane %v2774, 1
    %v2811 = vsel %vm529, %v2799, %v2810
    %v2812 = vrot.slane %v2775, 1
    %v2813 = vsel %vm529, %v2802, %v2812
    %v2814 = vrot.slane %v2776, 1
    %v2815 = vsel %vm529, %v2805, %v2814
    %v2816 = vrot.slane %v2777, 1
    %v2817 = vsel %vm529, %v2808, %v2816
    %v2818 = vrot.slane %v2778, 1
    %v2819 = vsel %vm529, %v2810, %v2818
    %v2820 = vrot.slane %v2779, 1
    %v2821 = vsel %vm529, %v2812, %v2820
    %v2822 = vrot.slane %v2780, 1
    %v2823 = vsel %vm529, %v2814, %v2822
    %v2824 = vrot.slane %v2781, 1
    %v2825 = vsel %vm529, %v2816, %v2824
    %v2842 = vmax.f32 %v2766, %v2800
    %v2843 = vmax.f32 %v2767, %v2803
    %v2844 = vmax.f32 %v2768, %v2806
    %v2845 = vmax.f32 %v2769, %v2809
    %v2846 = vmax.f32 %v2770, %v2811
    %v2847 = vmax.f32 %v2771, %v2813
    %v2848 = vmax.f32 %v2772, %v2815
    %v2849 = vmax.f32 %v2773, %v2817
    %v2850 = vmax.f32 %v2774, %v2819
    %v2851 = vmax.f32 %v2775, %v2821
    %v2852 = vmax.f32 %v2776, %v2823
    %v2853 = vmax.f32 %v2777, %v2825
    %v2854 = vmax.f32 %v2778, %v2818
    %v2855 = vmax.f32 %v2779, %v2820
    %v2856 = vmax.f32 %v2780, %v2822
    %v2857 = vmax.f32 %v2781, %v2824
    %v2859 = vsel %vm529, %v2854, 0
    %v2862 = vsel %vm529, %v2855, 0
    %v2865 = vsel %vm529, %v2856, 0
    %v2868 = vsel %vm529, %v2857, 0
    %2870 = vmatprep.subr.mxu0 0.0
    %2871 = vmatpush1.msra.mxu0 0.0
    %2872 = vmatprep.subr.mxu0 0.0
    %2873 = vmatpush1.msra.mxu0 0.0
    %2874 = vmatprep.subr.mxu0 0.0
    %2875 = vmatpush1.msra.mxu0 0.0
    %2876 = vmatprep.subr.mxu0 0.0
    %2877 = vmatpush1.msra.mxu0 0.0
    %2878 = vmatprep.subr.mxu0 0.0
    %2879 = vmatpush1.msra.mxu0 0.0
    %2880 = vmatprep.subr.mxu0 0.0
    %2881 = vmatpush1.msra.mxu0 0.0
    %2882 = vmatprep.subr.mxu0 0.0
    %2883 = vmatpush1.msra.mxu0 0.0
    %2884 = vmatprep.subr.mxu0 0.0
    %2885 = vmatpush1.msra.mxu0 0.0
    %2886 = vmatprep.subr.mxu0 0.0
    %2887 = vmatpush1.msra.mxu0 0.0
    %2888 = vmatprep.subr.mxu0 0.0
    %2889 = vmatpush1.msra.mxu0 0.0
    %2890 = vmatprep.subr.mxu0 0.0
    %2891 = vmatpush1.msra.mxu0 0.0
    %2892 = vmatprep.subr.mxu0 0.0
    %2893 = vmatpush1.msra.mxu0 0.0
    %2894 = vmatprep.subr.mxu0 %v2862
    %2895 = vmatpush1.msra.mxu0 %v2859
    %2896 = vmatprep.subr.mxu0 %v2851
    %2897 = vmatpush1.msra.mxu0 %v2850
    %2898 = vmatprep.subr.mxu0 %v2847
    %2899 = vmatpush1.msra.mxu0 %v2846
    %2900 = vmatprep.subr.mxu0 %v2843
    %2901 = vmatpush1.msra.mxu0 %v2842
    %2902 = vmatprep.subr.mxu0 0.0
    %2903 = vmatpush2.msra.mxu0 0.0
    %2904 = vmatprep.subr.mxu0 0.0
    %2905 = vmatpush2.msra.mxu0 0.0
    %2906 = vmatprep.subr.mxu0 0.0
    %2907 = vmatpush2.msra.mxu0 0.0
    %2908 = vmatprep.subr.mxu0 0.0
    %2909 = vmatpush2.msra.mxu0 0.0
    %2910 = vmatprep.subr.mxu0 0.0
    %2911 = vmatpush2.msra.mxu0 0.0
    %2912 = vmatprep.subr.mxu0 0.0
    %2913 = vmatpush2.msra.mxu0 0.0
    %2914 = vmatprep.subr.mxu0 0.0
    %2915 = vmatpush2.msra.mxu0 0.0
    %2916 = vmatprep.subr.mxu0 0.0
    %2917 = vmatpush2.msra.mxu0 0.0
    %2918 = vmatprep.subr.mxu0 0.0
    %2919 = vmatpush2.msra.mxu0 0.0
    %2920 = vmatprep.subr.mxu0 0.0
    %2921 = vmatpush2.msra.mxu0 0.0
    %2922 = vmatprep.subr.mxu0 0.0
    %2923 = vmatpush2.msra.mxu0 0.0
    %2924 = vmatprep.subr.mxu0 0.0
    %2925 = vmatpush2.msra.mxu0 0.0
    %2926 = vmatprep.subr.mxu0 0.0
    %2927 = vmatpush2.msra.mxu0 0.0
    %2928 = vmatprep.subr.mxu0 0.0
    %2929 = vmatpush2.msra.mxu0 0.0
    %2930 = vmatprep.subr.mxu0 0.0
    %2931 = vmatpush2.msra.mxu0 0.0
    %2932 = vmatprep.subr.mxu0 0.0
    %2933 = vmatpush2.msra.mxu0 0.0
    %2934 = vmatprep.mubr.f32.mxu0 0.0
    %2935 = vmatmul.mubr.f32.gmra.mxu0 %v1288
    %v2936 = vpop.f32.mrf.mxu0
    %v2937 = vadd.f32 0.0, %v2936
    %v2938 = vpop.f32.mrf.mxu0
    %v2939 = vadd.f32 0.0, %v2938
    %2940 = vmatprep.mubr.f32.mxu0 0.0
    %2941 = vmatmul.mubr.f32.gmra.mxu0 %v1291
    %v2942 = vpop.f32.mrf.mxu0
    %v2943 = vadd.f32 0.0, %v2942
    %v2944 = vpop.f32.mrf.mxu0
    %v2945 = vadd.f32 0.0, %v2944
    %2946 = vmatprep.mubr.f32.mxu0 0.0
    %2947 = vmatmul.mubr.f32.gmra.mxu0 %v1294
    %v2948 = vpop.f32.mrf.mxu0
    %v2949 = vadd.f32 0.0, %v2948
    %v2950 = vpop.f32.mrf.mxu0
    %v2951 = vadd.f32 0.0, %v2950
    %2952 = vdwg.mxu0
    %2953 = vmatprep.subr.mxu0 0.0
    %2954 = vmatpush1.msra.mxu0 0.0
    %2955 = vmatprep.subr.mxu0 0.0
    %2956 = vmatpush1.msra.mxu0 0.0
    %2957 = vmatprep.subr.mxu0 0.0
    %2958 = vmatpush1.msra.mxu0 0.0
    %2959 = vmatprep.subr.mxu0 0.0
    %2960 = vmatpush1.msra.mxu0 0.0
    %2961 = vmatprep.subr.mxu0 0.0
    %2962 = vmatpush1.msra.mxu0 0.0
    %2963 = vmatprep.subr.mxu0 0.0
    %2964 = vmatpush1.msra.mxu0 0.0
    %2965 = vmatprep.subr.mxu0 0.0
    %2966 = vmatpush1.msra.mxu0 0.0
    %2967 = vmatprep.subr.mxu0 0.0
    %2968 = vmatpush1.msra.mxu0 0.0
    %2969 = vmatprep.subr.mxu0 0.0
    %2970 = vmatpush1.msra.mxu0 0.0
    %2971 = vmatprep.subr.mxu0 0.0
    %2972 = vmatpush1.msra.mxu0 0.0
    %2973 = vmatprep.subr.mxu0 0.0
    %2974 = vmatpush1.msra.mxu0 0.0
    %2975 = vmatprep.subr.mxu0 0.0
    %2976 = vmatpush1.msra.mxu0 0.0
    %2977 = vmatprep.subr.mxu0 %v2868
    %2978 = vmatpush1.msra.mxu0 %v2865
    %2979 = vmatprep.subr.mxu0 %v2853
    %2980 = vmatpush1.msra.mxu0 %v2852
    %2981 = vmatprep.subr.mxu0 %v2849
    %2982 = vmatpush1.msra.mxu0 %v2848
    %2983 = vmatprep.subr.mxu0 %v2845
    %2984 = vmatpush1.msra.mxu0 %v2844
    %2985 = vmatprep.subr.mxu0 0.0
    %2986 = vmatpush2.msra.mxu0 0.0
    %2987 = vmatprep.subr.mxu0 0.0
    %2988 = vmatpush2.msra.mxu0 0.0
    %2989 = vmatprep.subr.mxu0 0.0
    %2990 = vmatpush2.msra.mxu0 0.0
    %2991 = vmatprep.subr.mxu0 0.0
    %2992 = vmatpush2.msra.mxu0 0.0
    %2993 = vmatprep.subr.mxu0 0.0
    %2994 = vmatpush2.msra.mxu0 0.0
    %2995 = vmatprep.subr.mxu0 0.0
    %2996 = vmatpush2.msra.mxu0 0.0
    %2997 = vmatprep.subr.mxu0 0.0
    %2998 = vmatpush2.msra.mxu0 0.0
    %2999 = vmatprep.subr.mxu0 0.0
    %3000 = vmatpush2.msra.mxu0 0.0
    %3001 = vmatprep.subr.mxu0 0.0
    %3002 = vmatpush2.msra.mxu0 0.0
    %3003 = vmatprep.subr.mxu0 0.0
    %3004 = vmatpush2.msra.mxu0 0.0
    %3005 = vmatprep.subr.mxu0 0.0
    %3006 = vmatpush2.msra.mxu0 0.0
    %3007 = vmatprep.subr.mxu0 0.0
    %3008 = vmatpush2.msra.mxu0 0.0
    %3009 = vmatprep.subr.mxu0 0.0
    %3010 = vmatpush2.msra.mxu0 0.0
    %3011 = vmatprep.subr.mxu0 0.0
    %3012 = vmatpush2.msra.mxu0 0.0
    %3013 = vmatprep.subr.mxu0 0.0
    %3014 = vmatpush2.msra.mxu0 0.0
    %3015 = vmatprep.subr.mxu0 0.0
    %3016 = vmatpush2.msra.mxu0 0.0
    %3017 = vmatprep.mubr.f32.mxu0 0.0
    %3018 = vmatmul.mubr.f32.gmra.mxu0 %v1288
    %v3019 = vpop.f32.mrf.mxu0
    %v3020 = vadd.f32 0.0, %v3019
    %v3021 = vpop.f32.mrf.mxu0
    %v3022 = vadd.f32 0.0, %v3021
    %3023 = vmatprep.mubr.f32.mxu0 0.0
    %3024 = vmatmul.mubr.f32.gmra.mxu0 %v1291
    %v3025 = vpop.f32.mrf.mxu0
    %v3026 = vadd.f32 0.0, %v3025
    %v3027 = vpop.f32.mrf.mxu0
    %v3028 = vadd.f32 0.0, %v3027
    %3029 = vmatprep.mubr.f32.mxu0 0.0
    %3030 = vmatmul.mubr.f32.gmra.mxu0 %v1294
    %v3031 = vpop.f32.mrf.mxu0
    %v3032 = vadd.f32 0.0, %v3031
    %v3033 = vpop.f32.mrf.mxu0
    %v3034 = vadd.f32 0.0, %v3033
    %3035 = vdwg.mxu0
    %v3048 = vrot.slane %v2937, 1
    %v3049 = vrot.slane %v2943, 1
    %v3050 = vsel %vm529, %v3048, %v3049
    %v3051 = vrot.slane %v2939, 1
    %v3052 = vrot.slane %v2945, 1
    %v3053 = vsel %vm529, %v3051, %v3052
    %v3054 = vrot.slane %v3020, 1
    %v3055 = vrot.slane %v3026, 1
    %v3056 = vsel %vm529, %v3054, %v3055
    %v3057 = vrot.slane %v3022, 1
    %v3058 = vrot.slane %v3028, 1
    %v3059 = vsel %vm529, %v3057, %v3058
    %v3060 = vrot.slane %v2949, 1
    %v3061 = vsel %vm529, %v3049, %v3060
    %v3062 = vrot.slane %v2951, 1
    %v3063 = vsel %vm529, %v3052, %v3062
    %v3064 = vrot.slane %v3032, 1
    %v3065 = vsel %vm529, %v3055, %v3064
    %v3066 = vrot.slane %v3034, 1
    %v3067 = vsel %vm529, %v3058, %v3066
    %3068 = vrot.lane.b32.xlu0 %v3050, 112
    %v3069 = vpop.permute.xlu0 %3068
    %3070 = vrot.lane.b32.xlu0 %v3053, 112
    %v3071 = vpop.permute.xlu0 %3070
    %3072 = vrot.lane.b32.xlu0 %v3056, 112
    %v3073 = vpop.permute.xlu0 %3072
    %3074 = vrot.lane.b32.xlu0 %v3059, 112
    %v3075 = vpop.permute.xlu0 %3074
    %3076 = vrot.lane.b32.xlu0 %v3061, 112
    %v3077 = vpop.permute.xlu0 %3076
    %3078 = vrot.lane.b32.xlu0 %v3063, 112
    %v3079 = vpop.permute.xlu0 %3078
    %3080 = vrot.lane.b32.xlu0 %v3065, 112
    %v3081 = vpop.permute.xlu0 %3080
    %3082 = vrot.lane.b32.xlu0 %v3067, 112
    %v3083 = vpop.permute.xlu0 %3082
    %v3084 = vsel %vm1165, %v3069, %v3071
    %v3085 = vsel %vm1165, %v3071, %v3073
    %v3086 = vsel %vm1165, %v3073, %v3075
    %v3087 = vsel %vm1165, %v3077, %v3079
    %v3088 = vsel %vm1165, %v3079, %v3081
    %v3089 = vsel %vm1165, %v3081, %v3083
    %v3100 = vrot.slane %v2937, 2
    %v3101 = vrot.slane %v2943, 2
    %v3102 = vsel %vm551, %v3100, %v3101
    %v3103 = vrot.slane %v2939, 2
    %v3104 = vrot.slane %v2945, 2
    %v3105 = vsel %vm551, %v3103, %v3104
    %v3106 = vrot.slane %v3020, 2
    %v3107 = vrot.slane %v3026, 2
    %v3108 = vsel %vm551, %v3106, %v3107
    %v3109 = vrot.slane %v3022, 2
    %v3110 = vrot.slane %v3028, 2
    %v3111 = vsel %vm551, %v3109, %v3110
    %v3112 = vrot.slane %v2949, 2
    %v3113 = vsel %vm551, %v3101, %v3112
    %v3114 = vrot.slane %v2951, 2
    %v3115 = vsel %vm551, %v3104, %v3114
    %v3116 = vrot.slane %v3032, 2
    %v3117 = vsel %vm551, %v3107, %v3116
    %v3118 = vrot.slane %v3034, 2
    %v3119 = vsel %vm551, %v3110, %v3118
    %3120 = vrot.lane.b32.xlu0 %v3102, 96
    %v3121 = vpop.permute.xlu0 %3120
    %3122 = vrot.lane.b32.xlu0 %v3105, 96
    %v3123 = vpop.permute.xlu0 %3122
    %3124 = vrot.lane.b32.xlu0 %v3108, 96
    %v3125 = vpop.permute.xlu0 %3124
    %3126 = vrot.lane.b32.xlu0 %v3111, 96
    %v3127 = vpop.permute.xlu0 %3126
    %3128 = vrot.lane.b32.xlu0 %v3113, 96
    %v3129 = vpop.permute.xlu0 %3128
    %3130 = vrot.lane.b32.xlu0 %v3115, 96
    %v3131 = vpop.permute.xlu0 %3130
    %3132 = vrot.lane.b32.xlu0 %v3117, 96
    %v3133 = vpop.permute.xlu0 %3132
    %3134 = vrot.lane.b32.xlu0 %v3119, 96
    %v3135 = vpop.permute.xlu0 %3134
    %v3136 = vsel %vm699, %v3121, %v3123
    %v3137 = vsel %vm699, %v3123, %v3125
    %v3138 = vsel %vm699, %v3125, %v3127
    %v3139 = vsel %vm699, %v3129, %v3131
    %v3140 = vsel %vm699, %v3131, %v3133
    %v3141 = vsel %vm699, %v3133, %v3135
    %v3150 = vsel %vm1165, %v3022, %v3069
    %v3151 = vsel %vm1165, %v3028, %v3077
    %v3152 = vsel %vm699, %v3075, %v3121
    %v3153 = vsel %vm699, %v3083, %v3129
    %v3154 = vsel %vm1598, %v3127, 0
    %v3156 = vsel %vm1598, %v3135, 0
    %3158 = vmatprep.subr.mxu0 0.0
    %3159 = vmatpush1.msra.mxu0 %v213
    %3160 = vmatprep.subr.mxu0 0.0
    %3161 = vmatpush1.msra.mxu0 %v212
    %3162 = vmatprep.subr.mxu0 0.0
    %3163 = vmatpush1.msra.mxu0 %v211
    %3164 = vmatprep.subr.mxu0 0.0
    %3165 = vmatpush1.msra.mxu0 %v210
    %3166 = vmatprep.subr.mxu0 0.0
    %3167 = vmatpush1.msra.mxu0 %v209
    %3168 = vmatprep.subr.mxu0 0.0
    %3169 = vmatpush1.msra.mxu0 %v208
    %3170 = vmatprep.subr.mxu0 0.0
    %3171 = vmatpush1.msra.mxu0 %v207
    %3172 = vmatprep.subr.mxu0 0.0
    %3173 = vmatpush1.msra.mxu0 %v206
    %3174 = vmatprep.subr.mxu0 0.0
    %3175 = vmatpush1.msra.mxu0 %v205
    %3176 = vmatprep.subr.mxu0 0.0
    %3177 = vmatpush1.msra.mxu0 %v204
    %3178 = vmatprep.subr.mxu0 0.0
    %3179 = vmatpush1.msra.mxu0 %v203
    %3180 = vmatprep.subr.mxu0 0.0
    %3181 = vmatpush1.msra.mxu0 %v202
    %3182 = vmatprep.subr.mxu0 0.0
    %3183 = vmatpush1.msra.mxu0 %v201
    %3184 = vmatprep.subr.mxu0 0.0
    %3185 = vmatpush1.msra.mxu0 %v200
    %3186 = vmatprep.subr.mxu0 0.0
    %3187 = vmatpush1.msra.mxu0 %v199
    %3188 = vmatprep.subr.mxu0 0.0
    %3189 = vmatpush1.msra.mxu0 %v198
    %3190 = vmatprep.subr.mxu0 0.0
    %3191 = vmatpush2.msra.mxu0 %v229
    %3192 = vmatprep.subr.mxu0 0.0
    %3193 = vmatpush2.msra.mxu0 %v228
    %3194 = vmatprep.subr.mxu0 0.0
    %3195 = vmatpush2.msra.mxu0 %v227
    %3196 = vmatprep.subr.mxu0 0.0
    %3197 = vmatpush2.msra.mxu0 %v226
    %3198 = vmatprep.subr.mxu0 0.0
    %3199 = vmatpush2.msra.mxu0 %v225
    %3200 = vmatprep.subr.mxu0 0.0
    %3201 = vmatpush2.msra.mxu0 %v224
    %3202 = vmatprep.subr.mxu0 0.0
    %3203 = vmatpush2.msra.mxu0 %v223
    %3204 = vmatprep.subr.mxu0 0.0
    %3205 = vmatpush2.msra.mxu0 %v222
    %3206 = vmatprep.subr.mxu0 0.0
    %3207 = vmatpush2.msra.mxu0 %v221
    %3208 = vmatprep.subr.mxu0 0.0
    %3209 = vmatpush2.msra.mxu0 %v220
    %3210 = vmatprep.subr.mxu0 0.0
    %3211 = vmatpush2.msra.mxu0 %v219
    %3212 = vmatprep.subr.mxu0 0.0
    %3213 = vmatpush2.msra.mxu0 %v218
    %3214 = vmatprep.subr.mxu0 0.0
    %3215 = vmatpush2.msra.mxu0 %v217
    %3216 = vmatprep.subr.mxu0 0.0
    %3217 = vmatpush2.msra.mxu0 %v216
    %3218 = vmatprep.subr.mxu0 0.0
    %3219 = vmatpush2.msra.mxu0 %v215
    %3220 = vmatprep.subr.mxu0 0.0
    %3221 = vmatpush2.msra.mxu0 %v214
    %3222 = vmatprep.mubr.f32.mxu0 %v2939
    %3223 = vmatmul.mubr.f32.gmra.mxu0 %v2937
    %v3224 = vpop.f32.mrf.mxu0
    %v3225 = vadd.f32 %v1596, %v3224
    %v3226 = vpop.f32.mrf.mxu0
    %3227 = vmatprep.mubr.f32.mxu0 %v2945
    %3228 = vmatmul.mubr.f32.gmra.mxu0 %v2943
    %v3229 = vpop.f32.mrf.mxu0
    %v3230 = vadd.f32 %v1596, %v3229
    %v3231 = vpop.f32.mrf.mxu0
    %3232 = vdwg.mxu0
    %3233 = vmatprep.subr.mxu0 0.0
    %3234 = vmatpush1.msra.mxu0 %v245
    %3235 = vmatprep.subr.mxu0 0.0
    %3236 = vmatpush1.msra.mxu0 %v244
    %3237 = vmatprep.subr.mxu0 0.0
    %3238 = vmatpush1.msra.mxu0 %v243
    %3239 = vmatprep.subr.mxu0 0.0
    %3240 = vmatpush1.msra.mxu0 %v242
    %3241 = vmatprep.subr.mxu0 0.0
    %3242 = vmatpush1.msra.mxu0 %v241
    %3243 = vmatprep.subr.mxu0 0.0
    %3244 = vmatpush1.msra.mxu0 %v240
    %3245 = vmatprep.subr.mxu0 0.0
    %3246 = vmatpush1.msra.mxu0 %v239
    %3247 = vmatprep.subr.mxu0 0.0
    %3248 = vmatpush1.msra.mxu0 %v238
    %3249 = vmatprep.subr.mxu0 0.0
    %3250 = vmatpush1.msra.mxu0 %v237
    %3251 = vmatprep.subr.mxu0 0.0
    %3252 = vmatpush1.msra.mxu0 %v236
    %3253 = vmatprep.subr.mxu0 0.0
    %3254 = vmatpush1.msra.mxu0 %v235
    %3255 = vmatprep.subr.mxu0 0.0
    %3256 = vmatpush1.msra.mxu0 %v234
    %3257 = vmatprep.subr.mxu0 0.0
    %3258 = vmatpush1.msra.mxu0 %v233
    %3259 = vmatprep.subr.mxu0 0.0
    %3260 = vmatpush1.msra.mxu0 %v232
    %3261 = vmatprep.subr.mxu0 0.0
    %3262 = vmatpush1.msra.mxu0 %v231
    %3263 = vmatprep.subr.mxu0 0.0
    %3264 = vmatpush1.msra.mxu0 %v230
    %3265 = vmatprep.subr.mxu0 0.0
    %3266 = vmatpush2.msra.mxu0 %v261
    %3267 = vmatprep.subr.mxu0 0.0
    %3268 = vmatpush2.msra.mxu0 %v260
    %3269 = vmatprep.subr.mxu0 0.0
    %3270 = vmatpush2.msra.mxu0 %v259
    %3271 = vmatprep.subr.mxu0 0.0
    %3272 = vmatpush2.msra.mxu0 %v258
    %3273 = vmatprep.subr.mxu0 0.0
    %3274 = vmatpush2.msra.mxu0 %v257
    %3275 = vmatprep.subr.mxu0 0.0
    %3276 = vmatpush2.msra.mxu0 %v256
    %3277 = vmatprep.subr.mxu0 0.0
    %3278 = vmatpush2.msra.mxu0 %v255
    %3279 = vmatprep.subr.mxu0 0.0
    %3280 = vmatpush2.msra.mxu0 %v254
    %3281 = vmatprep.subr.mxu0 0.0
    %3282 = vmatpush2.msra.mxu0 %v253
    %3283 = vmatprep.subr.mxu0 0.0
    %3284 = vmatpush2.msra.mxu0 %v252
    %3285 = vmatprep.subr.mxu0 0.0
    %3286 = vmatpush2.msra.mxu0 %v251
    %3287 = vmatprep.subr.mxu0 0.0
    %3288 = vmatpush2.msra.mxu0 %v250
    %3289 = vmatprep.subr.mxu0 0.0
    %3290 = vmatpush2.msra.mxu0 %v249
    %3291 = vmatprep.subr.mxu0 0.0
    %3292 = vmatpush2.msra.mxu0 %v248
    %3293 = vmatprep.subr.mxu0 0.0
    %3294 = vmatpush2.msra.mxu0 %v247
    %3295 = vmatprep.subr.mxu0 0.0
    %3296 = vmatpush2.msra.mxu0 %v246
    %3297 = vmatprep.mubr.f32.mxu0 %v3150
    %3298 = vmatmul.mubr.f32.gmra.mxu0 %v3020
    %v3299 = vpop.f32.mrf.mxu0
    %v3300 = vadd.f32 %v3225, %v3299
    %v3301 = vpop.f32.mrf.mxu0
    %3302 = vmatprep.mubr.f32.mxu0 %v3151
    %3303 = vmatmul.mubr.f32.gmra.mxu0 %v3026
    %v3304 = vpop.f32.mrf.mxu0
    %v3305 = vadd.f32 %v3230, %v3304
    %v3306 = vpop.f32.mrf.mxu0
    %3307 = vdwg.mxu0
    %3308 = vmatprep.subr.mxu0 0.0
    %3309 = vmatpush1.msra.mxu0 %v277
    %3310 = vmatprep.subr.mxu0 0.0
    %3311 = vmatpush1.msra.mxu0 %v276
    %3312 = vmatprep.subr.mxu0 0.0
    %3313 = vmatpush1.msra.mxu0 %v275
    %3314 = vmatprep.subr.mxu0 0.0
    %3315 = vmatpush1.msra.mxu0 %v274
    %3316 = vmatprep.subr.mxu0 0.0
    %3317 = vmatpush1.msra.mxu0 %v273
    %3318 = vmatprep.subr.mxu0 0.0
    %3319 = vmatpush1.msra.mxu0 %v272
    %3320 = vmatprep.subr.mxu0 0.0
    %3321 = vmatpush1.msra.mxu0 %v271
    %3322 = vmatprep.subr.mxu0 0.0
    %3323 = vmatpush1.msra.mxu0 %v270
    %3324 = vmatprep.subr.mxu0 0.0
    %3325 = vmatpush1.msra.mxu0 %v269
    %3326 = vmatprep.subr.mxu0 0.0
    %3327 = vmatpush1.msra.mxu0 %v268
    %3328 = vmatprep.subr.mxu0 0.0
    %3329 = vmatpush1.msra.mxu0 %v267
    %3330 = vmatprep.subr.mxu0 0.0
    %3331 = vmatpush1.msra.mxu0 %v266
    %3332 = vmatprep.subr.mxu0 0.0
    %3333 = vmatpush1.msra.mxu0 %v265
    %3334 = vmatprep.subr.mxu0 0.0
    %3335 = vmatpush1.msra.mxu0 %v264
    %3336 = vmatprep.subr.mxu0 0.0
    %3337 = vmatpush1.msra.mxu0 %v263
    %3338 = vmatprep.subr.mxu0 0.0
    %3339 = vmatpush1.msra.mxu0 %v262
    %3340 = vmatprep.subr.mxu0 0.0
    %3341 = vmatpush2.msra.mxu0 %v293
    %3342 = vmatprep.subr.mxu0 0.0
    %3343 = vmatpush2.msra.mxu0 %v292
    %3344 = vmatprep.subr.mxu0 0.0
    %3345 = vmatpush2.msra.mxu0 %v291
    %3346 = vmatprep.subr.mxu0 0.0
    %3347 = vmatpush2.msra.mxu0 %v290
    %3348 = vmatprep.subr.mxu0 0.0
    %3349 = vmatpush2.msra.mxu0 %v289
    %3350 = vmatprep.subr.mxu0 0.0
    %3351 = vmatpush2.msra.mxu0 %v288
    %3352 = vmatprep.subr.mxu0 0.0
    %3353 = vmatpush2.msra.mxu0 %v287
    %3354 = vmatprep.subr.mxu0 0.0
    %3355 = vmatpush2.msra.mxu0 %v286
    %3356 = vmatprep.subr.mxu0 0.0
    %3357 = vmatpush2.msra.mxu0 %v285
    %3358 = vmatprep.subr.mxu0 0.0
    %3359 = vmatpush2.msra.mxu0 %v284
    %3360 = vmatprep.subr.mxu0 0.0
    %3361 = vmatpush2.msra.mxu0 %v283
    %3362 = vmatprep.subr.mxu0 0.0
    %3363 = vmatpush2.msra.mxu0 %v282
    %3364 = vmatprep.subr.mxu0 0.0
    %3365 = vmatpush2.msra.mxu0 %v281
    %3366 = vmatprep.subr.mxu0 0.0
    %3367 = vmatpush2.msra.mxu0 %v280
    %3368 = vmatprep.subr.mxu0 0.0
    %3369 = vmatpush2.msra.mxu0 %v279
    %3370 = vmatprep.subr.mxu0 0.0
    %3371 = vmatpush2.msra.mxu0 %v278
    %3372 = vmatprep.mubr.f32.mxu0 %v3085
    %3373 = vmatmul.mubr.f32.gmra.mxu0 %v3084
    %v3374 = vpop.f32.mrf.mxu0
    %v3375 = vadd.f32 %v3300, %v3374
    %v3376 = vpop.f32.mrf.mxu0
    %3377 = vmatprep.mubr.f32.mxu0 %v3088
    %3378 = vmatmul.mubr.f32.gmra.mxu0 %v3087
    %v3379 = vpop.f32.mrf.mxu0
    %v3380 = vadd.f32 %v3305, %v3379
    %v3381 = vpop.f32.mrf.mxu0
    %3382 = vdwg.mxu0
    %3383 = vmatprep.subr.mxu0 0.0
    %3384 = vmatpush1.msra.mxu0 %v309
    %3385 = vmatprep.subr.mxu0 0.0
    %3386 = vmatpush1.msra.mxu0 %v308
    %3387 = vmatprep.subr.mxu0 0.0
    %3388 = vmatpush1.msra.mxu0 %v307
    %3389 = vmatprep.subr.mxu0 0.0
    %3390 = vmatpush1.msra.mxu0 %v306
    %3391 = vmatprep.subr.mxu0 0.0
    %3392 = vmatpush1.msra.mxu0 %v305
    %3393 = vmatprep.subr.mxu0 0.0
    %3394 = vmatpush1.msra.mxu0 %v304
    %3395 = vmatprep.subr.mxu0 0.0
    %3396 = vmatpush1.msra.mxu0 %v303
    %3397 = vmatprep.subr.mxu0 0.0
    %3398 = vmatpush1.msra.mxu0 %v302
    %3399 = vmatprep.subr.mxu0 0.0
    %3400 = vmatpush1.msra.mxu0 %v301
    %3401 = vmatprep.subr.mxu0 0.0
    %3402 = vmatpush1.msra.mxu0 %v300
    %3403 = vmatprep.subr.mxu0 0.0
    %3404 = vmatpush1.msra.mxu0 %v299
    %3405 = vmatprep.subr.mxu0 0.0
    %3406 = vmatpush1.msra.mxu0 %v298
    %3407 = vmatprep.subr.mxu0 0.0
    %3408 = vmatpush1.msra.mxu0 %v297
    %3409 = vmatprep.subr.mxu0 0.0
    %3410 = vmatpush1.msra.mxu0 %v296
    %3411 = vmatprep.subr.mxu0 0.0
    %3412 = vmatpush1.msra.mxu0 %v295
    %3413 = vmatprep.subr.mxu0 0.0
    %3414 = vmatpush1.msra.mxu0 %v294
    %3415 = vmatprep.subr.mxu0 0.0
    %3416 = vmatpush2.msra.mxu0 %v325
    %3417 = vmatprep.subr.mxu0 0.0
    %3418 = vmatpush2.msra.mxu0 %v324
    %3419 = vmatprep.subr.mxu0 0.0
    %3420 = vmatpush2.msra.mxu0 %v323
    %3421 = vmatprep.subr.mxu0 0.0
    %3422 = vmatpush2.msra.mxu0 %v322
    %3423 = vmatprep.subr.mxu0 0.0
    %3424 = vmatpush2.msra.mxu0 %v321
    %3425 = vmatprep.subr.mxu0 0.0
    %3426 = vmatpush2.msra.mxu0 %v320
    %3427 = vmatprep.subr.mxu0 0.0
    %3428 = vmatpush2.msra.mxu0 %v319
    %3429 = vmatprep.subr.mxu0 0.0
    %3430 = vmatpush2.msra.mxu0 %v318
    %3431 = vmatprep.subr.mxu0 0.0
    %3432 = vmatpush2.msra.mxu0 %v317
    %3433 = vmatprep.subr.mxu0 0.0
    %3434 = vmatpush2.msra.mxu0 %v316
    %3435 = vmatprep.subr.mxu0 0.0
    %3436 = vmatpush2.msra.mxu0 %v315
    %3437 = vmatprep.subr.mxu0 0.0
    %3438 = vmatpush2.msra.mxu0 %v314
    %3439 = vmatprep.subr.mxu0 0.0
    %3440 = vmatpush2.msra.mxu0 %v313
    %3441 = vmatprep.subr.mxu0 0.0
    %3442 = vmatpush2.msra.mxu0 %v312
    %3443 = vmatprep.subr.mxu0 0.0
    %3444 = vmatpush2.msra.mxu0 %v311
    %3445 = vmatprep.subr.mxu0 0.0
    %3446 = vmatpush2.msra.mxu0 %v310
    %3447 = vmatprep.mubr.f32.mxu0 %v3152
    %3448 = vmatmul.mubr.f32.gmra.mxu0 %v3086
    %v3449 = vpop.f32.mrf.mxu0
    %v3450 = vadd.f32 %v3375, %v3449
    %v3451 = vpop.f32.mrf.mxu0
    %3452 = vmatprep.mubr.f32.mxu0 %v3153
    %3453 = vmatmul.mubr.f32.gmra.mxu0 %v3089
    %v3454 = vpop.f32.mrf.mxu0
    %v3455 = vadd.f32 %v3380, %v3454
    %v3456 = vpop.f32.mrf.mxu0
    %3457 = vdwg.mxu0
    %3458 = vmatprep.subr.mxu0 0.0
    %3459 = vmatpush1.msra.mxu0 %v341
    %3460 = vmatprep.subr.mxu0 0.0
    %3461 = vmatpush1.msra.mxu0 %v340
    %3462 = vmatprep.subr.mxu0 0.0
    %3463 = vmatpush1.msra.mxu0 %v339
    %3464 = vmatprep.subr.mxu0 0.0
    %3465 = vmatpush1.msra.mxu0 %v338
    %3466 = vmatprep.subr.mxu0 0.0
    %3467 = vmatpush1.msra.mxu0 %v337
    %3468 = vmatprep.subr.mxu0 0.0
    %3469 = vmatpush1.msra.mxu0 %v336
    %3470 = vmatprep.subr.mxu0 0.0
    %3471 = vmatpush1.msra.mxu0 %v335
    %3472 = vmatprep.subr.mxu0 0.0
    %3473 = vmatpush1.msra.mxu0 %v334
    %3474 = vmatprep.subr.mxu0 0.0
    %3475 = vmatpush1.msra.mxu0 %v333
    %3476 = vmatprep.subr.mxu0 0.0
    %3477 = vmatpush1.msra.mxu0 %v332
    %3478 = vmatprep.subr.mxu0 0.0
    %3479 = vmatpush1.msra.mxu0 %v331
    %3480 = vmatprep.subr.mxu0 0.0
    %3481 = vmatpush1.msra.mxu0 %v330
    %3482 = vmatprep.subr.mxu0 0.0
    %3483 = vmatpush1.msra.mxu0 %v329
    %3484 = vmatprep.subr.mxu0 0.0
    %3485 = vmatpush1.msra.mxu0 %v328
    %3486 = vmatprep.subr.mxu0 0.0
    %3487 = vmatpush1.msra.mxu0 %v327
    %3488 = vmatprep.subr.mxu0 0.0
    %3489 = vmatpush1.msra.mxu0 %v326
    %3490 = vmatprep.subr.mxu0 0.0
    %3491 = vmatpush2.msra.mxu0 %v357
    %3492 = vmatprep.subr.mxu0 0.0
    %3493 = vmatpush2.msra.mxu0 %v356
    %3494 = vmatprep.subr.mxu0 0.0
    %3495 = vmatpush2.msra.mxu0 %v355
    %3496 = vmatprep.subr.mxu0 0.0
    %3497 = vmatpush2.msra.mxu0 %v354
    %3498 = vmatprep.subr.mxu0 0.0
    %3499 = vmatpush2.msra.mxu0 %v353
    %3500 = vmatprep.subr.mxu0 0.0
    %3501 = vmatpush2.msra.mxu0 %v352
    %3502 = vmatprep.subr.mxu0 0.0
    %3503 = vmatpush2.msra.mxu0 %v351
    %3504 = vmatprep.subr.mxu0 0.0
    %3505 = vmatpush2.msra.mxu0 %v350
    %3506 = vmatprep.subr.mxu0 0.0
    %3507 = vmatpush2.msra.mxu0 %v349
    %3508 = vmatprep.subr.mxu0 0.0
    %3509 = vmatpush2.msra.mxu0 %v348
    %3510 = vmatprep.subr.mxu0 0.0
    %3511 = vmatpush2.msra.mxu0 %v347
    %3512 = vmatprep.subr.mxu0 0.0
    %3513 = vmatpush2.msra.mxu0 %v346
    %3514 = vmatprep.subr.mxu0 0.0
    %3515 = vmatpush2.msra.mxu0 %v345
    %3516 = vmatprep.subr.mxu0 0.0
    %3517 = vmatpush2.msra.mxu0 %v344
    %3518 = vmatprep.subr.mxu0 0.0
    %3519 = vmatpush2.msra.mxu0 %v343
    %3520 = vmatprep.subr.mxu0 0.0
    %3521 = vmatpush2.msra.mxu0 %v342
    %3522 = vmatprep.mubr.f32.mxu0 %v3137
    %3523 = vmatmul.mubr.f32.gmra.mxu0 %v3136
    %v3524 = vpop.f32.mrf.mxu0
    %v3525 = vadd.f32 %v3450, %v3524
    %v3526 = vpop.f32.mrf.mxu0
    %3527 = vmatprep.mubr.f32.mxu0 %v3140
    %3528 = vmatmul.mubr.f32.gmra.mxu0 %v3139
    %v3529 = vpop.f32.mrf.mxu0
    %v3530 = vadd.f32 %v3455, %v3529
    %v3531 = vpop.f32.mrf.mxu0
    %3532 = vdwg.mxu0
    %3533 = vmatprep.subr.mxu0 0.0
    %3534 = vmatpush1.msra.mxu0 %v373
    %3535 = vmatprep.subr.mxu0 0.0
    %3536 = vmatpush1.msra.mxu0 %v372
    %3537 = vmatprep.subr.mxu0 0.0
    %3538 = vmatpush1.msra.mxu0 %v371
    %3539 = vmatprep.subr.mxu0 0.0
    %3540 = vmatpush1.msra.mxu0 %v370
    %3541 = vmatprep.subr.mxu0 0.0
    %3542 = vmatpush1.msra.mxu0 %v369
    %3543 = vmatprep.subr.mxu0 0.0
    %3544 = vmatpush1.msra.mxu0 %v368
    %3545 = vmatprep.subr.mxu0 0.0
    %3546 = vmatpush1.msra.mxu0 %v367
    %3547 = vmatprep.subr.mxu0 0.0
    %3548 = vmatpush1.msra.mxu0 %v366
    %3549 = vmatprep.subr.mxu0 0.0
    %3550 = vmatpush1.msra.mxu0 %v365
    %3551 = vmatprep.subr.mxu0 0.0
    %3552 = vmatpush1.msra.mxu0 %v364
    %3553 = vmatprep.subr.mxu0 0.0
    %3554 = vmatpush1.msra.mxu0 %v363
    %3555 = vmatprep.subr.mxu0 0.0
    %3556 = vmatpush1.msra.mxu0 %v362
    %3557 = vmatprep.subr.mxu0 0.0
    %3558 = vmatpush1.msra.mxu0 %v361
    %3559 = vmatprep.subr.mxu0 0.0
    %3560 = vmatpush1.msra.mxu0 %v360
    %3561 = vmatprep.subr.mxu0 0.0
    %3562 = vmatpush1.msra.mxu0 %v359
    %3563 = vmatprep.subr.mxu0 0.0
    %3564 = vmatpush1.msra.mxu0 %v358
    %3565 = vmatprep.subr.mxu0 0.0
    %3566 = vmatpush2.msra.mxu0 0.0
    %3567 = vmatprep.subr.mxu0 0.0
    %3568 = vmatpush2.msra.mxu0 0.0
    %3569 = vmatprep.subr.mxu0 0.0
    %3570 = vmatpush2.msra.mxu0 0.0
    %3571 = vmatprep.subr.mxu0 0.0
    %3572 = vmatpush2.msra.mxu0 0.0
    %3573 = vmatprep.subr.mxu0 0.0
    %3574 = vmatpush2.msra.mxu0 0.0
    %3575 = vmatprep.subr.mxu0 0.0
    %3576 = vmatpush2.msra.mxu0 0.0
    %3577 = vmatprep.subr.mxu0 0.0
    %3578 = vmatpush2.msra.mxu0 %v383
    %3579 = vmatprep.subr.mxu0 0.0
    %3580 = vmatpush2.msra.mxu0 %v382
    %3581 = vmatprep.subr.mxu0 0.0
    %3582 = vmatpush2.msra.mxu0 %v381
    %3583 = vmatprep.subr.mxu0 0.0
    %3584 = vmatpush2.msra.mxu0 %v380
    %3585 = vmatprep.subr.mxu0 0.0
    %3586 = vmatpush2.msra.mxu0 %v379
    %3587 = vmatprep.subr.mxu0 0.0
    %3588 = vmatpush2.msra.mxu0 %v378
    %3589 = vmatprep.subr.mxu0 0.0
    %3590 = vmatpush2.msra.mxu0 %v377
    %3591 = vmatprep.subr.mxu0 0.0
    %3592 = vmatpush2.msra.mxu0 %v376
    %3593 = vmatprep.subr.mxu0 0.0
    %3594 = vmatpush2.msra.mxu0 %v375
    %3595 = vmatprep.subr.mxu0 0.0
    %3596 = vmatpush2.msra.mxu0 %v374
    %3597 = vmatprep.mubr.f32.mxu0 %v3154
    %3598 = vmatmul.mubr.f32.gmra.mxu0 %v3138
    %v3599 = vpop.f32.mrf.mxu0
    %v3600 = vadd.f32 %v3525, %v3599
    %v3601 = vpop.f32.mrf.mxu0
    %3602 = vmatprep.mubr.f32.mxu0 %v3156
    %3603 = vmatmul.mubr.f32.gmra.mxu0 %v3141
    %v3604 = vpop.f32.mrf.mxu0
    %v3605 = vadd.f32 %v3530, %v3604
    %v3606 = vpop.f32.mrf.mxu0
    %3607 = vdwg.mxu0
    %v3608 = vtanh.pop %v3600
    %v3609 = vtanh.pop %v3605
    %3612 = vrot.lane.b32.xlu0 %v3608, 120
    %v3613 = vpop.permute.xlu0 %3612
    %3614 = vrot.lane.b32.xlu0 %v3609, 120
    %v3615 = vpop.permute.xlu0 %3614
    %v3618 = vmax.f32 %v3608, %v3613
    %v3619 = vmax.f32 %v3609, %v3615
    %v3622 = vrot.slane %v3618, 1
    %v3623 = vrot.slane %v3619, 1
    %v3624 = vsel %vm529, %v3622, %v3623
    %v3627 = vmax.f32 %v3618, %v3624
    %v3628 = vmax.f32 %v3619, %v3623
    %v3630 = vrot.slane %v3627, 2
    %3631 = vrot.lane.b32.xlu0 %v3630, 120
    %v3632 = vpop.permute.xlu0 %3631
    %v3634 = vrot.slane %v3627, 4
    %3635 = vrot.lane.b32.xlu0 %v3634, 112
    %v3636 = vpop.permute.xlu0 %3635
    %v3638 = vrot.slane %v3627, 6
    %3639 = vrot.lane.b32.xlu0 %v3638, 104
    %v3640 = vpop.permute.xlu0 %3639
    %3643 = vrot.lane.b32.xlu0 %v3628, 96
    %v3644 = vpop.permute.xlu0 %3643
    %v3646 = vrot.slane %v3628, 2
    %3647 = vrot.lane.b32.xlu0 %v3646, 88
    %v3648 = vpop.permute.xlu0 %3647
    %v3650 = vrot.slane %v3628, 4
    %3651 = vrot.lane.b32.xlu0 %v3650, 80
    %v3652 = vpop.permute.xlu0 %3651
    %v3654 = vrot.slane %v3628, 6
    %3655 = vrot.lane.b32.xlu0 %v3654, 72
    %v3656 = vpop.permute.xlu0 %3655
    %v3658 = vsel %vm2103, %v3627, %v3632
    %v3659 = vsel %vm1165, %v3632, %v3636
    %v3660 = vsel %vm2106, %v3636, %v3640
    %v3661 = vsel %vm699, %v3640, %v3644
    %v3662 = vsel %vm2109, %v3644, %v3648
    %v3663 = vsel %vm1598, %v3648, %v3652
    %v3664 = vsel %vm2112, %v3652, %v3656
    %v3672 = vrot.slane %v3658, 7
    %v3673 = vrot.slane %v3659, 7
    %v3674 = vrot.slane %v3660, 7
    %v3675 = vrot.slane %v3661, 7
    %v3676 = vrot.slane %v3662, 7
    %v3677 = vrot.slane %v3663, 7
    %v3678 = vrot.slane %v3664, 7
    %v3679 = vrot.slane %v3656, 7
    %vm3688 = vcmask 1040384
    %v3689 = vsel %vm3688, %v2104, %v3672
    %v3690 = vsel %vm3688, %v2105, %v3673
    %v3691 = vsel %vm3688, %v2107, %v3674
    %v3692 = vsel %vm3688, %v2108, %v3675
    %v3693 = vsel %vm3688, %v2110, %v3676
    %v3694 = vsel %vm3688, %v2111, %v3677
    %v3695 = vsel %vm3688, %v2113, %v3678
    %v3696 = vsel %vm3688, %v2101, %v3679
    %v3698 = vlaneseq
    %v3699 = vshrl.u32 %v3698, 7
    %v3700 = vsub.s32 0, %v3699
    %v3701 = vrot.slane %v505, %v3700
    %v3704 = vsel %vm694, %v3696, 0
    %3706 = vmatprep.subr.mxu0 0.0
    %3707 = vmatpush1.msra.mxu0 %v400
    %3708 = vmatprep.subr.mxu0 0.0
    %3709 = vmatpush1.msra.mxu0 %v399
    %3710 = vmatprep.subr.mxu0 0.0
    %3711 = vmatpush1.msra.mxu0 %v398
    %3712 = vmatprep.subr.mxu0 0.0
    %3713 = vmatpush1.msra.mxu0 %v397
    %3714 = vmatprep.subr.mxu0 0.0
    %3715 = vmatpush1.msra.mxu0 %v396
    %3716 = vmatprep.subr.mxu0 0.0
    %3717 = vmatpush1.msra.mxu0 %v395
    %3718 = vmatprep.subr.mxu0 0.0
    %3719 = vmatpush1.msra.mxu0 %v394
    %3720 = vmatprep.subr.mxu0 0.0
    %3721 = vmatpush1.msra.mxu0 %v393
    %3722 = vmatprep.subr.mxu0 0.0
    %3723 = vmatpush1.msra.mxu0 %v392
    %3724 = vmatprep.subr.mxu0 0.0
    %3725 = vmatpush1.msra.mxu0 %v391
    %3726 = vmatprep.subr.mxu0 0.0
    %3727 = vmatpush1.msra.mxu0 %v390
    %3728 = vmatprep.subr.mxu0 0.0
    %3729 = vmatpush1.msra.mxu0 %v389
    %3730 = vmatprep.subr.mxu0 0.0
    %3731 = vmatpush1.msra.mxu0 %v388
    %3732 = vmatprep.subr.mxu0 0.0
    %3733 = vmatpush1.msra.mxu0 %v387
    %3734 = vmatprep.subr.mxu0 0.0
    %3735 = vmatpush1.msra.mxu0 %v386
    %3736 = vmatprep.subr.mxu0 0.0
    %3737 = vmatpush1.msra.mxu0 %v385
    %3738 = vmatprep.subr.mxu0 0.0
    %3739 = vmatpush2.msra.mxu0 %v416
    %3740 = vmatprep.subr.mxu0 0.0
    %3741 = vmatpush2.msra.mxu0 %v415
    %3742 = vmatprep.subr.mxu0 0.0
    %3743 = vmatpush2.msra.mxu0 %v414
    %3744 = vmatprep.subr.mxu0 0.0
    %3745 = vmatpush2.msra.mxu0 %v413
    %3746 = vmatprep.subr.mxu0 0.0
    %3747 = vmatpush2.msra.mxu0 %v412
    %3748 = vmatprep.subr.mxu0 0.0
    %3749 = vmatpush2.msra.mxu0 %v411
    %3750 = vmatprep.subr.mxu0 0.0
    %3751 = vmatpush2.msra.mxu0 %v410
    %3752 = vmatprep.subr.mxu0 0.0
    %3753 = vmatpush2.msra.mxu0 %v409
    %3754 = vmatprep.subr.mxu0 0.0
    %3755 = vmatpush2.msra.mxu0 %v408
    %3756 = vmatprep.subr.mxu0 0.0
    %3757 = vmatpush2.msra.mxu0 %v407
    %3758 = vmatprep.subr.mxu0 0.0
    %3759 = vmatpush2.msra.mxu0 %v406
    %3760 = vmatprep.subr.mxu0 0.0
    %3761 = vmatpush2.msra.mxu0 %v405
    %3762 = vmatprep.subr.mxu0 0.0
    %3763 = vmatpush2.msra.mxu0 %v404
    %3764 = vmatprep.subr.mxu0 0.0
    %3765 = vmatpush2.msra.mxu0 %v403
    %3766 = vmatprep.subr.mxu0 0.0
    %3767 = vmatpush2.msra.mxu0 %v402
    %3768 = vmatprep.subr.mxu0 0.0
    %3769 = vmatpush2.msra.mxu0 %v401
    %3770 = vmatprep.mubr.f32.mxu0 %v3690
    %3771 = vmatmul.mubr.f32.gmra.mxu0 %v3689
    %v3772 = vpop.f32.mrf.mxu0
    %v3773 = vadd.f32 %v3701, %v3772
    %v3774 = vpop.f32.mrf.mxu0
    %3775 = vdwg.mxu0
    %3776 = vmatprep.subr.mxu0 0.0
    %3777 = vmatpush1.msra.mxu0 %v432
    %3778 = vmatprep.subr.mxu0 0.0
    %3779 = vmatpush1.msra.mxu0 %v431
    %3780 = vmatprep.subr.mxu0 0.0
    %3781 = vmatpush1.msra.mxu0 %v430
    %3782 = vmatprep.subr.mxu0 0.0
    %3783 = vmatpush1.msra.mxu0 %v429
    %3784 = vmatprep.subr.mxu0 0.0
    %3785 = vmatpush1.msra.mxu0 %v428
    %3786 = vmatprep.subr.mxu0 0.0
    %3787 = vmatpush1.msra.mxu0 %v427
    %3788 = vmatprep.subr.mxu0 0.0
    %3789 = vmatpush1.msra.mxu0 %v426
    %3790 = vmatprep.subr.mxu0 0.0
    %3791 = vmatpush1.msra.mxu0 %v425
    %3792 = vmatprep.subr.mxu0 0.0
    %3793 = vmatpush1.msra.mxu0 %v424
    %3794 = vmatprep.subr.mxu0 0.0
    %3795 = vmatpush1.msra.mxu0 %v423
    %3796 = vmatprep.subr.mxu0 0.0
    %3797 = vmatpush1.msra.mxu0 %v422
    %3798 = vmatprep.subr.mxu0 0.0
    %3799 = vmatpush1.msra.mxu0 %v421
    %3800 = vmatprep.subr.mxu0 0.0
    %3801 = vmatpush1.msra.mxu0 %v420
    %3802 = vmatprep.subr.mxu0 0.0
    %3803 = vmatpush1.msra.mxu0 %v419
    %3804 = vmatprep.subr.mxu0 0.0
    %3805 = vmatpush1.msra.mxu0 %v418
    %3806 = vmatprep.subr.mxu0 0.0
    %3807 = vmatpush1.msra.mxu0 %v417
    %3808 = vmatprep.subr.mxu0 0.0
    %3809 = vmatpush2.msra.mxu0 %v448
    %3810 = vmatprep.subr.mxu0 0.0
    %3811 = vmatpush2.msra.mxu0 %v447
    %3812 = vmatprep.subr.mxu0 0.0
    %3813 = vmatpush2.msra.mxu0 %v446
    %3814 = vmatprep.subr.mxu0 0.0
    %3815 = vmatpush2.msra.mxu0 %v445
    %3816 = vmatprep.subr.mxu0 0.0
    %3817 = vmatpush2.msra.mxu0 %v444
    %3818 = vmatprep.subr.mxu0 0.0
    %3819 = vmatpush2.msra.mxu0 %v443
    %3820 = vmatprep.subr.mxu0 0.0
    %3821 = vmatpush2.msra.mxu0 %v442
    %3822 = vmatprep.subr.mxu0 0.0
    %3823 = vmatpush2.msra.mxu0 %v441
    %3824 = vmatprep.subr.mxu0 0.0
    %3825 = vmatpush2.msra.mxu0 %v440
    %3826 = vmatprep.subr.mxu0 0.0
    %3827 = vmatpush2.msra.mxu0 %v439
    %3828 = vmatprep.subr.mxu0 0.0
    %3829 = vmatpush2.msra.mxu0 %v438
    %3830 = vmatprep.subr.mxu0 0.0
    %3831 = vmatpush2.msra.mxu0 %v437
    %3832 = vmatprep.subr.mxu0 0.0
    %3833 = vmatpush2.msra.mxu0 %v436
    %3834 = vmatprep.subr.mxu0 0.0
    %3835 = vmatpush2.msra.mxu0 %v435
    %3836 = vmatprep.subr.mxu0 0.0
    %3837 = vmatpush2.msra.mxu0 %v434
    %3838 = vmatprep.subr.mxu0 0.0
    %3839 = vmatpush2.msra.mxu0 %v433
    %3840 = vmatprep.mubr.f32.mxu0 %v3692
    %3841 = vmatmul.mubr.f32.gmra.mxu0 %v3691
    %v3842 = vpop.f32.mrf.mxu0
    %v3843 = vadd.f32 %v3773, %v3842
    %v3844 = vpop.f32.mrf.mxu0
    %3845 = vdwg.mxu0
    %3846 = vmatprep.subr.mxu0 0.0
    %3847 = vmatpush1.msra.mxu0 %v464
    %3848 = vmatprep.subr.mxu0 0.0
    %3849 = vmatpush1.msra.mxu0 %v463
    %3850 = vmatprep.subr.mxu0 0.0
    %3851 = vmatpush1.msra.mxu0 %v462
    %3852 = vmatprep.subr.mxu0 0.0
    %3853 = vmatpush1.msra.mxu0 %v461
    %3854 = vmatprep.subr.mxu0 0.0
    %3855 = vmatpush1.msra.mxu0 %v460
    %3856 = vmatprep.subr.mxu0 0.0
    %3857 = vmatpush1.msra.mxu0 %v459
    %3858 = vmatprep.subr.mxu0 0.0
    %3859 = vmatpush1.msra.mxu0 %v458
    %3860 = vmatprep.subr.mxu0 0.0
    %3861 = vmatpush1.msra.mxu0 %v457
    %3862 = vmatprep.subr.mxu0 0.0
    %3863 = vmatpush1.msra.mxu0 %v456
    %3864 = vmatprep.subr.mxu0 0.0
    %3865 = vmatpush1.msra.mxu0 %v455
    %3866 = vmatprep.subr.mxu0 0.0
    %3867 = vmatpush1.msra.mxu0 %v454
    %3868 = vmatprep.subr.mxu0 0.0
    %3869 = vmatpush1.msra.mxu0 %v453
    %3870 = vmatprep.subr.mxu0 0.0
    %3871 = vmatpush1.msra.mxu0 %v452
    %3872 = vmatprep.subr.mxu0 0.0
    %3873 = vmatpush1.msra.mxu0 %v451
    %3874 = vmatprep.subr.mxu0 0.0
    %3875 = vmatpush1.msra.mxu0 %v450
    %3876 = vmatprep.subr.mxu0 0.0
    %3877 = vmatpush1.msra.mxu0 %v449
    %3878 = vmatprep.subr.mxu0 0.0
    %3879 = vmatpush2.msra.mxu0 %v480
    %3880 = vmatprep.subr.mxu0 0.0
    %3881 = vmatpush2.msra.mxu0 %v479
    %3882 = vmatprep.subr.mxu0 0.0
    %3883 = vmatpush2.msra.mxu0 %v478
    %3884 = vmatprep.subr.mxu0 0.0
    %3885 = vmatpush2.msra.mxu0 %v477
    %3886 = vmatprep.subr.mxu0 0.0
    %3887 = vmatpush2.msra.mxu0 %v476
    %3888 = vmatprep.subr.mxu0 0.0
    %3889 = vmatpush2.msra.mxu0 %v475
    %3890 = vmatprep.subr.mxu0 0.0
    %3891 = vmatpush2.msra.mxu0 %v474
    %3892 = vmatprep.subr.mxu0 0.0
    %3893 = vmatpush2.msra.mxu0 %v473
    %3894 = vmatprep.subr.mxu0 0.0
    %3895 = vmatpush2.msra.mxu0 %v472
    %3896 = vmatprep.subr.mxu0 0.0
    %3897 = vmatpush2.msra.mxu0 %v471
    %3898 = vmatprep.subr.mxu0 0.0
    %3899 = vmatpush2.msra.mxu0 %v470
    %3900 = vmatprep.subr.mxu0 0.0
    %3901 = vmatpush2.msra.mxu0 %v469
    %3902 = vmatprep.subr.mxu0 0.0
    %3903 = vmatpush2.msra.mxu0 %v468
    %3904 = vmatprep.subr.mxu0 0.0
    %3905 = vmatpush2.msra.mxu0 %v467
    %3906 = vmatprep.subr.mxu0 0.0
    %3907 = vmatpush2.msra.mxu0 %v466
    %3908 = vmatprep.subr.mxu0 0.0
    %3909 = vmatpush2.msra.mxu0 %v465
    %3910 = vmatprep.mubr.f32.mxu0 %v3694
    %3911 = vmatmul.mubr.f32.gmra.mxu0 %v3693
    %v3912 = vpop.f32.mrf.mxu0
    %v3913 = vadd.f32 %v3843, %v3912
    %v3914 = vpop.f32.mrf.mxu0
    %3915 = vdwg.mxu0
    %3916 = vmatprep.subr.mxu0 0.0
    %3917 = vmatpush1.msra.mxu0 %v496
    %3918 = vmatprep.subr.mxu0 0.0
    %3919 = vmatpush1.msra.mxu0 %v495
    %3920 = vmatprep.subr.mxu0 0.0
    %3921 = vmatpush1.msra.mxu0 %v494
    %3922 = vmatprep.subr.mxu0 0.0
    %3923 = vmatpush1.msra.mxu0 %v493
    %3924 = vmatprep.subr.mxu0 0.0
    %3925 = vmatpush1.msra.mxu0 %v492
    %3926 = vmatprep.subr.mxu0 0.0
    %3927 = vmatpush1.msra.mxu0 %v491
    %3928 = vmatprep.subr.mxu0 0.0
    %3929 = vmatpush1.msra.mxu0 %v490
    %3930 = vmatprep.subr.mxu0 0.0
    %3931 = vmatpush1.msra.mxu0 %v489
    %3932 = vmatprep.subr.mxu0 0.0
    %3933 = vmatpush1.msra.mxu0 %v488
    %3934 = vmatprep.subr.mxu0 0.0
    %3935 = vmatpush1.msra.mxu0 %v487
    %3936 = vmatprep.subr.mxu0 0.0
    %3937 = vmatpush1.msra.mxu0 %v486
    %3938 = vmatprep.subr.mxu0 0.0
    %3939 = vmatpush1.msra.mxu0 %v485
    %3940 = vmatprep.subr.mxu0 0.0
    %3941 = vmatpush1.msra.mxu0 %v484
    %3942 = vmatprep.subr.mxu0 0.0
    %3943 = vmatpush1.msra.mxu0 %v483
    %3944 = vmatprep.subr.mxu0 0.0
    %3945 = vmatpush1.msra.mxu0 %v482
    %3946 = vmatprep.subr.mxu0 0.0
    %3947 = vmatpush1.msra.mxu0 %v481
    %3948 = vmatprep.subr.mxu0 0.0
    %3949 = vmatpush2.msra.mxu0 0.0
    %3950 = vmatprep.subr.mxu0 0.0
    %3951 = vmatpush2.msra.mxu0 0.0
    %3952 = vmatprep.subr.mxu0 0.0
    %3953 = vmatpush2.msra.mxu0 0.0
    %3954 = vmatprep.subr.mxu0 0.0
    %3955 = vmatpush2.msra.mxu0 0.0
    %3956 = vmatprep.subr.mxu0 0.0
    %3957 = vmatpush2.msra.mxu0 0.0
    %3958 = vmatprep.subr.mxu0 0.0
    %3959 = vmatpush2.msra.mxu0 0.0
    %3960 = vmatprep.subr.mxu0 0.0
    %3961 = vmatpush2.msra.mxu0 0.0
    %3962 = vmatprep.subr.mxu0 0.0
    %3963 = vmatpush2.msra.mxu0 0.0
    %3964 = vmatprep.subr.mxu0 0.0
    %3965 = vmatpush2.msra.mxu0 %v504
    %3966 = vmatprep.subr.mxu0 0.0
    %3967 = vmatpush2.msra.mxu0 %v503
    %3968 = vmatprep.subr.mxu0 0.0
    %3969 = vmatpush2.msra.mxu0 %v502
    %3970 = vmatprep.subr.mxu0 0.0
    %3971 = vmatpush2.msra.mxu0 %v501
    %3972 = vmatprep.subr.mxu0 0.0
    %3973 = vmatpush2.msra.mxu0 %v500
    %3974 = vmatprep.subr.mxu0 0.0
    %3975 = vmatpush2.msra.mxu0 %v499
    %3976 = vmatprep.subr.mxu0 0.0
    %3977 = vmatpush2.msra.mxu0 %v498
    %3978 = vmatprep.subr.mxu0 0.0
    %3979 = vmatpush2.msra.mxu0 %v497
    %3980 = vmatprep.mubr.f32.mxu0 %v3704
    %3981 = vmatmul.mubr.f32.gmra.mxu0 %v3695
    %v3982 = vpop.f32.mrf.mxu0
    %v3983 = vadd.f32 %v3913, %v3982
    %v3984 = vpop.f32.mrf.mxu0
    %3985 = vdwg.mxu0
    %v3986 = vtanh.pop %v3983
    %v3988 = vlaneseq
    %v3989 = vshrl.u32 %v3988, 7
    %v3990 = vsub.s32 0, %v3989
    %v3991 = vrot.slane %v510, %v3990
    %v3994 = vsel %vm689, %v3986, 0
    %3996 = vmatprep.subr.mxu0 0.0
    %3997 = vmatpush1.msra.mxu0 0.0
    %3998 = vmatprep.subr.mxu0 0.0
    %3999 = vmatpush1.msra.mxu0 0.0
    %4000 = vmatprep.subr.mxu0 0.0
    %4001 = vmatpush1.msra.mxu0 0.0
    %4002 = vmatprep.subr.mxu0 0.0
    %4003 = vmatpush1.msra.mxu0 0.0
    %4004 = vmatprep.subr.mxu0 0.0
    %4005 = vmatpush1.msra.mxu0 0.0
    %4006 = vmatprep.subr.mxu0 0.0
    %4007 = vmatpush1.msra.mxu0 0.0
    %4008 = vmatprep.subr.mxu0 0.0
    %4009 = vmatpush1.msra.mxu0 0.0
    %4010 = vmatprep.subr.mxu0 0.0
    %4011 = vmatpush1.msra.mxu0 0.0
    %4012 = vmatprep.subr.mxu0 0.0
    %4013 = vmatpush1.msra.mxu0 0.0
    %4014 = vmatprep.subr.mxu0 0.0
    %4015 = vmatpush1.msra.mxu0 0.0
    %4016 = vmatprep.subr.mxu0 0.0
    %4017 = vmatpush1.msra.mxu0 0.0
    %4018 = vmatprep.subr.mxu0 0.0
    %4019 = vmatpush1.msra.mxu0 0.0
    %4020 = vmatprep.subr.mxu0 0.0
    %4021 = vmatpush1.msra.mxu0 %v509
    %4022 = vmatprep.subr.mxu0 0.0
    %4023 = vmatpush1.msra.mxu0 %v508
    %4024 = vmatprep.subr.mxu0 0.0
    %4025 = vmatpush1.msra.mxu0 %v507
    %4026 = vmatprep.subr.mxu0 0.0
    %4027 = vmatpush1.msra.mxu0 %v506
    %4028 = vmatprep.subr.mxu0 0.0
    %4029 = vmatpush2.msra.mxu0 0.0
    %4030 = vmatprep.subr.mxu0 0.0
    %4031 = vmatpush2.msra.mxu0 0.0
    %4032 = vmatprep.subr.mxu0 0.0
    %4033 = vmatpush2.msra.mxu0 0.0
    %4034 = vmatprep.subr.mxu0 0.0
    %4035 = vmatpush2.msra.mxu0 0.0
    %4036 = vmatprep.subr.mxu0 0.0
    %4037 = vmatpush2.msra.mxu0 0.0
    %4038 = vmatprep.subr.mxu0 0.0
    %4039 = vmatpush2.msra.mxu0 0.0
    %4040 = vmatprep.subr.mxu0 0.0
    %4041 = vmatpush2.msra.mxu0 0.0
    %4042 = vmatprep.subr.mxu0 0.0
    %4043 = vmatpush2.msra.mxu0 0.0
    %4044 = vmatprep.subr.mxu0 0.0
    %4045 = vmatpush2.msra.mxu0 0.0
    %4046 = vmatprep.subr.mxu0 0.0
    %4047 = vmatpush2.msra.mxu0 0.0
    %4048 = vmatprep.subr.mxu0 0.0
    %4049 = vmatpush2.msra.mxu0 0.0
    %4050 = vmatprep.subr.mxu0 0.0
    %4051 = vmatpush2.msra.mxu0 0.0
    %4052 = vmatprep.subr.mxu0 0.0
    %4053 = vmatpush2.msra.mxu0 0.0
    %4054 = vmatprep.subr.mxu0 0.0
    %4055 = vmatpush2.msra.mxu0 0.0
    %4056 = vmatprep.subr.mxu0 0.0
    %4057 = vmatpush2.msra.mxu0 0.0
    %4058 = vmatprep.subr.mxu0 0.0
    %4059 = vmatpush2.msra.mxu0 0.0
    %4060 = vmatprep.mubr.f32.mxu0 0.0
    %4061 = vmatmul.mubr.f32.gmra.mxu0 %v3994
    %v4062 = vpop.f32.mrf.mxu0
    %v4063 = vadd.f32 %v3991, %v4062
    %v4064 = vpop.f32.mrf.mxu0
    %4065 = vdwg.mxu0
    %vm4066 = vcmask 9216
    %4067 = vst.msk [vmem:[#allocation5] sm:$0x3] %vm4066, %v4063
    // Predicated region
    $region46: #{net_forward.1} parent=1 // pred_check
      _
    $region47: #{net_forward.1} parent=1 // pred_check_branch
      %4069 = sbr.rel (0) target = $region49
    $region48: #{net_forward.1} parent=1 // pred_region
      %s4071 = ssub.s32 32, 32
      %4072 = vsyncadd [#allocation4], %s4071
      %s4074 = sshll.u32 [#allocation5], 4
      %s4075 = int_to_ptr.vmem [resolvable:$true] %s4074
      %4077 = dma.vmem_to_hbm [thread:$0]  %s4075, 32, %s10, [#allocation4]
    $region49: #{net_forward.1} parent=1 // pred_fallthru
      _
    // Predicated region
    $region50: #{net_forward.1} parent=1 // pred_check
      _
    $region51: #{net_forward.1} parent=1 // pred_check_branch
      %4079 = sbr.rel (0) target = $region53
    $region52: #{net_forward.1} parent=1 // pred_region
      %4080 = dma.done [#allocation4], 32
    $region53: #{net_forward.1} parent=1 // pred_fallthru
      _
    %4081 = vsyncpa [#allocation3], 1
    %4082 = vsyncpa [#allocation4], 1

</llo_original>
